<compile_context>
chip_gen: v5e
topology: v5e:2x2
jax: 0.10.0
libtpu: 0.0.40
codegen_flags: <defaults>
</compile_context>

<pallas_src>
import math
import functools

import jax
import jax.numpy as jnp
from jax.experimental import pallas as pl
from jax.experimental.pallas import tpu as pltpu


def _mha_fused_kernel(*refs, d_k: int, eps: float, compute_dtype,
                      approx_softmax: bool, shared_x: bool, return_attn: bool):
    """One (batch b, head h) grid step: project this head's Q/K/V, attention,
    accumulate ctx_h @ W_o[h] into the fused accumulator; finalize at h==H-1."""
    f32 = jnp.float32

    if shared_x:
        (x_ref, wqkv_ref, bqkv_ref, wo_ref, bo_ref,
         gamma_ref, beta_ref) = refs[:7]
        rest = refs[7:]
    else:
        (xq_ref, xk_ref, xv_ref, wq_ref, bq_ref, wk_ref, bk_ref,
         wv_ref, bv_ref, wo_ref, bo_ref, gamma_ref, beta_ref) = refs[:13]
        rest = refs[13:]
    if return_attn:
        out_ref, attn_ref, acc_ref = rest
    else:
        out_ref, acc_ref = rest
        attn_ref = None

    h = pl.program_id(1)
    n_heads = pl.num_programs(1)

    @pl.when(h == 0)
    def _init():
        acc_ref[...] = jnp.zeros_like(acc_ref)

    if shared_x:
        # Packed QKV projection: one MXU matmul with N = 3*d_k.
        x = x_ref[0].astype(compute_dtype)                         # (S, D)
        qkv = jnp.dot(x, wqkv_ref[0].astype(compute_dtype),
                      preferred_element_type=f32) + bqkv_ref[0].astype(f32)
        qh = qkv[:, :d_k]                                          # scale pre-baked
        kh = qkv[:, d_k:2 * d_k]
        vh = qkv[:, 2 * d_k:]
        resid_in_ref = x_ref
    else:
        xq = xq_ref[0].astype(compute_dtype)                       # (S, D)
        xk = xk_ref[0].astype(compute_dtype)
        xv = xv_ref[0].astype(compute_dtype)
        qh = jnp.dot(xq, wq_ref[0].astype(compute_dtype),
                     preferred_element_type=f32) + bq_ref[0].astype(f32)
        kh = jnp.dot(xk, wk_ref[0].astype(compute_dtype),
                     preferred_element_type=f32) + bk_ref[0].astype(f32)
        vh = jnp.dot(xv, wv_ref[0].astype(compute_dtype),
                     preferred_element_type=f32) + bv_ref[0].astype(f32)
        resid_in_ref = xq_ref

    # scores = (Q / sqrt(d_k)) K^T  -- scale already folded into wq/bq.
    scores = jax.lax.dot_general(
        qh.astype(compute_dtype), kh.astype(compute_dtype),
        dimension_numbers=(((1,), (1,)), ((), ())),
        preferred_element_type=f32)                                # (S, S) f32

    # Numerically stable softmax, single live (S, S) f32 buffer.
    scores = jnp.exp(scores - jnp.max(scores, axis=-1, keepdims=True))
    denom = jnp.sum(scores, axis=-1, keepdims=True)
    if approx_softmax:
        probs = scores * pl.reciprocal(denom, approx=True)
    else:
        probs = scores / denom

    if attn_ref is not None:
        attn_ref[0, 0] = probs.astype(attn_ref.dtype)

    ctx = jnp.dot(probs.astype(compute_dtype), vh.astype(compute_dtype),
                  preferred_element_type=f32)                      # (S, d_k)

    # Fused output projection: accumulate this head's contribution to x @ W_o.
    acc_ref[...] += jnp.dot(ctx.astype(compute_dtype),
                            wo_ref[0].astype(compute_dtype),
                            preferred_element_type=f32)            # (S, D)

    @pl.when(h == n_heads - 1)
    def _finalize():
        resid = resid_in_ref[0].astype(f32) + acc_ref[...] + bo_ref[...].astype(f32)
        mean = jnp.mean(resid, axis=-1, keepdims=True)
        var = jnp.mean((resid - mean) ** 2, axis=-1, keepdims=True)
        normed = (resid - mean) * jax.lax.rsqrt(var + eps)
        y = normed * gamma_ref[...].astype(f32) + beta_ref[...].astype(f32)
        out_ref[0] = y.astype(out_ref.dtype)


def multi_head_attention(query, key, value, params, *, num_heads: int,
                         eps: float = 1e-5, compute_dtype=jnp.bfloat16,
                         return_attn: bool = False, approx_softmax: bool = True):
    """query/key/value: [B, S, D]. Returns output [B,S,D] (and attn [B,H,S,S])."""
    B, S, D = query.shape
    assert D % num_heads == 0
    H = num_heads
    d_k = D // H
    scale = 1.0 / math.sqrt(d_k)

    # nn.Linear stores W as [out, in]; pre-transpose so kernels compute x @ W + b,
    # then lay weights out per head so each head's block is contiguous.
    def per_head_cols(w):                                # [D_out, D_in] -> [H, D, d_k]
        return w.T.reshape(D, H, d_k).transpose(1, 0, 2)

    wq_h = per_head_cols(params["wq"]) * scale           # fold 1/sqrt(d_k) into Q proj
    wk_h = per_head_cols(params["wk"])
    wv_h = per_head_cols(params["wv"])
    bq_h = params["bq"].reshape(H, 1, d_k) * scale
    bk_h = params["bk"].reshape(H, 1, d_k)
    bv_h = params["bv"].reshape(H, 1, d_k)
    wo_h = params["wo"].T.reshape(H, d_k, D)             # head h's rows of W_o^T
    bo = params["bo"].reshape(1, D)
    gamma = params["ln_gamma"].reshape(1, D)
    beta = params["ln_beta"].reshape(1, D)

    shared_x = (key is query) and (value is query)

    x_spec = pl.BlockSpec((1, S, D), lambda b, h: (b, 0, 0))
    vec_spec = pl.BlockSpec((1, D), lambda b, h: (0, 0))
    wo_spec = pl.BlockSpec((1, d_k, D), lambda b, h: (h, 0, 0))

    if shared_x:
        wqkv_h = jnp.concatenate([wq_h, wk_h, wv_h], axis=-1)   # [H, D, 3*d_k]
        bqkv_h = jnp.concatenate([bq_h, bk_h, bv_h], axis=-1)   # [H, 1, 3*d_k]
        in_specs = [
            x_spec,
            pl.BlockSpec((1, D, 3 * d_k), lambda b, h: (h, 0, 0)),
            pl.BlockSpec((1, 1, 3 * d_k), lambda b, h: (h, 0, 0)),
            wo_spec, vec_spec, vec_spec, vec_spec,
        ]
        inputs = (query, wqkv_h, bqkv_h, wo_h, bo, gamma, beta)
    else:
        w_spec = pl.BlockSpec((1, D, d_k), lambda b, h: (h, 0, 0))
        b_spec = pl.BlockSpec((1, 1, d_k), lambda b, h: (h, 0, 0))
        in_specs = [
            x_spec, x_spec, x_spec,
            w_spec, b_spec, w_spec, b_spec, w_spec, b_spec,
            wo_spec, vec_spec, vec_spec, vec_spec,
        ]
        inputs = (query, key, value, wq_h, bq_h, wk_h, bk_h, wv_h, bv_h,
                  wo_h, bo, gamma, beta)

    # Output block index_map is invariant in h -> resident across the head
    # reduction; written once at h == H-1.
    out_spec = pl.BlockSpec((1, S, D), lambda b, h: (b, 0, 0))
    out_struct = jax.ShapeDtypeStruct((B, S, D), query.dtype)
    if return_attn:
        out_specs = (out_spec,
                     pl.BlockSpec((1, 1, S, S), lambda b, h: (b, h, 0, 0)))
        out_shape = (out_struct,
                     jax.ShapeDtypeStruct((B, H, S, S), query.dtype))
    else:
        out_specs = out_spec
        out_shape = out_struct

    kernel = functools.partial(
        _mha_fused_kernel, d_k=d_k, eps=eps, compute_dtype=compute_dtype,
        approx_softmax=approx_softmax, shared_x=shared_x, return_attn=return_attn)

    results = pl.pallas_call(
        kernel,
        grid=(B, H),
        in_specs=in_specs,
        out_specs=out_specs,
        out_shape=out_shape,
        scratch_shapes=[pltpu.VMEM((S, D), jnp.float32)],
        compiler_params=pltpu.CompilerParams(
            dimension_semantics=("parallel", "arbitrary"),
            vmem_limit_bytes=32 * 1024 * 1024),
    )(*inputs)

    return results


def _reference(query, key, value, params, num_heads, eps=1e-5):
    """Pure-JAX reference matching the PyTorch forward (dropout = identity)."""
    B, S, D = query.shape
    d_k = D // num_heads
    hi = jax.lax.Precision.HIGHEST

    def lin(x, w, b):
        return jnp.dot(x, w.T, precision=hi) + b

    Q = lin(query, params["wq"], params["bq"]).reshape(B, S, num_heads, d_k).transpose(0, 2, 1, 3)
    K = lin(key, params["wk"], params["bk"]).reshape(B, S, num_heads, d_k).transpose(0, 2, 1, 3)
    V = lin(value, params["wv"], params["bv"]).reshape(B, S, num_heads, d_k).transpose(0, 2, 1, 3)

    scores = jnp.einsum("bhqd,bhkd->bhqk", Q, K, precision=hi) / math.sqrt(d_k)
    attn = jax.nn.softmax(scores, axis=-1)
    o = jnp.einsum("bhqk,bhkd->bhqd", attn, V, precision=hi).transpose(0, 2, 1, 3).reshape(B, S, D)
    o = lin(o, params["wo"], params["bo"])
    resid = query + o
    mean = jnp.mean(resid, axis=-1, keepdims=True)
    var = jnp.mean((resid - mean) ** 2, axis=-1, keepdims=True)
    out = (resid - mean) * jax.lax.rsqrt(var + eps) * params["ln_gamma"] + params["ln_beta"]
    return out, attn


if __name__ == "__main__":
    # Lane-aligned small shapes: d_k = D / H = 128, S = 128.
    B, S, D, H = 2, 128, 256, 2

    key0 = jax.random.PRNGKey(0)
    keys = jax.random.split(key0, 12)
    bound = 1.0 / math.sqrt(D)

    params = {
        "wq": jax.random.uniform(keys[0], (D, D), jnp.float32, -bound, bound),
        "bq": jax.random.uniform(keys[1], (D,), jnp.float32, -bound, bound),
        "wk": jax.random.uniform(keys[2], (D, D), jnp.float32, -bound, bound),
        "bk": jax.random.uniform(keys[3], (D,), jnp.float32, -bound, bound),
        "wv": jax.random.uniform(keys[4], (D, D), jnp.float32, -bound, bound),
        "bv": jax.random.uniform(keys[5], (D,), jnp.float32, -bound, bound),
        "wo": jax.random.uniform(keys[6], (D, D), jnp.float32, -bound, bound),
        "bo": jax.random.uniform(keys[7], (D,), jnp.float32, -bound, bound),
        "ln_gamma": jnp.ones((D,), jnp.float32),
        "ln_beta": jnp.zeros((D,), jnp.float32),
    }

    query = jax.random.normal(keys[8], (B, S, D), jnp.float32)
    key_in = jax.random.normal(keys[9], (B, S, D), jnp.float32)
    value = jax.random.normal(keys[10], (B, S, D), jnp.float32)

    ref_out, ref_attn = _reference(query, key_in, value, params, H)

    # 1) f32 compute path, exact softmax, attention returned (tight check).
    out, attn = multi_head_attention(query, key_in, value, params, num_heads=H,
                                     compute_dtype=jnp.float32,
                                     return_attn=True, approx_softmax=False)
    out = jax.block_until_ready(out)
    attn = jax.block_until_ready(attn)
    assert out.shape == (B, S, D) and attn.shape == (B, H, S, S)
    assert jnp.allclose(out, ref_out, atol=2e-3, rtol=2e-3)
    assert jnp.allclose(attn, ref_attn, atol=2e-3, rtol=2e-3)

    # 2) Default path: bf16 MXU operands, approx-reciprocal softmax, no attn writeback.
    out_bf = multi_head_attention(query, key_in, value, params, num_heads=H)
    out_bf = jax.block_until_ready(out_bf)
    assert out_bf.shape == (B, S, D)
    assert jnp.allclose(out_bf, ref_out, atol=1e-1, rtol=1e-1)

    # 3) Self-attention fast path (query is key is value): packed QKV projection.
    ref_self, _ = _reference(query, query, query, params, H)
    out_self = multi_head_attention(query, query, query, params, num_heads=H,
                                    compute_dtype=jnp.float32,
                                    approx_softmax=False)
    out_self = jax.block_until_ready(out_self)
    assert jnp.allclose(out_self, ref_self, atol=2e-3, rtol=2e-3)

    print("KERNEL_OK")
</pallas_src>

<mosaic_0001>
module attributes {stable_mosaic.version = 11 : i64} {
  func.func @_mha_fused_kernel(%arg0: i32, %arg1: i32, %arg2: memref<1x128x256xf32, #tpu.memory_space<vmem>>, %arg3: memref<1x128x256xf32, #tpu.memory_space<vmem>>, %arg4: memref<1x128x256xf32, #tpu.memory_space<vmem>>, %arg5: memref<1x256x128xf32, #tpu.memory_space<vmem>>, %arg6: memref<1x1x128xf32, #tpu.memory_space<vmem>>, %arg7: memref<1x256x128xf32, #tpu.memory_space<vmem>>, %arg8: memref<1x1x128xf32, #tpu.memory_space<vmem>>, %arg9: memref<1x256x128xf32, #tpu.memory_space<vmem>>, %arg10: memref<1x1x128xf32, #tpu.memory_space<vmem>>, %arg11: memref<1x128x256xf32, #tpu.memory_space<vmem>>, %arg12: memref<1x256xf32, #tpu.memory_space<vmem>>, %arg13: memref<1x256xf32, #tpu.memory_space<vmem>>, %arg14: memref<1x256xf32, #tpu.memory_space<vmem>>, %arg15: memref<1x128x256xf32, #tpu.memory_space<vmem>>, %arg16: memref<1x1x128x128xf32, #tpu.memory_space<vmem>>, %arg17: memref<128x256xf32, #tpu.memory_space<vmem>>) attributes {dimension_semantics = [#tpu.dimension_semantics<parallel>, #tpu.dimension_semantics<arbitrary>], iteration_bounds = array<i64: 2, 2>, scalar_prefetch = 0 : i64, scratch_operands = 1 : i64, tpu.core_type = #tpu.core_type<tc>, window_params = [{transform_indices = @transform_0, window_bounds = array<i64: 1, 128, 256>}, {transform_indices = @transform_1, window_bounds = array<i64: 1, 128, 256>}, {transform_indices = @transform_2, window_bounds = array<i64: 1, 128, 256>}, {transform_indices = @transform_3, window_bounds = array<i64: 1, 256, 128>}, {transform_indices = @transform_4, window_bounds = array<i64: 1, 1, 128>}, {transform_indices = @transform_5, window_bounds = array<i64: 1, 256, 128>}, {transform_indices = @transform_6, window_bounds = array<i64: 1, 1, 128>}, {transform_indices = @transform_7, window_bounds = array<i64: 1, 256, 128>}, {transform_indices = @transform_8, window_bounds = array<i64: 1, 1, 128>}, {transform_indices = @transform_9, window_bounds = array<i64: 1, 128, 256>}, {pipeline_mode = #tpu.pipeline_mode<synchronous>, transform_indices = @transform_10, window_bounds = array<i64: 1, 256>}, {pipeline_mode = #tpu.pipeline_mode<synchronous>, transform_indices = @transform_11, window_bounds = array<i64: 1, 256>}, {pipeline_mode = #tpu.pipeline_mode<synchronous>, transform_indices = @transform_12, window_bounds = array<i64: 1, 256>}, {transform_indices = @transform_13, window_bounds = array<i64: 1, 128, 256>}, {transform_indices = @transform_14, window_bounds = array<i64: 1, 1, 128, 128>}]} {
    %c0_i32 = arith.constant 0 : i32
    %0 = arith.cmpi eq, %arg1, %c0_i32 : i32
    %1 = arith.extui %0 : i1 to i32
    %c0_i32_0 = arith.constant 0 : i32
    %2 = arith.cmpi ne, %1, %c0_i32_0 : i32
    scf.if %2 {
      %cst_46 = arith.constant 0.000000e+00 : f32
      %53 = vector.broadcast %cst_46 : f32 to vector<128x256xf32>
      %c0_47 = arith.constant 0 : index
      %c0_48 = arith.constant 0 : index
      %54 = vector.load %arg17[%c0_47, %c0_48] : memref<128x256xf32, #tpu.memory_space<vmem>>, vector<128x256xf32>
      tpu.vector_store %arg17[%c0_47, %c0_48], %53 {strides = array<i32>} : memref<128x256xf32, #tpu.memory_space<vmem>>, vector<128x256xf32>,
    } else {
    }
    %c0 = arith.constant 0 : index
    %c0_1 = arith.constant 0 : index
    %c0_2 = arith.constant 0 : index
    %3 = vector.load %arg2[%c0, %c0_1, %c0_2] : memref<1x128x256xf32, #tpu.memory_space<vmem>>, vector<1x128x256xf32>
    %4 = vector.shape_cast %3 : vector<1x128x256xf32> to vector<128x256xf32>
    %c0_3 = arith.constant 0 : index
    %c0_4 = arith.constant 0 : index
    %c0_5 = arith.constant 0 : index
    %5 = vector.load %arg3[%c0_3, %c0_4, %c0_5] : memref<1x128x256xf32, #tpu.memory_space<vmem>>, vector<1x128x256xf32>
    %6 = vector.shape_cast %5 : vector<1x128x256xf32> to vector<128x256xf32>
    %c0_6 = arith.constant 0 : index
    %c0_7 = arith.constant 0 : index
    %c0_8 = arith.constant 0 : index
    %7 = vector.load %arg4[%c0_6, %c0_7, %c0_8] : memref<1x128x256xf32, #tpu.memory_space<vmem>>, vector<1x128x256xf32>
    %8 = vector.shape_cast %7 : vector<1x128x256xf32> to vector<128x256xf32>
    %c0_9 = arith.constant 0 : index
    %c0_10 = arith.constant 0 : index
    %c0_11 = arith.constant 0 : index
    %9 = vector.load %arg5[%c0_9, %c0_10, %c0_11] : memref<1x256x128xf32, #tpu.memory_space<vmem>>, vector<1x256x128xf32>
    %10 = vector.shape_cast %9 : vector<1x256x128xf32> to vector<256x128xf32>
    %cst = arith.constant dense<0.000000e+00> : vector<128x128xf32>
    %11 = tpu.matmul %4, %10, %cst {dimension_numbers = #tpu.dot_dimension_numbers<[1], [0], [0], [1], [0, 0, 1, 1], [], []>} : vector<128x256xf32>, vector<256x128xf32>, vector<128x128xf32> -> vector<128x128xf32>
    %c0_12 = arith.constant 0 : index
    %c0_13 = arith.constant 0 : index
    %c0_14 = arith.constant 0 : index
    %12 = vector.load %arg6[%c0_12, %c0_13, %c0_14] : memref<1x1x128xf32, #tpu.memory_space<vmem>>, vector<1x1x128xf32>
    %13 = vector.shape_cast %12 : vector<1x1x128xf32> to vector<1x128xf32>
    %14 = vector.broadcast %13 : vector<1x128xf32> to vector<128x128xf32>
    %15 = arith.addf %11, %14 : vector<128x128xf32>
    %c0_15 = arith.constant 0 : index
    %c0_16 = arith.constant 0 : index
    %c0_17 = arith.constant 0 : index
    %16 = vector.load %arg7[%c0_15, %c0_16, %c0_17] : memref<1x256x128xf32, #tpu.memory_space<vmem>>, vector<1x256x128xf32>
    %17 = vector.shape_cast %16 : vector<1x256x128xf32> to vector<256x128xf32>
    %cst_18 = arith.constant dense<0.000000e+00> : vector<128x128xf32>
    %18 = tpu.matmul %6, %17, %cst_18 {dimension_numbers = #tpu.dot_dimension_numbers<[1], [0], [0], [1], [0, 0, 1, 1], [], []>} : vector<128x256xf32>, vector<256x128xf32>, vector<128x128xf32> -> vector<128x128xf32>
    %c0_19 = arith.constant 0 : index
    %c0_20 = arith.constant 0 : index
    %c0_21 = arith.constant 0 : index
    %19 = vector.load %arg8[%c0_19, %c0_20, %c0_21] : memref<1x1x128xf32, #tpu.memory_space<vmem>>, vector<1x1x128xf32>
    %20 = vector.shape_cast %19 : vector<1x1x128xf32> to vector<1x128xf32>
    %21 = vector.broadcast %20 : vector<1x128xf32> to vector<128x128xf32>
    %22 = arith.addf %18, %21 : vector<128x128xf32>
    %c0_22 = arith.constant 0 : index
    %c0_23 = arith.constant 0 : index
    %c0_24 = arith.constant 0 : index
    %23 = vector.load %arg9[%c0_22, %c0_23, %c0_24] : memref<1x256x128xf32, #tpu.memory_space<vmem>>, vector<1x256x128xf32>
    %24 = vector.shape_cast %23 : vector<1x256x128xf32> to vector<256x128xf32>
    %cst_25 = arith.constant dense<0.000000e+00> : vector<128x128xf32>
    %25 = tpu.matmul %8, %24, %cst_25 {dimension_numbers = #tpu.dot_dimension_numbers<[1], [0], [0], [1], [0, 0, 1, 1], [], []>} : vector<128x256xf32>, vector<256x128xf32>, vector<128x128xf32> -> vector<128x128xf32>
    %c0_26 = arith.constant 0 : index
    %c0_27 = arith.constant 0 : index
    %c0_28 = arith.constant 0 : index
    %26 = vector.load %arg10[%c0_26, %c0_27, %c0_28] : memref<1x1x128xf32, #tpu.memory_space<vmem>>, vector<1x1x128xf32>
    %27 = vector.shape_cast %26 : vector<1x1x128xf32> to vector<1x128xf32>
    %28 = vector.broadcast %27 : vector<1x128xf32> to vector<128x128xf32>
    %29 = arith.addf %25, %28 : vector<128x128xf32>
    %cst_29 = arith.constant dense<0.000000e+00> : vector<128x128xf32>
    %30 = tpu.matmul %15, %22, %cst_29 {dimension_numbers = #tpu.dot_dimension_numbers<[1], [1], [0], [0], [0, 0, 1, 0], [], []>} : vector<128x128xf32>, vector<128x128xf32>, vector<128x128xf32> -> vector<128x128xf32>
    %cst_30 = arith.constant dense<0xFF800000> : vector<128xf32>
    %31 = vector.multi_reduction <maximumf>, %30, %cst_30 [1] : vector<128x128xf32> to vector<128xf32>
    %32 = vector.shape_cast %31 : vector<128xf32> to vector<128x1xf32>
    %33 = vector.broadcast %32 : vector<128x1xf32> to vector<128x128xf32>
    %34 = arith.subf %30, %33 : vector<128x128xf32>
    %35 = math.exp %34 : vector<128x128xf32>
    %cst_31 = arith.constant dense<0.000000e+00> : vector<128xf32>
    %36 = vector.multi_reduction <add>, %35, %cst_31 [1] : vector<128x128xf32> to vector<128xf32>
    %37 = vector.shape_cast %36 : vector<128xf32> to vector<128x1xf32>
    %38 = vector.broadcast %37 : vector<128x1xf32> to vector<128x128xf32>
    %39 = arith.divf %35, %38 : vector<128x128xf32>
    %c0_32 = arith.constant 0 : index
    %c0_33 = arith.constant 0 : index
    %c0_34 = arith.constant 0 : index
    %c0_35 = arith.constant 0 : index
    %40 = vector.load %arg16[%c0_32, %c0_33, %c0_34, %c0_35] : memref<1x1x128x128xf32, #tpu.memory_space<vmem>>, vector<1x1x128x128xf32>
    %41 = vector.shape_cast %40 : vector<1x1x128x128xf32> to vector<128x128xf32>
    %42 = vector.shape_cast %39 : vector<128x128xf32> to vector<1x1x128x128xf32>
    tpu.vector_store %arg16[%c0_32, %c0_33, %c0_34, %c0_35], %42 {strides = array<i32>} : memref<1x1x128x128xf32, #tpu.memory_space<vmem>>, vector<1x1x128x128xf32>,
    %cst_36 = arith.constant dense<0.000000e+00> : vector<128x128xf32>
    %43 = tpu.matmul %39, %29, %cst_36 {dimension_numbers = #tpu.dot_dimension_numbers<[1], [0], [0], [1], [0, 0, 1, 1], [], []>} : vector<128x128xf32>, vector<128x128xf32>, vector<128x128xf32> -> vector<128x128xf32>
    %c0_37 = arith.constant 0 : index
    %c0_38 = arith.constant 0 : index
    %44 = vector.load %arg17[%c0_37, %c0_38] : memref<128x256xf32, #tpu.memory_space<vmem>>, vector<128x256xf32>
    %c0_39 = arith.constant 0 : index
    %c0_40 = arith.constant 0 : index
    %c0_41 = arith.constant 0 : index
    %45 = vector.load %arg11[%c0_39, %c0_40, %c0_41] : memref<1x128x256xf32, #tpu.memory_space<vmem>>, vector<1x128x256xf32>
    %46 = vector.shape_cast %45 : vector<1x128x256xf32> to vector<128x256xf32>
    %cst_42 = arith.constant dense<0.000000e+00> : vector<128x256xf32>
    %47 = tpu.matmul %43, %46, %cst_42 {dimension_numbers = #tpu.dot_dimension_numbers<[1], [0], [0], [1], [0, 0, 1, 1], [], []>} : vector<128x128xf32>, vector<128x256xf32>, vector<128x256xf32> -> vector<128x256xf32>
    %48 = arith.addf %44, %47 : vector<128x256xf32>
    %c0_43 = arith.constant 0 : index
    %c0_44 = arith.constant 0 : index
    %49 = vector.load %arg17[%c0_43, %c0_44] : memref<128x256xf32, #tpu.memory_space<vmem>>, vector<128x256xf32>
    tpu.vector_store %arg17[%c0_43, %c0_44], %48 {strides = array<i32>} : memref<128x256xf32, #tpu.memory_space<vmem>>, vector<128x256xf32>,
    %c1_i32 = arith.constant 1 : i32
    %50 = arith.cmpi eq, %arg1, %c1_i32 : i32
    %51 = arith.extui %50 : i1 to i32
    %c0_i32_45 = arith.constant 0 : i32
    %52 = arith.cmpi ne, %51, %c0_i32_45 : i32
    scf.if %52 {
      %c0_46 = arith.constant 0 : index
      %c0_47 = arith.constant 0 : index
      %c0_48 = arith.constant 0 : index
      %53 = vector.load %arg2[%c0_46, %c0_47, %c0_48] : memref<1x128x256xf32, #tpu.memory_space<vmem>>, vector<1x128x256xf32>
      %54 = vector.shape_cast %53 : vector<1x128x256xf32> to vector<128x256xf32>
      %c0_49 = arith.constant 0 : index
      %c0_50 = arith.constant 0 : index
      %55 = vector.load %arg17[%c0_49, %c0_50] : memref<128x256xf32, #tpu.memory_space<vmem>>, vector<128x256xf32>
      %56 = arith.addf %54, %55 : vector<128x256xf32>
      %c0_51 = arith.constant 0 : index
      %c0_52 = arith.constant 0 : index
      %57 = vector.load %arg12[%c0_51, %c0_52] : memref<1x256xf32, #tpu.memory_space<vmem>>, vector<1x256xf32>
      %58 = vector.broadcast %57 : vector<1x256xf32> to vector<128x256xf32>
      %59 = arith.addf %56, %58 : vector<128x256xf32>
      %cst_53 = arith.constant dense<0.000000e+00> : vector<128xf32>
      %60 = vector.multi_reduction <add>, %59, %cst_53 [1] : vector<128x256xf32> to vector<128xf32>
      %61 = vector.shape_cast %60 : vector<128xf32> to vector<128x1xf32>
      %cst_54 = arith.constant 2.560000e+02 : f32
      %62 = vector.broadcast %cst_54 : f32 to vector<128x1xf32>
      %63 = arith.divf %61, %62 : vector<128x1xf32>
      %64 = vector.broadcast %63 : vector<128x1xf32> to vector<128x256xf32>
      %65 = arith.subf %59, %64 : vector<128x256xf32>
      %66 = arith.mulf %65, %65 : vector<128x256xf32>
      %cst_55 = arith.constant dense<0.000000e+00> : vector<128xf32>
      %67 = vector.multi_reduction <add>, %66, %cst_55 [1] : vector<128x256xf32> to vector<128xf32>
      %68 = vector.shape_cast %67 : vector<128xf32> to vector<128x1xf32>
      %cst_56 = arith.constant 2.560000e+02 : f32
      %69 = vector.broadcast %cst_56 : f32 to vector<128x1xf32>
      %70 = arith.divf %68, %69 : vector<128x1xf32>
      %71 = vector.broadcast %63 : vector<128x1xf32> to vector<128x256xf32>
      %72 = arith.subf %59, %71 : vector<128x256xf32>
      %cst_57 = arith.constant 9.99999974E-6 : f32
      %73 = vector.broadcast %cst_57 : f32 to vector<128x1xf32>
      %74 = arith.addf %70, %73 : vector<128x1xf32>
      %75 = math.rsqrt %74 : vector<128x1xf32>
      %76 = vector.broadcast %75 : vector<128x1xf32> to vector<128x256xf32>
      %77 = arith.mulf %72, %76 : vector<128x256xf32>
      %c0_58 = arith.constant 0 : index
      %c0_59 = arith.constant 0 : index
      %78 = vector.load %arg13[%c0_58, %c0_59] : memref<1x256xf32, #tpu.memory_space<vmem>>, vector<1x256xf32>
      %79 = vector.broadcast %78 : vector<1x256xf32> to vector<128x256xf32>
      %80 = arith.mulf %77, %79 : vector<128x256xf32>
      %c0_60 = arith.constant 0 : index
      %c0_61 = arith.constant 0 : index
      %81 = vector.load %arg14[%c0_60, %c0_61] : memref<1x256xf32, #tpu.memory_space<vmem>>, vector<1x256xf32>
      %82 = vector.broadcast %81 : vector<1x256xf32> to vector<128x256xf32>
      %83 = arith.addf %80, %82 : vector<128x256xf32>
      %c0_62 = arith.constant 0 : index
      %c0_63 = arith.constant 0 : index
      %c0_64 = arith.constant 0 : index
      %84 = vector.load %arg15[%c0_62, %c0_63, %c0_64] : memref<1x128x256xf32, #tpu.memory_space<vmem>>, vector<1x128x256xf32>
      %85 = vector.shape_cast %84 : vector<1x128x256xf32> to vector<128x256xf32>
      %86 = vector.shape_cast %83 : vector<128x256xf32> to vector<1x128x256xf32>
      tpu.vector_store %arg15[%c0_62, %c0_63, %c0_64], %86 {strides = array<i32>} : memref<1x128x256xf32, #tpu.memory_space<vmem>>, vector<1x128x256xf32>,
    } else {
    }
    return
  }
  func.func @transform_0(%arg0: i32, %arg1: i32) -> (i32, i32, i32) {
    %c0_i32 = arith.constant 0 : i32
    %c0_i32_0 = arith.constant 0 : i32
    %c0_i32_1 = arith.constant 0 : i32
    return %arg0, %c0_i32, %c0_i32_0 : i32, i32, i32
  }
  func.func @transform_1(%arg0: i32, %arg1: i32) -> (i32, i32, i32) {
    %c0_i32 = arith.constant 0 : i32
    %c0_i32_0 = arith.constant 0 : i32
    %c0_i32_1 = arith.constant 0 : i32
    return %arg0, %c0_i32, %c0_i32_0 : i32, i32, i32
  }
  func.func @transform_2(%arg0: i32, %arg1: i32) -> (i32, i32, i32) {
    %c0_i32 = arith.constant 0 : i32
    %c0_i32_0 = arith.constant 0 : i32
    %c0_i32_1 = arith.constant 0 : i32
    return %arg0, %c0_i32, %c0_i32_0 : i32, i32, i32
  }
  func.func @transform_3(%arg0: i32, %arg1: i32) -> (i32, i32, i32) {
    %c0_i32 = arith.constant 0 : i32
    %c0_i32_0 = arith.constant 0 : i32
    %c0_i32_1 = arith.constant 0 : i32
    return %arg1, %c0_i32, %c0_i32_0 : i32, i32, i32
  }
  func.func @transform_4(%arg0: i32, %arg1: i32) -> (i32, i32, i32) {
    %c0_i32 = arith.constant 0 : i32
    %c0_i32_0 = arith.constant 0 : i32
    %c0_i32_1 = arith.constant 0 : i32
    return %arg1, %c0_i32, %c0_i32_0 : i32, i32, i32
  }
  func.func @transform_5(%arg0: i32, %arg1: i32) -> (i32, i32, i32) {
    %c0_i32 = arith.constant 0 : i32
    %c0_i32_0 = arith.constant 0 : i32
    %c0_i32_1 = arith.constant 0 : i32
    return %arg1, %c0_i32, %c0_i32_0 : i32, i32, i32
  }
  func.func @transform_6(%arg0: i32, %arg1: i32) -> (i32, i32, i32) {
    %c0_i32 = arith.constant 0 : i32
    %c0_i32_0 = arith.constant 0 : i32
    %c0_i32_1 = arith.constant 0 : i32
    return %arg1, %c0_i32, %c0_i32_0 : i32, i32, i32
  }
  func.func @transform_7(%arg0: i32, %arg1: i32) -> (i32, i32, i32) {
    %c0_i32 = arith.constant 0 : i32
    %c0_i32_0 = arith.constant 0 : i32
    %c0_i32_1 = arith.constant 0 : i32
    return %arg1, %c0_i32, %c0_i32_0 : i32, i32, i32
  }
  func.func @transform_8(%arg0: i32, %arg1: i32) -> (i32, i32, i32) {
    %c0_i32 = arith.constant 0 : i32
    %c0_i32_0 = arith.constant 0 : i32
    %c0_i32_1 = arith.constant 0 : i32
    return %arg1, %c0_i32, %c0_i32_0 : i32, i32, i32
  }
  func.func @transform_9(%arg0: i32, %arg1: i32) -> (i32, i32, i32) {
    %c0_i32 = arith.constant 0 : i32
    %c0_i32_0 = arith.constant 0 : i32
    %c0_i32_1 = arith.constant 0 : i32
    return %arg1, %c0_i32, %c0_i32_0 : i32, i32, i32
  }
  func.func @transform_10(%arg0: i32, %arg1: i32) -> (i32, i32) {
    %c0_i32 = arith.constant 0 : i32
    %c0_i32_0 = arith.constant 0 : i32
    %c0_i32_1 = arith.constant 0 : i32
    return %c0_i32, %c0_i32_0 : i32, i32
  }
  func.func @transform_11(%arg0: i32, %arg1: i32) -> (i32, i32) {
    %c0_i32 = arith.constant 0 : i32
    %c0_i32_0 = arith.constant 0 : i32
    %c0_i32_1 = arith.constant 0 : i32
    return %c0_i32, %c0_i32_0 : i32, i32
  }
  func.func @transform_12(%arg0: i32, %arg1: i32) -> (i32, i32) {
    %c0_i32 = arith.constant 0 : i32
    %c0_i32_0 = arith.constant 0 : i32
    %c0_i32_1 = arith.constant 0 : i32
    return %c0_i32, %c0_i32_0 : i32, i32
  }
  func.func @transform_13(%arg0: i32, %arg1: i32) -> (i32, i32, i32) {
    %c0_i32 = arith.constant 0 : i32
    %c0_i32_0 = arith.constant 0 : i32
    %c0_i32_1 = arith.constant 0 : i32
    return %arg0, %c0_i32, %c0_i32_0 : i32, i32, i32
  }
  func.func @transform_14(%arg0: i32, %arg1: i32) -> (i32, i32, i32, i32) {
    %c0_i32 = arith.constant 0 : i32
    %c0_i32_0 = arith.constant 0 : i32
    %c0_i32_1 = arith.constant 0 : i32
    return %arg0, %arg1, %c0_i32, %c0_i32_0 : i32, i32, i32, i32
  }
}

</mosaic_0001>

<llo_original>
// kernel: tpu_custom_call.1
$region0: #{tpu_custom_call.1}
  #allocation0 [shape = 'u32[]', space=smem, size = 0x4, offset = 0x4, fixed_abs, tag = 'smem constant byte address 0x4 - core index']
  #allocation1 [shape = 'u32[72,128]{1,0:T(1,128)}', space=vmem, size = 0x9000, scoped, tag = 'internal scratch']
  #allocation2 [shape = 'f32[128,256]{1,0:T(8,128)}', space=vmem, size = 0x20000, scoped, tag = 'scratch operand']
  %s0 = inlined_call_operand.hbm [shape: f32[2,128,256], index: 0, kind: input, shape index: {}]
  %s1 = inlined_call_operand.hbm [shape: f32[2,128,256], index: 1, kind: input, shape index: {}]
  %s2 = inlined_call_operand.hbm [shape: f32[2,128,256], index: 2, kind: input, shape index: {}]
  %s3 = inlined_call_operand.hbm [shape: f32[2,256,128], index: 3, kind: input, shape index: {}]
  %s4 = inlined_call_operand.vmem [shape: f32[2,1,128], index: 4, kind: input, shape index: {}]
  %s5 = inlined_call_operand.hbm [shape: f32[2,256,128], index: 5, kind: input, shape index: {}]
  %s6 = inlined_call_operand.vmem [shape: f32[2,1,128], index: 6, kind: input, shape index: {}]
  %s7 = inlined_call_operand.hbm [shape: f32[2,256,128], index: 7, kind: input, shape index: {}]
  %s8 = inlined_call_operand.vmem [shape: f32[2,1,128], index: 8, kind: input, shape index: {}]
  %s9 = inlined_call_operand.hbm [shape: f32[2,128,256], index: 9, kind: input, shape index: {}]
  %s10 = inlined_call_operand.vmem [shape: f32[1,256], index: 10, kind: input, shape index: {}]
  %s11 = inlined_call_operand.vmem [shape: f32[1,256], index: 11, kind: input, shape index: {}]
  %s12 = inlined_call_operand.hbm [shape: f32[1,256], index: 12, kind: input, shape index: {}]
  %s13 = inlined_call_operand.hbm [shape: f32[2,128,256], index: 13, kind: output, shape index: {0}]
  %s14 = inlined_call_operand.hbm [shape: f32[2,2,128,128], index: 14, kind: output, shape index: {1}]
  %15 = xla_tuple %s13, %s14
  %s16 = sld [smem:[#allocation0]]
  $region133: #{tpu_custom_call.1} parent=0
    _
  %s18 = ssub.s32 1, %s16
  %s19 = scalar_select 0, %s18, %s16
  $region1: #{tpu_custom_call.1} parent=0
    #allocation3 [shape = 'u8[262144]{0}', space=vmem, size = 0x40000, scoped, tag = 'input window, operand 0']
    #allocation4 [shape = 's32[2]{0}', space=sflag, size = 0x8, scoped, tag = 'scoped memory for tpu_custom_call.1']
    #allocation5 [shape = 's32[2]{0}', space=sflag, size = 0x8, scoped, tag = 'scoped memory for tpu_custom_call.1']
    #allocation6 [shape = 'u8[262144]{0}', space=vmem, size = 0x40000, scoped, tag = 'input window, operand 1']
    #allocation7 [shape = 's32[2]{0}', space=sflag, size = 0x8, scoped, tag = 'scoped memory for tpu_custom_call.1']
    #allocation8 [shape = 'u8[262144]{0}', space=vmem, size = 0x40000, scoped, tag = 'input window, operand 2']
    #allocation9 [shape = 'u8[262144]{0}', space=vmem, size = 0x40000, scoped, tag = 'input window, operand 3']
    #allocation10 [shape = 's32[2]{0}', space=sflag, size = 0x8, scoped, tag = 'scoped memory for tpu_custom_call.1']
    #allocation11 [shape = 'u8[262144]{0}', space=vmem, size = 0x40000, scoped, tag = 'input window, operand 5']
    #allocation12 [shape = 'u8[262144]{0}', space=vmem, size = 0x40000, scoped, tag = 'input window, operand 7']
    #allocation13 [shape = 's32[2]{0}', space=sflag, size = 0x8, scoped, tag = 'scoped memory for tpu_custom_call.1']
    #allocation14 [shape = 'u8[262144]{0}', space=vmem, size = 0x40000, scoped, tag = 'input window, operand 9']
    #allocation15 [shape = 'u8[1024]{0}', space=vmem, size = 0x400, scoped, tag = 'input window, operand 12, single buffered']
    #allocation16 [shape = 's32[1]{0}', space=sflag, size = 0x4, scoped, tag = 'scoped memory for tpu_custom_call.1']
    #allocation17 [shape = 'u8[262144]{0}', space=vmem, size = 0x40000, scoped, tag = 'output window, operand 0']
    #allocation18 [shape = 'u8[131072]{0}', space=vmem, size = 0x20000, scoped, tag = 'output window, operand 1']
    #allocation19 [shape = 's32[2]{0}', space=sflag, size = 0x8, scoped, tag = 'scoped memory for tpu_custom_call.1']
    %20 = vsyncpa [#allocation4], 0
    %s21 = scalar_lea.sflag [#allocation4], 1
    %22 = vsyncpa %s21, 0
    %23 = vsyncpa [#allocation7], 0
    %s24 = scalar_lea.sflag [#allocation7], 1
    %25 = vsyncpa %s24, 0
    %26 = vsyncpa [#allocation10], 0
    %s27 = scalar_lea.sflag [#allocation10], 1
    %28 = vsyncpa %s27, 0
    %29 = vsyncpa [#allocation13], 0
    %s30 = scalar_lea.sflag [#allocation13], 1
    %31 = vsyncpa %s30, 0
    %32 = vsyncpa [#allocation16], 0
    %33 = vsyncpa [#allocation5], 0
    %s34 = scalar_lea.sflag [#allocation5], 1
    %35 = vsyncpa %s34, 0
    %36 = vsyncpa [#allocation19], 0
    %s37 = scalar_lea.sflag [#allocation19], 1
    %38 = vsyncpa %s37, 0
    loop: start=0, step=1, limit=6
    $region2: #{tpu_custom_call.1} parent=1 // loop_pre_header
      _
    $region3: #{tpu_custom_call.1} parent=1 // loop_header
      %s40 = sphi 0, %s44
      %p41 = scmp.ge.s32.totalorder %s40, 6
      %s47 = sphi 0, %s59
      %s48 = sphi 0, %s55
      %s49 = sphi 0, %s47
      %s50 = sphi 0, %s48
      %s51 = sphi 0, %s49
      %s52 = sphi 0, %s50
      %s62 = sphi 0, %s64
      %s65 = sphi 0, %s62
      %s66 = sphi 0, %s65
      %s82 = sphi 0, %s66
      %s88 = sphi 0, %s90
      %s91 = sphi 0, %s88
      %s92 = sphi 0, %s91
      %s108 = sphi 0, %s92
      %s114 = sphi 0, %s116
      %s117 = sphi 0, %s114
      %s118 = sphi 0, %s117
      %s134 = sphi 0, %s118
      %s140 = sphi 0, %s142
      %s143 = sphi 0, %s140
      %s144 = sphi 0, %s143
      %s160 = sphi 0, %s144
      %s166 = sphi 0, %s168
      %s169 = sphi 0, %s166
      %s170 = sphi 0, %s169
      %s186 = sphi 0, %s170
      %s192 = sphi 0, %s194
      %s195 = sphi 0, %s192
      %s196 = sphi 0, %s195
      %s212 = sphi 0, %s196
      %s218 = sphi 0, %s220
      %s221 = sphi 0, %s218
      %s222 = sphi 0, %s221
      %s238 = sphi 0, %s222
      %s244 = sphi 0, %s246
      %s247 = sphi 0, %s244
      %s248 = sphi 0, %s247
      %s264 = sphi 0, %s248
      %s270 = sphi 0, %s272
      %s273 = sphi 0, %s270
      %s274 = sphi 0, %s273
      %s290 = sphi 0, %s274
      %s296 = sphi 0, %s298
      %s299 = sphi 0, %s296
      %s300 = sphi 0, %s299
      %s316 = sphi 0, %s300
      %s320 = sphi 0, %s320
      %s322 = sphi 0, %s320
      %s323 = sphi 0, %s322
      %s337 = sphi 0, %s323
      %s341 = sphi 0, %s341
      %s343 = sphi 0, %s341
      %s344 = sphi 0, %s343
      %s358 = sphi 0, %s344
      %s362 = sphi 0, %s362
      %s364 = sphi 0, %s362
      %s365 = sphi 0, %s364
      %s379 = sphi 0, %s365
      %s385 = sphi 0, %s387
      %s388 = sphi 0, %s385
      %s389 = sphi 0, %s388
      %s405 = sphi 0, %s389
      %s413 = sphi 0, %s415
      %s416 = sphi 0, %s413
      %s417 = sphi 0, %s416
      %s433 = sphi 0, %s417
    $region4: #{tpu_custom_call.1} parent=1 // loop_header_branch
      %43 = sbr.rel (%p41) target = $region8
    $region5: #{tpu_custom_call.1} parent=1 // loop_body
      %s45 = ssub.s32 %s40, 1
      %s46 = ssub.s32 %s40, 2
      %s53 = sadd.s32 1, %s48
      %p54 = scmp.ge.s32.totalorder %s53, 2
      %s55 = scalar_select %p54, 0, %s53
      %s56 = sadd.s32 1, %s47
      %s57 = scalar_select %p54, %s56, %s47
      %p58 = scmp.ge.s32.totalorder %s57, 2
      %s59 = scalar_select %p58, 0, %s57
      %s60 = ssub.s32 %s47, %s59
      %p61 = scmp.eq.s32.totalorder %s60, 0
      %s63 = sadd.s32 %s62, 1
      %s64 = scalar_select %p61, %s62, %s63
      %p67 = pneg %p61
      %p68 = scmp.eq.s32.totalorder %s40, 3
      %p69 = por %p67, %p68
      %p70 = scmp.ne.s32.totalorder %s62, %s65
      %p71 = scmp.eq.s32.totalorder %s40, 0
      %p72 = por %p70, %p71
      %p73 = scmp.ne.s32.totalorder %s62, %s65
      %p74 = scmp.eq.s32.totalorder %s45, 3
      %p75 = por %p73, %p74
      %p76 = scmp.ne.s32.totalorder %s65, %s66
      %p77 = scmp.eq.s32.totalorder %s45, 0
      %p78 = por %p76, %p77
      %p79 = scmp.ne.s32.totalorder %s65, %s66
      %p80 = scmp.eq.s32.totalorder %s46, 3
      %p81 = por %p79, %p80
      %p83 = scmp.ne.s32.totalorder %s66, %s82
      %p84 = scmp.eq.s32.totalorder %s46, 0
      %p85 = por %p83, %p84
      %s86 = ssub.s32 %s47, %s59
      %p87 = scmp.eq.s32.totalorder %s86, 0
      %s89 = sadd.s32 %s88, 1
      %s90 = scalar_select %p87, %s88, %s89
      %p93 = pneg %p87
      %p94 = scmp.eq.s32.totalorder %s40, 3
      %p95 = por %p93, %p94
      %p96 = scmp.ne.s32.totalorder %s88, %s91
      %p97 = scmp.eq.s32.totalorder %s40, 0
      %p98 = por %p96, %p97
      %p99 = scmp.ne.s32.totalorder %s88, %s91
      %p100 = scmp.eq.s32.totalorder %s45, 3
      %p101 = por %p99, %p100
      %p102 = scmp.ne.s32.totalorder %s91, %s92
      %p103 = scmp.eq.s32.totalorder %s45, 0
      %p104 = por %p102, %p103
      %p105 = scmp.ne.s32.totalorder %s91, %s92
      %p106 = scmp.eq.s32.totalorder %s46, 3
      %p107 = por %p105, %p106
      %p109 = scmp.ne.s32.totalorder %s92, %s108
      %p110 = scmp.eq.s32.totalorder %s46, 0
      %p111 = por %p109, %p110
      %s112 = ssub.s32 %s47, %s59
      %p113 = scmp.eq.s32.totalorder %s112, 0
      %s115 = sadd.s32 %s114, 1
      %s116 = scalar_select %p113, %s114, %s115
      %p119 = pneg %p113
      %p120 = scmp.eq.s32.totalorder %s40, 3
      %p121 = por %p119, %p120
      %p122 = scmp.ne.s32.totalorder %s114, %s117
      %p123 = scmp.eq.s32.totalorder %s40, 0
      %p124 = por %p122, %p123
      %p125 = scmp.ne.s32.totalorder %s114, %s117
      %p126 = scmp.eq.s32.totalorder %s45, 3
      %p127 = por %p125, %p126
      %p128 = scmp.ne.s32.totalorder %s117, %s118
      %p129 = scmp.eq.s32.totalorder %s45, 0
      %p130 = por %p128, %p129
      %p131 = scmp.ne.s32.totalorder %s117, %s118
      %p132 = scmp.eq.s32.totalorder %s46, 3
      %p133 = por %p131, %p132
      %p135 = scmp.ne.s32.totalorder %s118, %s134
      %p136 = scmp.eq.s32.totalorder %s46, 0
      %p137 = por %p135, %p136
      %s138 = ssub.s32 %s48, %s55
      %p139 = scmp.eq.s32.totalorder %s138, 0
      %s141 = sadd.s32 %s140, 1
      %s142 = scalar_select %p139, %s140, %s141
      %p145 = pneg %p139
      %p146 = scmp.eq.s32.totalorder %s40, 3
      %p147 = por %p145, %p146
      %p148 = scmp.ne.s32.totalorder %s140, %s143
      %p149 = scmp.eq.s32.totalorder %s40, 0
      %p150 = por %p148, %p149
      %p151 = scmp.ne.s32.totalorder %s140, %s143
      %p152 = scmp.eq.s32.totalorder %s45, 3
      %p153 = por %p151, %p152
      %p154 = scmp.ne.s32.totalorder %s143, %s144
      %p155 = scmp.eq.s32.totalorder %s45, 0
      %p156 = por %p154, %p155
      %p157 = scmp.ne.s32.totalorder %s143, %s144
      %p158 = scmp.eq.s32.totalorder %s46, 3
      %p159 = por %p157, %p158
      %p161 = scmp.ne.s32.totalorder %s144, %s160
      %p162 = scmp.eq.s32.totalorder %s46, 0
      %p163 = por %p161, %p162
      %s164 = ssub.s32 %s48, %s55
      %p165 = scmp.eq.s32.totalorder %s164, 0
      %s167 = sadd.s32 %s166, 1
      %s168 = scalar_select %p165, %s166, %s167
      %p171 = pneg %p165
      %p172 = scmp.eq.s32.totalorder %s40, 3
      %p173 = por %p171, %p172
      %p174 = scmp.ne.s32.totalorder %s166, %s169
      %p175 = scmp.eq.s32.totalorder %s40, 0
      %p176 = por %p174, %p175
      %p177 = scmp.ne.s32.totalorder %s166, %s169
      %p178 = scmp.eq.s32.totalorder %s45, 3
      %p179 = por %p177, %p178
      %p180 = scmp.ne.s32.totalorder %s169, %s170
      %p181 = scmp.eq.s32.totalorder %s45, 0
      %p182 = por %p180, %p181
      %p183 = scmp.ne.s32.totalorder %s169, %s170
      %p184 = scmp.eq.s32.totalorder %s46, 3
      %p185 = por %p183, %p184
      %p187 = scmp.ne.s32.totalorder %s170, %s186
      %p188 = scmp.eq.s32.totalorder %s46, 0
      %p189 = por %p187, %p188
      %s190 = ssub.s32 %s48, %s55
      %p191 = scmp.eq.s32.totalorder %s190, 0
      %s193 = sadd.s32 %s192, 1
      %s194 = scalar_select %p191, %s192, %s193
      %p197 = pneg %p191
      %p198 = scmp.eq.s32.totalorder %s40, 3
      %p199 = por %p197, %p198
      %p200 = scmp.ne.s32.totalorder %s192, %s195
      %p201 = scmp.eq.s32.totalorder %s40, 0
      %p202 = por %p200, %p201
      %p203 = scmp.ne.s32.totalorder %s192, %s195
      %p204 = scmp.eq.s32.totalorder %s45, 3
      %p205 = por %p203, %p204
      %p206 = scmp.ne.s32.totalorder %s195, %s196
      %p207 = scmp.eq.s32.totalorder %s45, 0
      %p208 = por %p206, %p207
      %p209 = scmp.ne.s32.totalorder %s195, %s196
      %p210 = scmp.eq.s32.totalorder %s46, 3
      %p211 = por %p209, %p210
      %p213 = scmp.ne.s32.totalorder %s196, %s212
      %p214 = scmp.eq.s32.totalorder %s46, 0
      %p215 = por %p213, %p214
      %s216 = ssub.s32 %s48, %s55
      %p217 = scmp.eq.s32.totalorder %s216, 0
      %s219 = sadd.s32 %s218, 1
      %s220 = scalar_select %p217, %s218, %s219
      %p223 = pneg %p217
      %p224 = scmp.eq.s32.totalorder %s40, 3
      %p225 = por %p223, %p224
      %p226 = scmp.ne.s32.totalorder %s218, %s221
      %p227 = scmp.eq.s32.totalorder %s40, 0
      %p228 = por %p226, %p227
      %p229 = scmp.ne.s32.totalorder %s218, %s221
      %p230 = scmp.eq.s32.totalorder %s45, 3
      %p231 = por %p229, %p230
      %p232 = scmp.ne.s32.totalorder %s221, %s222
      %p233 = scmp.eq.s32.totalorder %s45, 0
      %p234 = por %p232, %p233
      %p235 = scmp.ne.s32.totalorder %s221, %s222
      %p236 = scmp.eq.s32.totalorder %s46, 3
      %p237 = por %p235, %p236
      %p239 = scmp.ne.s32.totalorder %s222, %s238
      %p240 = scmp.eq.s32.totalorder %s46, 0
      %p241 = por %p239, %p240
      %s242 = ssub.s32 %s48, %s55
      %p243 = scmp.eq.s32.totalorder %s242, 0
      %s245 = sadd.s32 %s244, 1
      %s246 = scalar_select %p243, %s244, %s245
      %p249 = pneg %p243
      %p250 = scmp.eq.s32.totalorder %s40, 3
      %p251 = por %p249, %p250
      %p252 = scmp.ne.s32.totalorder %s244, %s247
      %p253 = scmp.eq.s32.totalorder %s40, 0
      %p254 = por %p252, %p253
      %p255 = scmp.ne.s32.totalorder %s244, %s247
      %p256 = scmp.eq.s32.totalorder %s45, 3
      %p257 = por %p255, %p256
      %p258 = scmp.ne.s32.totalorder %s247, %s248
      %p259 = scmp.eq.s32.totalorder %s45, 0
      %p260 = por %p258, %p259
      %p261 = scmp.ne.s32.totalorder %s247, %s248
      %p262 = scmp.eq.s32.totalorder %s46, 3
      %p263 = por %p261, %p262
      %p265 = scmp.ne.s32.totalorder %s248, %s264
      %p266 = scmp.eq.s32.totalorder %s46, 0
      %p267 = por %p265, %p266
      %s268 = ssub.s32 %s48, %s55
      %p269 = scmp.eq.s32.totalorder %s268, 0
      %s271 = sadd.s32 %s270, 1
      %s272 = scalar_select %p269, %s270, %s271
      %p275 = pneg %p269
      %p276 = scmp.eq.s32.totalorder %s40, 3
      %p277 = por %p275, %p276
      %p278 = scmp.ne.s32.totalorder %s270, %s273
      %p279 = scmp.eq.s32.totalorder %s40, 0
      %p280 = por %p278, %p279
      %p281 = scmp.ne.s32.totalorder %s270, %s273
      %p282 = scmp.eq.s32.totalorder %s45, 3
      %p283 = por %p281, %p282
      %p284 = scmp.ne.s32.totalorder %s273, %s274
      %p285 = scmp.eq.s32.totalorder %s45, 0
      %p286 = por %p284, %p285
      %p287 = scmp.ne.s32.totalorder %s273, %s274
      %p288 = scmp.eq.s32.totalorder %s46, 3
      %p289 = por %p287, %p288
      %p291 = scmp.ne.s32.totalorder %s274, %s290
      %p292 = scmp.eq.s32.totalorder %s46, 0
      %p293 = por %p291, %p292
      %s294 = ssub.s32 %s48, %s55
      %p295 = scmp.eq.s32.totalorder %s294, 0
      %s297 = sadd.s32 %s296, 1
      %s298 = scalar_select %p295, %s296, %s297
      %p301 = pneg %p295
      %p302 = scmp.eq.s32.totalorder %s40, 3
      %p303 = por %p301, %p302
      %p304 = scmp.ne.s32.totalorder %s296, %s299
      %p305 = scmp.eq.s32.totalorder %s40, 0
      %p306 = por %p304, %p305
      %p307 = scmp.ne.s32.totalorder %s296, %s299
      %p308 = scmp.eq.s32.totalorder %s45, 3
      %p309 = por %p307, %p308
      %p310 = scmp.ne.s32.totalorder %s299, %s300
      %p311 = scmp.eq.s32.totalorder %s45, 0
      %p312 = por %p310, %p311
      %p313 = scmp.ne.s32.totalorder %s299, %s300
      %p314 = scmp.eq.s32.totalorder %s46, 3
      %p315 = por %p313, %p314
      %p317 = scmp.ne.s32.totalorder %s300, %s316
      %p318 = scmp.eq.s32.totalorder %s46, 0
      %p319 = por %p317, %p318
      %s321 = sadd.s32 %s320, 1
      %p324 = scmp.eq.s32.totalorder %s40, 3
      %p325 = scmp.ne.s32.totalorder %s320, %s322
      %p326 = scmp.eq.s32.totalorder %s40, 0
      %p327 = por %p325, %p326
      %p328 = scmp.ne.s32.totalorder %s320, %s322
      %p329 = scmp.eq.s32.totalorder %s45, 3
      %p330 = por %p328, %p329
      %p331 = scmp.ne.s32.totalorder %s322, %s323
      %p332 = scmp.eq.s32.totalorder %s45, 0
      %p333 = por %p331, %p332
      %p334 = scmp.ne.s32.totalorder %s322, %s323
      %p335 = scmp.eq.s32.totalorder %s46, 3
      %p336 = por %p334, %p335
      %p338 = scmp.ne.s32.totalorder %s323, %s337
      %p339 = scmp.eq.s32.totalorder %s46, 0
      %p340 = por %p338, %p339
      %s342 = sadd.s32 %s341, 1
      %p345 = scmp.eq.s32.totalorder %s40, 3
      %p346 = scmp.ne.s32.totalorder %s341, %s343
      %p347 = scmp.eq.s32.totalorder %s40, 0
      %p348 = por %p346, %p347
      %p349 = scmp.ne.s32.totalorder %s341, %s343
      %p350 = scmp.eq.s32.totalorder %s45, 3
      %p351 = por %p349, %p350
      %p352 = scmp.ne.s32.totalorder %s343, %s344
      %p353 = scmp.eq.s32.totalorder %s45, 0
      %p354 = por %p352, %p353
      %p355 = scmp.ne.s32.totalorder %s343, %s344
      %p356 = scmp.eq.s32.totalorder %s46, 3
      %p357 = por %p355, %p356
      %p359 = scmp.ne.s32.totalorder %s344, %s358
      %p360 = scmp.eq.s32.totalorder %s46, 0
      %p361 = por %p359, %p360
      %s363 = sadd.s32 %s362, 1
      %p366 = scmp.eq.s32.totalorder %s40, 3
      %p367 = scmp.ne.s32.totalorder %s362, %s364
      %p368 = scmp.eq.s32.totalorder %s40, 0
      %p369 = por %p367, %p368
      %p370 = scmp.ne.s32.totalorder %s362, %s364
      %p371 = scmp.eq.s32.totalorder %s45, 3
      %p372 = por %p370, %p371
      %p373 = scmp.ne.s32.totalorder %s364, %s365
      %p374 = scmp.eq.s32.totalorder %s45, 0
      %p375 = por %p373, %p374
      %p376 = scmp.ne.s32.totalorder %s364, %s365
      %p377 = scmp.eq.s32.totalorder %s46, 3
      %p378 = por %p376, %p377
      %p380 = scmp.ne.s32.totalorder %s365, %s379
      %p381 = scmp.eq.s32.totalorder %s46, 0
      %p382 = por %p380, %p381
      %s383 = ssub.s32 %s47, %s59
      %p384 = scmp.eq.s32.totalorder %s383, 0
      %s386 = sadd.s32 %s385, 1
      %s387 = scalar_select %p384, %s385, %s386
      %p390 = pneg %p384
      %p391 = scmp.eq.s32.totalorder %s40, 3
      %p392 = por %p390, %p391
      %p393 = scmp.ne.s32.totalorder %s385, %s388
      %p394 = scmp.eq.s32.totalorder %s40, 0
      %p395 = por %p393, %p394
      %p396 = scmp.ne.s32.totalorder %s385, %s388
      %p397 = scmp.eq.s32.totalorder %s45, 3
      %p398 = por %p396, %p397
      %p399 = scmp.ne.s32.totalorder %s388, %s389
      %p400 = scmp.eq.s32.totalorder %s45, 0
      %p401 = por %p399, %p400
      %p402 = scmp.ne.s32.totalorder %s388, %s389
      %p403 = scmp.eq.s32.totalorder %s46, 3
      %p404 = por %p402, %p403
      %p406 = scmp.ne.s32.totalorder %s389, %s405
      %p407 = scmp.eq.s32.totalorder %s46, 0
      %p408 = por %p406, %p407
      %s409 = ssub.s32 %s47, %s59
      %s410 = ssub.s32 %s48, %s55
      %s411 = sor.u32 %s409, %s410
      %p412 = scmp.eq.s32.totalorder %s411, 0
      %s414 = sadd.s32 %s413, 1
      %s415 = scalar_select %p412, %s413, %s414
      %p418 = pneg %p412
      %p419 = scmp.eq.s32.totalorder %s40, 3
      %p420 = por %p418, %p419
      %p421 = scmp.ne.s32.totalorder %s413, %s416
      %p422 = scmp.eq.s32.totalorder %s40, 0
      %p423 = por %p421, %p422
      %p424 = scmp.ne.s32.totalorder %s413, %s416
      %p425 = scmp.eq.s32.totalorder %s45, 3
      %p426 = por %p424, %p425
      %p427 = scmp.ne.s32.totalorder %s416, %s417
      %p428 = scmp.eq.s32.totalorder %s45, 0
      %p429 = por %p427, %p428
      %p430 = scmp.ne.s32.totalorder %s416, %s417
      %p431 = scmp.eq.s32.totalorder %s46, 3
      %p432 = por %p430, %p431
      %p434 = scmp.ne.s32.totalorder %s417, %s433
      %p435 = scmp.eq.s32.totalorder %s46, 0
      %p436 = por %p434, %p435
      %p437 = scmp.le.s32.totalorder 1, %s40
      %p438 = scmp.lt.s32.totalorder %s40, 5
      %p439 = pnand %p437, %p438
      %p440 = pneg %p439
      // Predicated region
      $region9: #{tpu_custom_call.1} parent=5 // pred_check
        _
      $region10: #{tpu_custom_call.1} parent=5 // pred_check_branch
        %442 = sbr.rel (%p439) target = $region12
      $region11: #{tpu_custom_call.1} parent=5 // pred_region
        %s443 = ssub.s32 %s40, 1
        // Predicated region
        $region13: #{tpu_custom_call.1} parent=11 // pred_check
          %p444 = pneg %p333
        $region14: #{tpu_custom_call.1} parent=11 // pred_check_branch
          %446 = sbr.rel (%p444) target = $region16
        $region15: #{tpu_custom_call.1} parent=11 // pred_region
          _
        $region16: #{tpu_custom_call.1} parent=11 // pred_fallthru
          _
        // Predicated region
        $region17: #{tpu_custom_call.1} parent=11 // pred_check
          %p447 = pneg %p354
        $region18: #{tpu_custom_call.1} parent=11 // pred_check_branch
          %449 = sbr.rel (%p447) target = $region20
        $region19: #{tpu_custom_call.1} parent=11 // pred_region
          _
        $region20: #{tpu_custom_call.1} parent=11 // pred_fallthru
          _
        // Predicated region
        $region21: #{tpu_custom_call.1} parent=11 // pred_check
          %p450 = pneg %p375
        $region22: #{tpu_custom_call.1} parent=11 // pred_check_branch
          %452 = sbr.rel (%p450) target = $region24
        $region23: #{tpu_custom_call.1} parent=11 // pred_region
          %454 = vsyncadd [#allocation16], 0
          %s456 = sshll.u32 %s12, 4
          %s457 = int_to_ptr.hbm [resolvable:$true] %s456
          %s458 = sshll.u32 [#allocation15], 4
          %s459 = int_to_ptr.vmem [resolvable:$true] %s458
          %461 = dma.hbm_to_vmem [thread:$0]  %s457, 32, %s459, [#allocation16]
        $region24: #{tpu_custom_call.1} parent=11 // pred_fallthru
          _
      $region12: #{tpu_custom_call.1} parent=5 // pred_fallthru
        _
      %p462 = scmp.lt.s32.totalorder %s40, 4
      // Predicated region
      $region25: #{tpu_custom_call.1} parent=5 // pred_check
        %p463 = pneg %p462
      $region26: #{tpu_custom_call.1} parent=5 // pred_check_branch
        %465 = sbr.rel (%p463) target = $region28
      $region27: #{tpu_custom_call.1} parent=5 // pred_region
        // Predicated region
        $region29: #{tpu_custom_call.1} parent=27 // pred_check
          %p466 = pneg %p72
        $region30: #{tpu_custom_call.1} parent=27 // pred_check_branch
          %468 = sbr.rel (%p466) target = $region32
        $region31: #{tpu_custom_call.1} parent=27 // pred_region
          %s469 = sand.u32 %s62, 1
          %s470 = scalar_lea.sflag [#allocation4], %s469
          %s471 = sand.u32 %s62, 1
          %s472 = smul.addr %s471, 256
          %s473 = scalar_lea.vmem [#allocation3], %s472
          %475 = vsyncadd %s470, 0
          %s476 = smul.addr %s47, 32
          %s477 = smul.addr %s476, 8
          %s478 = scalar_lea.hbm %s0, %s477
          %s479 = sshll.u32 %s478, 4
          %s480 = int_to_ptr.hbm [resolvable:$true] %s479
          %s481 = sshll.u32 %s473, 4
          %s482 = int_to_ptr.vmem [resolvable:$true] %s481
          %487 = dma.hbm_to_vmem [thread:$0]  %s480, 4096, %s482, %s470, 256, 256, 16
        $region32: #{tpu_custom_call.1} parent=27 // pred_fallthru
          _
        // Predicated region
        $region33: #{tpu_custom_call.1} parent=27 // pred_check
          %p488 = pneg %p98
        $region34: #{tpu_custom_call.1} parent=27 // pred_check_branch
          %490 = sbr.rel (%p488) target = $region36
        $region35: #{tpu_custom_call.1} parent=27 // pred_region
          %s491 = sand.u32 %s40, 1
          %s492 = scalar_lea.sflag [#allocation7], %s491
          %s493 = sand.u32 %s88, 1
          %s494 = smul.addr %s493, 256
          %s495 = scalar_lea.vmem [#allocation6], %s494
          %497 = vsyncadd %s492, 0
          %s498 = smul.addr %s47, 32
          %s499 = smul.addr %s498, 8
          %s500 = scalar_lea.hbm %s1, %s499
          %s501 = sshll.u32 %s500, 4
          %s502 = int_to_ptr.hbm [resolvable:$true] %s501
          %s503 = sshll.u32 %s495, 4
          %s504 = int_to_ptr.vmem [resolvable:$true] %s503
          %509 = dma.hbm_to_vmem [thread:$0]  %s502, 4096, %s504, %s492, 256, 256, 16
        $region36: #{tpu_custom_call.1} parent=27 // pred_fallthru
          _
        // Predicated region
        $region37: #{tpu_custom_call.1} parent=27 // pred_check
          %p510 = pneg %p124
        $region38: #{tpu_custom_call.1} parent=27 // pred_check_branch
          %512 = sbr.rel (%p510) target = $region40
        $region39: #{tpu_custom_call.1} parent=27 // pred_region
          %s513 = sand.u32 %s40, 1
          %s514 = scalar_lea.sflag [#allocation7], %s513
          %s515 = sand.u32 %s114, 1
          %s516 = smul.addr %s515, 256
          %s517 = scalar_lea.vmem [#allocation8], %s516
          %519 = vsyncadd %s514, 0
          %s520 = smul.addr %s47, 32
          %s521 = smul.addr %s520, 8
          %s522 = scalar_lea.hbm %s2, %s521
          %s523 = sshll.u32 %s522, 4
          %s524 = int_to_ptr.hbm [resolvable:$true] %s523
          %s525 = sshll.u32 %s517, 4
          %s526 = int_to_ptr.vmem [resolvable:$true] %s525
          %531 = dma.hbm_to_vmem [thread:$0]  %s524, 4096, %s526, %s514, 256, 256, 16
        $region40: #{tpu_custom_call.1} parent=27 // pred_fallthru
          _
        // Predicated region
        $region41: #{tpu_custom_call.1} parent=27 // pred_check
          %p532 = pneg %p150
        $region42: #{tpu_custom_call.1} parent=27 // pred_check_branch
          %534 = sbr.rel (%p532) target = $region44
        $region43: #{tpu_custom_call.1} parent=27 // pred_region
          %s535 = sand.u32 %s40, 1
          %s536 = scalar_lea.sflag [#allocation10], %s535
          %s537 = sand.u32 %s140, 1
          %s538 = smul.addr %s537, 256
          %s539 = scalar_lea.vmem [#allocation9], %s538
          %541 = vsyncadd %s536, 0
          %s542 = smul.addr %s48, 32
          %s543 = smul.addr %s542, 8
          %s544 = scalar_lea.hbm %s3, %s543
          %s545 = sshll.u32 %s544, 4
          %s546 = int_to_ptr.hbm [resolvable:$true] %s545
          %s547 = sshll.u32 %s539, 4
          %s548 = int_to_ptr.vmem [resolvable:$true] %s547
          %553 = dma.hbm_to_vmem [thread:$0]  %s546, 4096, %s548, %s536, 128, 128, 8
        $region44: #{tpu_custom_call.1} parent=27 // pred_fallthru
          _
        // Predicated region
        $region45: #{tpu_custom_call.1} parent=27 // pred_check
          %p554 = pneg %p176
        $region46: #{tpu_custom_call.1} parent=27 // pred_check_branch
          %556 = sbr.rel (%p554) target = $region48
        $region47: #{tpu_custom_call.1} parent=27 // pred_region
          %p557 = scmp.lt.s32.totalorder %s48, 1
          %s558 = scalar_select %p557, %s48, 1
          %s559 = scalar_lea.vmem %s4, %s558
        $region48: #{tpu_custom_call.1} parent=27 // pred_fallthru
          _
        // Predicated region
        $region49: #{tpu_custom_call.1} parent=27 // pred_check
          %p560 = pneg %p202
        $region50: #{tpu_custom_call.1} parent=27 // pred_check_branch
          %562 = sbr.rel (%p560) target = $region52
        $region51: #{tpu_custom_call.1} parent=27 // pred_region
          %s563 = sand.u32 %s40, 1
          %s564 = scalar_lea.sflag [#allocation10], %s563
          %s565 = sand.u32 %s192, 1
          %s566 = smul.addr %s565, 256
          %s567 = scalar_lea.vmem [#allocation11], %s566
          %569 = vsyncadd %s564, 0
          %s570 = smul.addr %s48, 32
          %s571 = smul.addr %s570, 8
          %s572 = scalar_lea.hbm %s5, %s571
          %s573 = sshll.u32 %s572, 4
          %s574 = int_to_ptr.hbm [resolvable:$true] %s573
          %s575 = sshll.u32 %s567, 4
          %s576 = int_to_ptr.vmem [resolvable:$true] %s575
          %581 = dma.hbm_to_vmem [thread:$0]  %s574, 4096, %s576, %s564, 128, 128, 8
        $region52: #{tpu_custom_call.1} parent=27 // pred_fallthru
          _
        // Predicated region
        $region53: #{tpu_custom_call.1} parent=27 // pred_check
          %p582 = pneg %p228
        $region54: #{tpu_custom_call.1} parent=27 // pred_check_branch
          %584 = sbr.rel (%p582) target = $region56
        $region55: #{tpu_custom_call.1} parent=27 // pred_region
          %p585 = scmp.lt.s32.totalorder %s48, 1
          %s586 = scalar_select %p585, %s48, 1
          %s587 = scalar_lea.vmem %s6, %s586
        $region56: #{tpu_custom_call.1} parent=27 // pred_fallthru
          _
        // Predicated region
        $region57: #{tpu_custom_call.1} parent=27 // pred_check
          %p588 = pneg %p254
        $region58: #{tpu_custom_call.1} parent=27 // pred_check_branch
          %590 = sbr.rel (%p588) target = $region60
        $region59: #{tpu_custom_call.1} parent=27 // pred_region
          %s591 = sand.u32 %s40, 1
          %s592 = scalar_lea.sflag [#allocation13], %s591
          %s593 = sand.u32 %s244, 1
          %s594 = smul.addr %s593, 256
          %s595 = scalar_lea.vmem [#allocation12], %s594
          %597 = vsyncadd %s592, 0
          %s598 = smul.addr %s48, 32
          %s599 = smul.addr %s598, 8
          %s600 = scalar_lea.hbm %s7, %s599
          %s601 = sshll.u32 %s600, 4
          %s602 = int_to_ptr.hbm [resolvable:$true] %s601
          %s603 = sshll.u32 %s595, 4
          %s604 = int_to_ptr.vmem [resolvable:$true] %s603
          %609 = dma.hbm_to_vmem [thread:$0]  %s602, 4096, %s604, %s592, 128, 128, 8
        $region60: #{tpu_custom_call.1} parent=27 // pred_fallthru
          _
        // Predicated region
        $region61: #{tpu_custom_call.1} parent=27 // pred_check
          %p610 = pneg %p280
        $region62: #{tpu_custom_call.1} parent=27 // pred_check_branch
          %612 = sbr.rel (%p610) target = $region64
        $region63: #{tpu_custom_call.1} parent=27 // pred_region
          %p613 = scmp.lt.s32.totalorder %s48, 1
          %s614 = scalar_select %p613, %s48, 1
          %s615 = scalar_lea.vmem %s8, %s614
        $region64: #{tpu_custom_call.1} parent=27 // pred_fallthru
          _
        // Predicated region
        $region65: #{tpu_custom_call.1} parent=27 // pred_check
          %p616 = pneg %p306
        $region66: #{tpu_custom_call.1} parent=27 // pred_check_branch
          %618 = sbr.rel (%p616) target = $region68
        $region67: #{tpu_custom_call.1} parent=27 // pred_region
          %s619 = sand.u32 %s40, 1
          %s620 = scalar_lea.sflag [#allocation13], %s619
          %s621 = sand.u32 %s296, 1
          %s622 = smul.addr %s621, 256
          %s623 = scalar_lea.vmem [#allocation14], %s622
          %625 = vsyncadd %s620, 0
          %s626 = smul.addr %s48, 32
          %s627 = smul.addr %s626, 8
          %s628 = scalar_lea.hbm %s9, %s627
          %s629 = sshll.u32 %s628, 4
          %s630 = int_to_ptr.hbm [resolvable:$true] %s629
          %s631 = sshll.u32 %s623, 4
          %s632 = int_to_ptr.vmem [resolvable:$true] %s631
          %637 = dma.hbm_to_vmem [thread:$0]  %s630, 4096, %s632, %s620, 256, 256, 16
        $region68: #{tpu_custom_call.1} parent=27 // pred_fallthru
          _
      $region28: #{tpu_custom_call.1} parent=5 // pred_fallthru
        _
      %p638 = scmp.le.s32.totalorder 1, %s40
      %p639 = scmp.lt.s32.totalorder %s40, 5
      %p640 = pnand %p638, %p639
      %p641 = pneg %p640
      // Predicated region
      $region69: #{tpu_custom_call.1} parent=5 // pred_check
        _
      $region70: #{tpu_custom_call.1} parent=5 // pred_check_branch
        %643 = sbr.rel (%p640) target = $region72
      $region71: #{tpu_custom_call.1} parent=5 // pred_region
        %s644 = ssub.s32 %s40, 1
        %s645 = sand.u32 %s65, 1
        %s646 = scalar_lea.sflag [#allocation4], %s645
        %s647 = sand.u32 %s65, 1
        %s648 = smul.addr %s647, 256
        %s649 = scalar_lea.vmem [#allocation3], %s648
        // Predicated region
        $region73: #{tpu_custom_call.1} parent=71 // pred_check
          %p650 = pneg %p78
        $region74: #{tpu_custom_call.1} parent=71 // pred_check_branch
          %652 = sbr.rel (%p650) target = $region76
        $region75: #{tpu_custom_call.1} parent=71 // pred_region
          %654 = dma.done %s646, 4096
        $region76: #{tpu_custom_call.1} parent=71 // pred_fallthru
          _
        %s655 = sand.u32 %s45, 1
        %s656 = scalar_lea.sflag [#allocation7], %s655
        %s657 = sand.u32 %s91, 1
        %s658 = smul.addr %s657, 256
        %s659 = scalar_lea.vmem [#allocation6], %s658
        // Predicated region
        $region77: #{tpu_custom_call.1} parent=71 // pred_check
          %p660 = pneg %p104
        $region78: #{tpu_custom_call.1} parent=71 // pred_check_branch
          %662 = sbr.rel (%p660) target = $region80
        $region79: #{tpu_custom_call.1} parent=71 // pred_region
          %664 = dma.done %s656, 4096
        $region80: #{tpu_custom_call.1} parent=71 // pred_fallthru
          _
        %s665 = sand.u32 %s45, 1
        %s666 = scalar_lea.sflag [#allocation7], %s665
        %s667 = sand.u32 %s117, 1
        %s668 = smul.addr %s667, 256
        %s669 = scalar_lea.vmem [#allocation8], %s668
        // Predicated region
        $region81: #{tpu_custom_call.1} parent=71 // pred_check
          %p670 = pneg %p130
        $region82: #{tpu_custom_call.1} parent=71 // pred_check_branch
          %672 = sbr.rel (%p670) target = $region84
        $region83: #{tpu_custom_call.1} parent=71 // pred_region
          %674 = dma.done %s666, 4096
        $region84: #{tpu_custom_call.1} parent=71 // pred_fallthru
          _
        %s675 = sand.u32 %s45, 1
        %s676 = scalar_lea.sflag [#allocation10], %s675
        %s677 = sand.u32 %s143, 1
        %s678 = smul.addr %s677, 256
        %s679 = scalar_lea.vmem [#allocation9], %s678
        // Predicated region
        $region85: #{tpu_custom_call.1} parent=71 // pred_check
          %p680 = pneg %p156
        $region86: #{tpu_custom_call.1} parent=71 // pred_check_branch
          %682 = sbr.rel (%p680) target = $region88
        $region87: #{tpu_custom_call.1} parent=71 // pred_region
          %684 = dma.done %s676, 4096
        $region88: #{tpu_custom_call.1} parent=71 // pred_fallthru
          _
        %s685 = sand.u32 %s45, 1
        %s686 = scalar_lea.sflag [#allocation10], %s685
        %s687 = sand.u32 %s195, 1
        %s688 = smul.addr %s687, 256
        %s689 = scalar_lea.vmem [#allocation11], %s688
        // Predicated region
        $region89: #{tpu_custom_call.1} parent=71 // pred_check
          %p690 = pneg %p208
        $region90: #{tpu_custom_call.1} parent=71 // pred_check_branch
          %692 = sbr.rel (%p690) target = $region92
        $region91: #{tpu_custom_call.1} parent=71 // pred_region
          %694 = dma.done %s686, 4096
        $region92: #{tpu_custom_call.1} parent=71 // pred_fallthru
          _
        %s695 = sand.u32 %s45, 1
        %s696 = scalar_lea.sflag [#allocation13], %s695
        %s697 = sand.u32 %s247, 1
        %s698 = smul.addr %s697, 256
        %s699 = scalar_lea.vmem [#allocation12], %s698
        // Predicated region
        $region93: #{tpu_custom_call.1} parent=71 // pred_check
          %p700 = pneg %p260
        $region94: #{tpu_custom_call.1} parent=71 // pred_check_branch
          %702 = sbr.rel (%p700) target = $region96
        $region95: #{tpu_custom_call.1} parent=71 // pred_region
          %704 = dma.done %s696, 4096
        $region96: #{tpu_custom_call.1} parent=71 // pred_fallthru
          _
        %s705 = sand.u32 %s45, 1
        %s706 = scalar_lea.sflag [#allocation13], %s705
        %s707 = sand.u32 %s299, 1
        %s708 = smul.addr %s707, 256
        %s709 = scalar_lea.vmem [#allocation14], %s708
        // Predicated region
        $region97: #{tpu_custom_call.1} parent=71 // pred_check
          %p710 = pneg %p312
        $region98: #{tpu_custom_call.1} parent=71 // pred_check_branch
          %712 = sbr.rel (%p710) target = $region100
        $region99: #{tpu_custom_call.1} parent=71 // pred_region
          %714 = dma.done %s706, 4096
        $region100: #{tpu_custom_call.1} parent=71 // pred_fallthru
          _
        // Predicated region
        $region101: #{tpu_custom_call.1} parent=71 // pred_check
          %p715 = pneg %p375
        $region102: #{tpu_custom_call.1} parent=71 // pred_check_branch
          %717 = sbr.rel (%p715) target = $region104
        $region103: #{tpu_custom_call.1} parent=71 // pred_region
          %719 = dma.done [#allocation16], 32
        $region104: #{tpu_custom_call.1} parent=71 // pred_fallthru
          _
        %s720 = sand.u32 %s65, 1
        %s721 = scalar_lea.sflag [#allocation4], %s720
        %s722 = sand.u32 %s65, 1
        %s723 = smul.addr %s722, 256
        %s724 = scalar_lea.vmem [#allocation3], %s723
        %p725 = pneg %p78
        %p726 = pneg %p75
        %s727 = sand.u32 %s45, 1
        %s728 = scalar_lea.sflag [#allocation7], %s727
        %s729 = sand.u32 %s91, 1
        %s730 = smul.addr %s729, 256
        %s731 = scalar_lea.vmem [#allocation6], %s730
        %p732 = pneg %p104
        %p733 = pneg %p101
        %s734 = sand.u32 %s45, 1
        %s735 = scalar_lea.sflag [#allocation7], %s734
        %s736 = sand.u32 %s117, 1
        %s737 = smul.addr %s736, 256
        %s738 = scalar_lea.vmem [#allocation8], %s737
        %p739 = pneg %p130
        %p740 = pneg %p127
        %s741 = sand.u32 %s45, 1
        %s742 = scalar_lea.sflag [#allocation10], %s741
        %s743 = sand.u32 %s143, 1
        %s744 = smul.addr %s743, 256
        %s745 = scalar_lea.vmem [#allocation9], %s744
        %p746 = pneg %p156
        %p747 = pneg %p153
        %p748 = scmp.lt.s32.totalorder %s50, 1
        %s749 = scalar_select %p748, %s50, 1
        %s750 = scalar_lea.vmem %s4, %s749
        %p751 = pneg %p182
        %p752 = pneg %p179
        %s753 = sand.u32 %s45, 1
        %s754 = scalar_lea.sflag [#allocation10], %s753
        %s755 = sand.u32 %s195, 1
        %s756 = smul.addr %s755, 256
        %s757 = scalar_lea.vmem [#allocation11], %s756
        %p758 = pneg %p208
        %p759 = pneg %p205
        %p760 = scmp.lt.s32.totalorder %s50, 1
        %s761 = scalar_select %p760, %s50, 1
        %s762 = scalar_lea.vmem %s6, %s761
        %p763 = pneg %p234
        %p764 = pneg %p231
        %s765 = sand.u32 %s45, 1
        %s766 = scalar_lea.sflag [#allocation13], %s765
        %s767 = sand.u32 %s247, 1
        %s768 = smul.addr %s767, 256
        %s769 = scalar_lea.vmem [#allocation12], %s768
        %p770 = pneg %p260
        %p771 = pneg %p257
        %p772 = scmp.lt.s32.totalorder %s50, 1
        %s773 = scalar_select %p772, %s50, 1
        %s774 = scalar_lea.vmem %s8, %s773
        %p775 = pneg %p286
        %p776 = pneg %p283
        %s777 = sand.u32 %s45, 1
        %s778 = scalar_lea.sflag [#allocation13], %s777
        %s779 = sand.u32 %s299, 1
        %s780 = smul.addr %s779, 256
        %s781 = scalar_lea.vmem [#allocation14], %s780
        %p782 = pneg %p312
        %p783 = pneg %p309
        %p784 = pneg %p333
        %p785 = pneg %p330
        %p786 = pneg %p354
        %p787 = pneg %p351
        %p788 = pneg %p375
        %p789 = pneg %p372
        %p790 = pneg %p401
        %p791 = pneg %p398
        %s792 = sand.u32 %s388, 1
        %s793 = scalar_lea.sflag [#allocation5], %s792
        %s794 = sand.u32 %s388, 1
        %s795 = smul.addr %s794, 256
        %s796 = scalar_lea.vmem [#allocation17], %s795
        %p797 = pneg %p429
        %p798 = pneg %p426
        %s799 = sand.u32 %s416, 1
        %s800 = scalar_lea.sflag [#allocation19], %s799
        %s801 = sand.u32 %s416, 1
        %s802 = smul.addr %s801, 128
        %s803 = scalar_lea.vmem [#allocation18], %s802
        %p804 = scmp.lt.s32.totalorder %s50, 1
        %s805 = scalar_select %p804, %s50, 1
        %s806 = scalar_lea.vmem %s4, %s805
        %p807 = scmp.lt.s32.totalorder %s50, 1
        %s808 = scalar_select %p807, %s50, 1
        %s809 = scalar_lea.vmem %s6, %s808
        %p810 = scmp.lt.s32.totalorder %s50, 1
        %s811 = scalar_select %p810, %s50, 1
        %s812 = scalar_lea.vmem %s8, %s811
        %p813 = scmp.eq.s32.totalorder %s50, 0
        // Predicated region
        $region105: #{tpu_custom_call.1} parent=71 // pred_check
          %p814 = pneg %p813
        $region106: #{tpu_custom_call.1} parent=71 // pred_check_branch
          %816 = sbr.rel (%p814) target = $region108
        $region107: #{tpu_custom_call.1} parent=71 // pred_region
          %817 = vst [vmem:[#allocation2] sm:$0xff] 0.0
          %818 = vst [vmem:[#allocation2 + $0x8] sm:$0xff] 0.0
          %819 = vst [vmem:[#allocation2 + $0x10] sm:$0xff] 0.0
          %820 = vst [vmem:[#allocation2 + $0x18] sm:$0xff] 0.0
          %821 = vst [vmem:[#allocation2 + $0x20] sm:$0xff] 0.0
          %822 = vst [vmem:[#allocation2 + $0x28] sm:$0xff] 0.0
          %823 = vst [vmem:[#allocation2 + $0x30] sm:$0xff] 0.0
          %824 = vst [vmem:[#allocation2 + $0x38] sm:$0xff] 0.0
          %825 = vst [vmem:[#allocation2 + $0x40] sm:$0xff] 0.0
          %826 = vst [vmem:[#allocation2 + $0x48] sm:$0xff] 0.0
          %827 = vst [vmem:[#allocation2 + $0x50] sm:$0xff] 0.0
          %828 = vst [vmem:[#allocation2 + $0x58] sm:$0xff] 0.0
          %829 = vst [vmem:[#allocation2 + $0x60] sm:$0xff] 0.0
          %830 = vst [vmem:[#allocation2 + $0x68] sm:$0xff] 0.0
          %831 = vst [vmem:[#allocation2 + $0x70] sm:$0xff] 0.0
          %832 = vst [vmem:[#allocation2 + $0x78] sm:$0xff] 0.0
          %833 = vst [vmem:[#allocation2 + $0x80] sm:$0xff] 0.0
          %834 = vst [vmem:[#allocation2 + $0x88] sm:$0xff] 0.0
          %835 = vst [vmem:[#allocation2 + $0x90] sm:$0xff] 0.0
          %836 = vst [vmem:[#allocation2 + $0x98] sm:$0xff] 0.0
          %837 = vst [vmem:[#allocation2 + $0xa0] sm:$0xff] 0.0
          %838 = vst [vmem:[#allocation2 + $0xa8] sm:$0xff] 0.0
          %839 = vst [vmem:[#allocation2 + $0xb0] sm:$0xff] 0.0
          %840 = vst [vmem:[#allocation2 + $0xb8] sm:$0xff] 0.0
          %841 = vst [vmem:[#allocation2 + $0xc0] sm:$0xff] 0.0
          %842 = vst [vmem:[#allocation2 + $0xc8] sm:$0xff] 0.0
          %843 = vst [vmem:[#allocation2 + $0xd0] sm:$0xff] 0.0
          %844 = vst [vmem:[#allocation2 + $0xd8] sm:$0xff] 0.0
          %845 = vst [vmem:[#allocation2 + $0xe0] sm:$0xff] 0.0
          %846 = vst [vmem:[#allocation2 + $0xe8] sm:$0xff] 0.0
          %847 = vst [vmem:[#allocation2 + $0xf0] sm:$0xff] 0.0
          %848 = vst [vmem:[#allocation2 + $0xf8] sm:$0xff] 0.0
        $region108: #{tpu_custom_call.1} parent=71 // pred_fallthru
          _
        %v849 = vld [vmem:[%s649] sm:$0xff]
        %v850 = vld [vmem:[%s649 + $0x8] sm:$0xff]
        %v851 = vld [vmem:[%s649 + $0x10] sm:$0xff]
        %v852 = vld [vmem:[%s649 + $0x18] sm:$0xff]
        %v853 = vld [vmem:[%s649 + $0x20] sm:$0xff]
        %v854 = vld [vmem:[%s649 + $0x28] sm:$0xff]
        %v855 = vld [vmem:[%s649 + $0x30] sm:$0xff]
        %v856 = vld [vmem:[%s649 + $0x38] sm:$0xff]
        %v857 = vld [vmem:[%s649 + $0x40] sm:$0xff]
        %v858 = vld [vmem:[%s649 + $0x48] sm:$0xff]
        %v859 = vld [vmem:[%s649 + $0x50] sm:$0xff]
        %v860 = vld [vmem:[%s649 + $0x58] sm:$0xff]
        %v861 = vld [vmem:[%s649 + $0x60] sm:$0xff]
        %v862 = vld [vmem:[%s649 + $0x68] sm:$0xff]
        %v863 = vld [vmem:[%s649 + $0x70] sm:$0xff]
        %v864 = vld [vmem:[%s649 + $0x78] sm:$0xff]
        %v865 = vld [vmem:[%s649 + $0x80] sm:$0xff]
        %v866 = vld [vmem:[%s649 + $0x88] sm:$0xff]
        %v867 = vld [vmem:[%s649 + $0x90] sm:$0xff]
        %v868 = vld [vmem:[%s649 + $0x98] sm:$0xff]
        %v869 = vld [vmem:[%s649 + $0xa0] sm:$0xff]
        %v870 = vld [vmem:[%s649 + $0xa8] sm:$0xff]
        %v871 = vld [vmem:[%s649 + $0xb0] sm:$0xff]
        %v872 = vld [vmem:[%s649 + $0xb8] sm:$0xff]
        %v873 = vld [vmem:[%s649 + $0xc0] sm:$0xff]
        %v874 = vld [vmem:[%s649 + $0xc8] sm:$0xff]
        %v875 = vld [vmem:[%s649 + $0xd0] sm:$0xff]
        %v876 = vld [vmem:[%s649 + $0xd8] sm:$0xff]
        %v877 = vld [vmem:[%s649 + $0xe0] sm:$0xff]
        %v878 = vld [vmem:[%s649 + $0xe8] sm:$0xff]
        %v879 = vld [vmem:[%s649 + $0xf0] sm:$0xff]
        %v880 = vld [vmem:[%s649 + $0xf8] sm:$0xff]
        %v881 = vld [vmem:[%s659] sm:$0xff]
        %v882 = vld [vmem:[%s659 + $0x8] sm:$0xff]
        %v883 = vld [vmem:[%s659 + $0x10] sm:$0xff]
        %v884 = vld [vmem:[%s659 + $0x18] sm:$0xff]
        %v885 = vld [vmem:[%s659 + $0x20] sm:$0xff]
        %v886 = vld [vmem:[%s659 + $0x28] sm:$0xff]
        %v887 = vld [vmem:[%s659 + $0x30] sm:$0xff]
        %v888 = vld [vmem:[%s659 + $0x38] sm:$0xff]
        %v889 = vld [vmem:[%s659 + $0x40] sm:$0xff]
        %v890 = vld [vmem:[%s659 + $0x48] sm:$0xff]
        %v891 = vld [vmem:[%s659 + $0x50] sm:$0xff]
        %v892 = vld [vmem:[%s659 + $0x58] sm:$0xff]
        %v893 = vld [vmem:[%s659 + $0x60] sm:$0xff]
        %v894 = vld [vmem:[%s659 + $0x68] sm:$0xff]
        %v895 = vld [vmem:[%s659 + $0x70] sm:$0xff]
        %v896 = vld [vmem:[%s659 + $0x78] sm:$0xff]
        %v897 = vld [vmem:[%s659 + $0x80] sm:$0xff]
        %v898 = vld [vmem:[%s659 + $0x88] sm:$0xff]
        %v899 = vld [vmem:[%s659 + $0x90] sm:$0xff]
        %v900 = vld [vmem:[%s659 + $0x98] sm:$0xff]
        %v901 = vld [vmem:[%s659 + $0xa0] sm:$0xff]
        %v902 = vld [vmem:[%s659 + $0xa8] sm:$0xff]
        %v903 = vld [vmem:[%s659 + $0xb0] sm:$0xff]
        %v904 = vld [vmem:[%s659 + $0xb8] sm:$0xff]
        %v905 = vld [vmem:[%s659 + $0xc0] sm:$0xff]
        %v906 = vld [vmem:[%s659 + $0xc8] sm:$0xff]
        %v907 = vld [vmem:[%s659 + $0xd0] sm:$0xff]
        %v908 = vld [vmem:[%s659 + $0xd8] sm:$0xff]
        %v909 = vld [vmem:[%s659 + $0xe0] sm:$0xff]
        %v910 = vld [vmem:[%s659 + $0xe8] sm:$0xff]
        %v911 = vld [vmem:[%s659 + $0xf0] sm:$0xff]
        %v912 = vld [vmem:[%s659 + $0xf8] sm:$0xff]
        %v913 = vld [vmem:[%s669] sm:$0xff]
        %v914 = vld [vmem:[%s669 + $0x8] sm:$0xff]
        %v915 = vld [vmem:[%s669 + $0x10] sm:$0xff]
        %v916 = vld [vmem:[%s669 + $0x18] sm:$0xff]
        %v917 = vld [vmem:[%s669 + $0x20] sm:$0xff]
        %v918 = vld [vmem:[%s669 + $0x28] sm:$0xff]
        %v919 = vld [vmem:[%s669 + $0x30] sm:$0xff]
        %v920 = vld [vmem:[%s669 + $0x38] sm:$0xff]
        %v921 = vld [vmem:[%s669 + $0x40] sm:$0xff]
        %v922 = vld [vmem:[%s669 + $0x48] sm:$0xff]
        %v923 = vld [vmem:[%s669 + $0x50] sm:$0xff]
        %v924 = vld [vmem:[%s669 + $0x58] sm:$0xff]
        %v925 = vld [vmem:[%s669 + $0x60] sm:$0xff]
        %v926 = vld [vmem:[%s669 + $0x68] sm:$0xff]
        %v927 = vld [vmem:[%s669 + $0x70] sm:$0xff]
        %v928 = vld [vmem:[%s669 + $0x78] sm:$0xff]
        %v929 = vld [vmem:[%s669 + $0x80] sm:$0xff]
        %v930 = vld [vmem:[%s669 + $0x88] sm:$0xff]
        %v931 = vld [vmem:[%s669 + $0x90] sm:$0xff]
        %v932 = vld [vmem:[%s669 + $0x98] sm:$0xff]
        %v933 = vld [vmem:[%s669 + $0xa0] sm:$0xff]
        %v934 = vld [vmem:[%s669 + $0xa8] sm:$0xff]
        %v935 = vld [vmem:[%s669 + $0xb0] sm:$0xff]
        %v936 = vld [vmem:[%s669 + $0xb8] sm:$0xff]
        %v937 = vld [vmem:[%s669 + $0xc0] sm:$0xff]
        %v938 = vld [vmem:[%s669 + $0xc8] sm:$0xff]
        %v939 = vld [vmem:[%s669 + $0xd0] sm:$0xff]
        %v940 = vld [vmem:[%s669 + $0xd8] sm:$0xff]
        %v941 = vld [vmem:[%s669 + $0xe0] sm:$0xff]
        %v942 = vld [vmem:[%s669 + $0xe8] sm:$0xff]
        %v943 = vld [vmem:[%s669 + $0xf0] sm:$0xff]
        %v944 = vld [vmem:[%s669 + $0xf8] sm:$0xff]
        %v945 = vld [vmem:[%s679] sm:$0xff]
        %v946 = vld [vmem:[%s679 + $0x8] sm:$0xff]
        %v947 = vld [vmem:[%s679 + $0x10] sm:$0xff]
        %v948 = vld [vmem:[%s679 + $0x18] sm:$0xff]
        %v949 = vld [vmem:[%s679 + $0x20] sm:$0xff]
        %v950 = vld [vmem:[%s679 + $0x28] sm:$0xff]
        %v951 = vld [vmem:[%s679 + $0x30] sm:$0xff]
        %v952 = vld [vmem:[%s679 + $0x38] sm:$0xff]
        %v953 = vld [vmem:[%s679 + $0x40] sm:$0xff]
        %v954 = vld [vmem:[%s679 + $0x48] sm:$0xff]
        %v955 = vld [vmem:[%s679 + $0x50] sm:$0xff]
        %v956 = vld [vmem:[%s679 + $0x58] sm:$0xff]
        %v957 = vld [vmem:[%s679 + $0x60] sm:$0xff]
        %v958 = vld [vmem:[%s679 + $0x68] sm:$0xff]
        %v959 = vld [vmem:[%s679 + $0x70] sm:$0xff]
        %v960 = vld [vmem:[%s679 + $0x78] sm:$0xff]
        %v961 = vld [vmem:[%s679 + $0x80] sm:$0xff]
        %v962 = vld [vmem:[%s679 + $0x88] sm:$0xff]
        %v963 = vld [vmem:[%s679 + $0x90] sm:$0xff]
        %v964 = vld [vmem:[%s679 + $0x98] sm:$0xff]
        %v965 = vld [vmem:[%s679 + $0xa0] sm:$0xff]
        %v966 = vld [vmem:[%s679 + $0xa8] sm:$0xff]
        %v967 = vld [vmem:[%s679 + $0xb0] sm:$0xff]
        %v968 = vld [vmem:[%s679 + $0xb8] sm:$0xff]
        %v969 = vld [vmem:[%s679 + $0xc0] sm:$0xff]
        %v970 = vld [vmem:[%s679 + $0xc8] sm:$0xff]
        %v971 = vld [vmem:[%s679 + $0xd0] sm:$0xff]
        %v972 = vld [vmem:[%s679 + $0xd8] sm:$0xff]
        %v973 = vld [vmem:[%s679 + $0xe0] sm:$0xff]
        %v974 = vld [vmem:[%s679 + $0xe8] sm:$0xff]
        %v975 = vld [vmem:[%s679 + $0xf0] sm:$0xff]
        %v976 = vld [vmem:[%s679 + $0xf8] sm:$0xff]
        %v977 = vld [vmem:[%s806] sm:$0x1]
        %v979 = vperm.slane %v977, 0
        %981 = vmatpush.msra.mxu0 %v960
        %982 = vmatpush.msra.mxu0 %v959
        %983 = vmatpush.msra.mxu0 %v958
        %984 = vmatpush.msra.mxu0 %v957
        %985 = vmatpush.msra.mxu0 %v956
        %986 = vmatpush.msra.mxu0 %v955
        %987 = vmatpush.msra.mxu0 %v954
        %988 = vmatpush.msra.mxu0 %v953
        %989 = vmatpush.msra.mxu0 %v952
        %990 = vmatpush.msra.mxu0 %v951
        %991 = vmatpush.msra.mxu0 %v950
        %992 = vmatpush.msra.mxu0 %v949
        %993 = vmatpush.msra.mxu0 %v948
        %994 = vmatpush.msra.mxu0 %v947
        %995 = vmatpush.msra.mxu0 %v946
        %996 = vmatpush.msra.mxu0 %v945
        %997 = vmatmul.f32.gmra.mxu0 %v849
        %v998 = vpop.f32.mrf.mxu0
        %v999 = vadd.f32 %v979, %v998
        %1000 = vmatmul.f32.gmra.mxu0 %v851
        %v1001 = vpop.f32.mrf.mxu0
        %v1002 = vadd.f32 %v979, %v1001
        %1003 = vmatmul.f32.gmra.mxu0 %v853
        %v1004 = vpop.f32.mrf.mxu0
        %v1005 = vadd.f32 %v979, %v1004
        %1006 = vmatmul.f32.gmra.mxu0 %v855
        %v1007 = vpop.f32.mrf.mxu0
        %v1008 = vadd.f32 %v979, %v1007
        %1009 = vmatmul.f32.gmra.mxu0 %v857
        %v1010 = vpop.f32.mrf.mxu0
        %v1011 = vadd.f32 %v979, %v1010
        %1012 = vmatmul.f32.gmra.mxu0 %v859
        %v1013 = vpop.f32.mrf.mxu0
        %v1014 = vadd.f32 %v979, %v1013
        %1015 = vmatmul.f32.gmra.mxu0 %v861
        %v1016 = vpop.f32.mrf.mxu0
        %v1017 = vadd.f32 %v979, %v1016
        %1018 = vmatmul.f32.gmra.mxu0 %v863
        %v1019 = vpop.f32.mrf.mxu0
        %v1020 = vadd.f32 %v979, %v1019
        %1021 = vmatmul.f32.gmra.mxu0 %v865
        %v1022 = vpop.f32.mrf.mxu0
        %v1023 = vadd.f32 %v979, %v1022
        %1024 = vmatmul.f32.gmra.mxu0 %v867
        %v1025 = vpop.f32.mrf.mxu0
        %v1026 = vadd.f32 %v979, %v1025
        %1027 = vmatmul.f32.gmra.mxu0 %v869
        %v1028 = vpop.f32.mrf.mxu0
        %v1029 = vadd.f32 %v979, %v1028
        %1030 = vmatmul.f32.gmra.mxu0 %v871
        %v1031 = vpop.f32.mrf.mxu0
        %v1032 = vadd.f32 %v979, %v1031
        %1033 = vmatmul.f32.gmra.mxu0 %v873
        %v1034 = vpop.f32.mrf.mxu0
        %v1035 = vadd.f32 %v979, %v1034
        %1036 = vmatmul.f32.gmra.mxu0 %v875
        %v1037 = vpop.f32.mrf.mxu0
        %v1038 = vadd.f32 %v979, %v1037
        %1039 = vmatmul.f32.gmra.mxu0 %v877
        %v1040 = vpop.f32.mrf.mxu0
        %v1041 = vadd.f32 %v979, %v1040
        %1042 = vmatmul.f32.gmra.mxu0 %v879
        %v1043 = vpop.f32.mrf.mxu0
        %v1044 = vadd.f32 %v979, %v1043
        %1045 = vdwg.mxu0
        %1046 = vmatpush.msra.mxu0 %v976
        %1047 = vmatpush.msra.mxu0 %v975
        %1048 = vmatpush.msra.mxu0 %v974
        %1049 = vmatpush.msra.mxu0 %v973
        %1050 = vmatpush.msra.mxu0 %v972
        %1051 = vmatpush.msra.mxu0 %v971
        %1052 = vmatpush.msra.mxu0 %v970
        %1053 = vmatpush.msra.mxu0 %v969
        %1054 = vmatpush.msra.mxu0 %v968
        %1055 = vmatpush.msra.mxu0 %v967
        %1056 = vmatpush.msra.mxu0 %v966
        %1057 = vmatpush.msra.mxu0 %v965
        %1058 = vmatpush.msra.mxu0 %v964
        %1059 = vmatpush.msra.mxu0 %v963
        %1060 = vmatpush.msra.mxu0 %v962
        %1061 = vmatpush.msra.mxu0 %v961
        %1062 = vmatmul.f32.gmra.mxu0 %v850
        %v1063 = vpop.f32.mrf.mxu0
        %v1064 = vadd.f32 %v999, %v1063
        %1065 = vmatmul.f32.gmra.mxu0 %v852
        %v1066 = vpop.f32.mrf.mxu0
        %v1067 = vadd.f32 %v1002, %v1066
        %1068 = vmatmul.f32.gmra.mxu0 %v854
        %v1069 = vpop.f32.mrf.mxu0
        %v1070 = vadd.f32 %v1005, %v1069
        %1071 = vmatmul.f32.gmra.mxu0 %v856
        %v1072 = vpop.f32.mrf.mxu0
        %v1073 = vadd.f32 %v1008, %v1072
        %1074 = vmatmul.f32.gmra.mxu0 %v858
        %v1075 = vpop.f32.mrf.mxu0
        %v1076 = vadd.f32 %v1011, %v1075
        %1077 = vmatmul.f32.gmra.mxu0 %v860
        %v1078 = vpop.f32.mrf.mxu0
        %v1079 = vadd.f32 %v1014, %v1078
        %1080 = vmatmul.f32.gmra.mxu0 %v862
        %v1081 = vpop.f32.mrf.mxu0
        %v1082 = vadd.f32 %v1017, %v1081
        %1083 = vmatmul.f32.gmra.mxu0 %v864
        %v1084 = vpop.f32.mrf.mxu0
        %v1085 = vadd.f32 %v1020, %v1084
        %1086 = vmatmul.f32.gmra.mxu0 %v866
        %v1087 = vpop.f32.mrf.mxu0
        %v1088 = vadd.f32 %v1023, %v1087
        %1089 = vmatmul.f32.gmra.mxu0 %v868
        %v1090 = vpop.f32.mrf.mxu0
        %v1091 = vadd.f32 %v1026, %v1090
        %1092 = vmatmul.f32.gmra.mxu0 %v870
        %v1093 = vpop.f32.mrf.mxu0
        %v1094 = vadd.f32 %v1029, %v1093
        %1095 = vmatmul.f32.gmra.mxu0 %v872
        %v1096 = vpop.f32.mrf.mxu0
        %v1097 = vadd.f32 %v1032, %v1096
        %1098 = vmatmul.f32.gmra.mxu0 %v874
        %v1099 = vpop.f32.mrf.mxu0
        %v1100 = vadd.f32 %v1035, %v1099
        %1101 = vmatmul.f32.gmra.mxu0 %v876
        %v1102 = vpop.f32.mrf.mxu0
        %v1103 = vadd.f32 %v1038, %v1102
        %1104 = vmatmul.f32.gmra.mxu0 %v878
        %v1105 = vpop.f32.mrf.mxu0
        %v1106 = vadd.f32 %v1041, %v1105
        %1107 = vmatmul.f32.gmra.mxu0 %v880
        %v1108 = vpop.f32.mrf.mxu0
        %v1109 = vadd.f32 %v1044, %v1108
        %1110 = vdwg.mxu0
        %v1111 = vld [vmem:[%s689] sm:$0xff]
        %v1112 = vld [vmem:[%s689 + $0x8] sm:$0xff]
        %v1113 = vld [vmem:[%s689 + $0x10] sm:$0xff]
        %v1114 = vld [vmem:[%s689 + $0x18] sm:$0xff]
        %v1115 = vld [vmem:[%s689 + $0x20] sm:$0xff]
        %v1116 = vld [vmem:[%s689 + $0x28] sm:$0xff]
        %v1117 = vld [vmem:[%s689 + $0x30] sm:$0xff]
        %v1118 = vld [vmem:[%s689 + $0x38] sm:$0xff]
        %v1119 = vld [vmem:[%s689 + $0x40] sm:$0xff]
        %v1120 = vld [vmem:[%s689 + $0x48] sm:$0xff]
        %v1121 = vld [vmem:[%s689 + $0x50] sm:$0xff]
        %v1122 = vld [vmem:[%s689 + $0x58] sm:$0xff]
        %v1123 = vld [vmem:[%s689 + $0x60] sm:$0xff]
        %v1124 = vld [vmem:[%s689 + $0x68] sm:$0xff]
        %v1125 = vld [vmem:[%s689 + $0x70] sm:$0xff]
        %v1126 = vld [vmem:[%s689 + $0x78] sm:$0xff]
        %v1127 = vld [vmem:[%s689 + $0x80] sm:$0xff]
        %v1128 = vld [vmem:[%s689 + $0x88] sm:$0xff]
        %v1129 = vld [vmem:[%s689 + $0x90] sm:$0xff]
        %v1130 = vld [vmem:[%s689 + $0x98] sm:$0xff]
        %v1131 = vld [vmem:[%s689 + $0xa0] sm:$0xff]
        %v1132 = vld [vmem:[%s689 + $0xa8] sm:$0xff]
        %v1133 = vld [vmem:[%s689 + $0xb0] sm:$0xff]
        %v1134 = vld [vmem:[%s689 + $0xb8] sm:$0xff]
        %v1135 = vld [vmem:[%s689 + $0xc0] sm:$0xff]
        %v1136 = vld [vmem:[%s689 + $0xc8] sm:$0xff]
        %v1137 = vld [vmem:[%s689 + $0xd0] sm:$0xff]
        %v1138 = vld [vmem:[%s689 + $0xd8] sm:$0xff]
        %v1139 = vld [vmem:[%s689 + $0xe0] sm:$0xff]
        %v1140 = vld [vmem:[%s689 + $0xe8] sm:$0xff]
        %v1141 = vld [vmem:[%s689 + $0xf0] sm:$0xff]
        %v1142 = vld [vmem:[%s689 + $0xf8] sm:$0xff]
        %v1143 = vld [vmem:[%s809] sm:$0x1]
        %v1145 = vperm.slane %v1143, 0
        %1147 = vmatpush.msra.mxu0 %v1126
        %1148 = vmatpush.msra.mxu0 %v1125
        %1149 = vmatpush.msra.mxu0 %v1124
        %1150 = vmatpush.msra.mxu0 %v1123
        %1151 = vmatpush.msra.mxu0 %v1122
        %1152 = vmatpush.msra.mxu0 %v1121
        %1153 = vmatpush.msra.mxu0 %v1120
        %1154 = vmatpush.msra.mxu0 %v1119
        %1155 = vmatpush.msra.mxu0 %v1118
        %1156 = vmatpush.msra.mxu0 %v1117
        %1157 = vmatpush.msra.mxu0 %v1116
        %1158 = vmatpush.msra.mxu0 %v1115
        %1159 = vmatpush.msra.mxu0 %v1114
        %1160 = vmatpush.msra.mxu0 %v1113
        %1161 = vmatpush.msra.mxu0 %v1112
        %1162 = vmatpush.msra.mxu0 %v1111
        %1163 = vmatmul.f32.gmra.mxu0 %v881
        %v1164 = vpop.f32.mrf.mxu0
        %v1165 = vadd.f32 %v1145, %v1164
        %1166 = vmatmul.f32.gmra.mxu0 %v883
        %v1167 = vpop.f32.mrf.mxu0
        %v1168 = vadd.f32 %v1145, %v1167
        %1169 = vmatmul.f32.gmra.mxu0 %v885
        %v1170 = vpop.f32.mrf.mxu0
        %v1171 = vadd.f32 %v1145, %v1170
        %1172 = vmatmul.f32.gmra.mxu0 %v887
        %v1173 = vpop.f32.mrf.mxu0
        %v1174 = vadd.f32 %v1145, %v1173
        %1175 = vmatmul.f32.gmra.mxu0 %v889
        %v1176 = vpop.f32.mrf.mxu0
        %v1177 = vadd.f32 %v1145, %v1176
        %1178 = vmatmul.f32.gmra.mxu0 %v891
        %v1179 = vpop.f32.mrf.mxu0
        %v1180 = vadd.f32 %v1145, %v1179
        %1181 = vmatmul.f32.gmra.mxu0 %v893
        %v1182 = vpop.f32.mrf.mxu0
        %v1183 = vadd.f32 %v1145, %v1182
        %1184 = vmatmul.f32.gmra.mxu0 %v895
        %v1185 = vpop.f32.mrf.mxu0
        %v1186 = vadd.f32 %v1145, %v1185
        %1187 = vmatmul.f32.gmra.mxu0 %v897
        %v1188 = vpop.f32.mrf.mxu0
        %v1189 = vadd.f32 %v1145, %v1188
        %1190 = vmatmul.f32.gmra.mxu0 %v899
        %v1191 = vpop.f32.mrf.mxu0
        %v1192 = vadd.f32 %v1145, %v1191
        %1193 = vmatmul.f32.gmra.mxu0 %v901
        %v1194 = vpop.f32.mrf.mxu0
        %v1195 = vadd.f32 %v1145, %v1194
        %1196 = vmatmul.f32.gmra.mxu0 %v903
        %v1197 = vpop.f32.mrf.mxu0
        %v1198 = vadd.f32 %v1145, %v1197
        %1199 = vmatmul.f32.gmra.mxu0 %v905
        %v1200 = vpop.f32.mrf.mxu0
        %v1201 = vadd.f32 %v1145, %v1200
        %1202 = vmatmul.f32.gmra.mxu0 %v907
        %v1203 = vpop.f32.mrf.mxu0
        %v1204 = vadd.f32 %v1145, %v1203
        %1205 = vmatmul.f32.gmra.mxu0 %v909
        %v1206 = vpop.f32.mrf.mxu0
        %v1207 = vadd.f32 %v1145, %v1206
        %1208 = vmatmul.f32.gmra.mxu0 %v911
        %v1209 = vpop.f32.mrf.mxu0
        %v1210 = vadd.f32 %v1145, %v1209
        %1211 = vdwg.mxu0
        %1212 = vmatpush.msra.mxu0 %v1142
        %1213 = vmatpush.msra.mxu0 %v1141
        %1214 = vmatpush.msra.mxu0 %v1140
        %1215 = vmatpush.msra.mxu0 %v1139
        %1216 = vmatpush.msra.mxu0 %v1138
        %1217 = vmatpush.msra.mxu0 %v1137
        %1218 = vmatpush.msra.mxu0 %v1136
        %1219 = vmatpush.msra.mxu0 %v1135
        %1220 = vmatpush.msra.mxu0 %v1134
        %1221 = vmatpush.msra.mxu0 %v1133
        %1222 = vmatpush.msra.mxu0 %v1132
        %1223 = vmatpush.msra.mxu0 %v1131
        %1224 = vmatpush.msra.mxu0 %v1130
        %1225 = vmatpush.msra.mxu0 %v1129
        %1226 = vmatpush.msra.mxu0 %v1128
        %1227 = vmatpush.msra.mxu0 %v1127
        %1228 = vmatmul.f32.gmra.mxu0 %v882
        %v1229 = vpop.f32.mrf.mxu0
        %v1230 = vadd.f32 %v1165, %v1229
        %1231 = vmatmul.f32.gmra.mxu0 %v884
        %v1232 = vpop.f32.mrf.mxu0
        %v1233 = vadd.f32 %v1168, %v1232
        %1234 = vmatmul.f32.gmra.mxu0 %v886
        %v1235 = vpop.f32.mrf.mxu0
        %v1236 = vadd.f32 %v1171, %v1235
        %1237 = vmatmul.f32.gmra.mxu0 %v888
        %v1238 = vpop.f32.mrf.mxu0
        %v1239 = vadd.f32 %v1174, %v1238
        %1240 = vmatmul.f32.gmra.mxu0 %v890
        %v1241 = vpop.f32.mrf.mxu0
        %v1242 = vadd.f32 %v1177, %v1241
        %1243 = vmatmul.f32.gmra.mxu0 %v892
        %v1244 = vpop.f32.mrf.mxu0
        %v1245 = vadd.f32 %v1180, %v1244
        %1246 = vmatmul.f32.gmra.mxu0 %v894
        %v1247 = vpop.f32.mrf.mxu0
        %v1248 = vadd.f32 %v1183, %v1247
        %1249 = vmatmul.f32.gmra.mxu0 %v896
        %v1250 = vpop.f32.mrf.mxu0
        %v1251 = vadd.f32 %v1186, %v1250
        %1252 = vmatmul.f32.gmra.mxu0 %v898
        %v1253 = vpop.f32.mrf.mxu0
        %v1254 = vadd.f32 %v1189, %v1253
        %1255 = vmatmul.f32.gmra.mxu0 %v900
        %v1256 = vpop.f32.mrf.mxu0
        %v1257 = vadd.f32 %v1192, %v1256
        %1258 = vmatmul.f32.gmra.mxu0 %v902
        %v1259 = vpop.f32.mrf.mxu0
        %v1260 = vadd.f32 %v1195, %v1259
        %1261 = vmatmul.f32.gmra.mxu0 %v904
        %v1262 = vpop.f32.mrf.mxu0
        %v1263 = vadd.f32 %v1198, %v1262
        %1264 = vmatmul.f32.gmra.mxu0 %v906
        %v1265 = vpop.f32.mrf.mxu0
        %v1266 = vadd.f32 %v1201, %v1265
        %1267 = vmatmul.f32.gmra.mxu0 %v908
        %v1268 = vpop.f32.mrf.mxu0
        %v1269 = vadd.f32 %v1204, %v1268
        %1270 = vmatmul.f32.gmra.mxu0 %v910
        %v1271 = vpop.f32.mrf.mxu0
        %v1272 = vadd.f32 %v1207, %v1271
        %1273 = vmatmul.f32.gmra.mxu0 %v912
        %v1274 = vpop.f32.mrf.mxu0
        %v1275 = vadd.f32 %v1210, %v1274
        %1276 = vdwg.mxu0
        %v1277 = vld [vmem:[%s699] sm:$0xff]
        %v1278 = vld [vmem:[%s699 + $0x8] sm:$0xff]
        %v1279 = vld [vmem:[%s699 + $0x10] sm:$0xff]
        %v1280 = vld [vmem:[%s699 + $0x18] sm:$0xff]
        %v1281 = vld [vmem:[%s699 + $0x20] sm:$0xff]
        %v1282 = vld [vmem:[%s699 + $0x28] sm:$0xff]
        %v1283 = vld [vmem:[%s699 + $0x30] sm:$0xff]
        %v1284 = vld [vmem:[%s699 + $0x38] sm:$0xff]
        %v1285 = vld [vmem:[%s699 + $0x40] sm:$0xff]
        %v1286 = vld [vmem:[%s699 + $0x48] sm:$0xff]
        %v1287 = vld [vmem:[%s699 + $0x50] sm:$0xff]
        %v1288 = vld [vmem:[%s699 + $0x58] sm:$0xff]
        %v1289 = vld [vmem:[%s699 + $0x60] sm:$0xff]
        %v1290 = vld [vmem:[%s699 + $0x68] sm:$0xff]
        %v1291 = vld [vmem:[%s699 + $0x70] sm:$0xff]
        %v1292 = vld [vmem:[%s699 + $0x78] sm:$0xff]
        %v1293 = vld [vmem:[%s699 + $0x80] sm:$0xff]
        %v1294 = vld [vmem:[%s699 + $0x88] sm:$0xff]
        %v1295 = vld [vmem:[%s699 + $0x90] sm:$0xff]
        %v1296 = vld [vmem:[%s699 + $0x98] sm:$0xff]
        %v1297 = vld [vmem:[%s699 + $0xa0] sm:$0xff]
        %v1298 = vld [vmem:[%s699 + $0xa8] sm:$0xff]
        %v1299 = vld [vmem:[%s699 + $0xb0] sm:$0xff]
        %v1300 = vld [vmem:[%s699 + $0xb8] sm:$0xff]
        %v1301 = vld [vmem:[%s699 + $0xc0] sm:$0xff]
        %v1302 = vld [vmem:[%s699 + $0xc8] sm:$0xff]
        %v1303 = vld [vmem:[%s699 + $0xd0] sm:$0xff]
        %v1304 = vld [vmem:[%s699 + $0xd8] sm:$0xff]
        %v1305 = vld [vmem:[%s699 + $0xe0] sm:$0xff]
        %v1306 = vld [vmem:[%s699 + $0xe8] sm:$0xff]
        %v1307 = vld [vmem:[%s699 + $0xf0] sm:$0xff]
        %v1308 = vld [vmem:[%s699 + $0xf8] sm:$0xff]
        %v1309 = vld [vmem:[%s812] sm:$0x1]
        %v1311 = vperm.slane %v1309, 0
        %1313 = vmatpush.msra.mxu0 %v1292
        %1314 = vmatpush.msra.mxu0 %v1291
        %1315 = vmatpush.msra.mxu0 %v1290
        %1316 = vmatpush.msra.mxu0 %v1289
        %1317 = vmatpush.msra.mxu0 %v1288
        %1318 = vmatpush.msra.mxu0 %v1287
        %1319 = vmatpush.msra.mxu0 %v1286
        %1320 = vmatpush.msra.mxu0 %v1285
        %1321 = vmatpush.msra.mxu0 %v1284
        %1322 = vmatpush.msra.mxu0 %v1283
        %1323 = vmatpush.msra.mxu0 %v1282
        %1324 = vmatpush.msra.mxu0 %v1281
        %1325 = vmatpush.msra.mxu0 %v1280
        %1326 = vmatpush.msra.mxu0 %v1279
        %1327 = vmatpush.msra.mxu0 %v1278
        %1328 = vmatpush.msra.mxu0 %v1277
        %1329 = vmatmul.f32.gmra.mxu0 %v913
        %v1330 = vpop.f32.mrf.mxu0
        %v1331 = vadd.f32 %v1311, %v1330
        %1332 = vmatmul.f32.gmra.mxu0 %v915
        %v1333 = vpop.f32.mrf.mxu0
        %v1334 = vadd.f32 %v1311, %v1333
        %1335 = vmatmul.f32.gmra.mxu0 %v917
        %v1336 = vpop.f32.mrf.mxu0
        %v1337 = vadd.f32 %v1311, %v1336
        %1338 = vmatmul.f32.gmra.mxu0 %v919
        %v1339 = vpop.f32.mrf.mxu0
        %v1340 = vadd.f32 %v1311, %v1339
        %1341 = vmatmul.f32.gmra.mxu0 %v921
        %v1342 = vpop.f32.mrf.mxu0
        %v1343 = vadd.f32 %v1311, %v1342
        %1344 = vmatmul.f32.gmra.mxu0 %v923
        %v1345 = vpop.f32.mrf.mxu0
        %v1346 = vadd.f32 %v1311, %v1345
        %1347 = vmatmul.f32.gmra.mxu0 %v925
        %v1348 = vpop.f32.mrf.mxu0
        %v1349 = vadd.f32 %v1311, %v1348
        %1350 = vmatmul.f32.gmra.mxu0 %v927
        %v1351 = vpop.f32.mrf.mxu0
        %v1352 = vadd.f32 %v1311, %v1351
        %1353 = vmatmul.f32.gmra.mxu0 %v929
        %v1354 = vpop.f32.mrf.mxu0
        %v1355 = vadd.f32 %v1311, %v1354
        %1356 = vmatmul.f32.gmra.mxu0 %v931
        %v1357 = vpop.f32.mrf.mxu0
        %v1358 = vadd.f32 %v1311, %v1357
        %1359 = vmatmul.f32.gmra.mxu0 %v933
        %v1360 = vpop.f32.mrf.mxu0
        %v1361 = vadd.f32 %v1311, %v1360
        %1362 = vmatmul.f32.gmra.mxu0 %v935
        %v1363 = vpop.f32.mrf.mxu0
        %v1364 = vadd.f32 %v1311, %v1363
        %1365 = vmatmul.f32.gmra.mxu0 %v937
        %v1366 = vpop.f32.mrf.mxu0
        %v1367 = vadd.f32 %v1311, %v1366
        %1368 = vmatmul.f32.gmra.mxu0 %v939
        %v1369 = vpop.f32.mrf.mxu0
        %v1370 = vadd.f32 %v1311, %v1369
        %1371 = vmatmul.f32.gmra.mxu0 %v941
        %v1372 = vpop.f32.mrf.mxu0
        %v1373 = vadd.f32 %v1311, %v1372
        %1374 = vmatmul.f32.gmra.mxu0 %v943
        %v1375 = vpop.f32.mrf.mxu0
        %v1376 = vadd.f32 %v1311, %v1375
        %1377 = vdwg.mxu0
        %1378 = vmatpush.msra.mxu0 %v1308
        %1379 = vmatpush.msra.mxu0 %v1307
        %1380 = vmatpush.msra.mxu0 %v1306
        %1381 = vmatpush.msra.mxu0 %v1305
        %1382 = vmatpush.msra.mxu0 %v1304
        %1383 = vmatpush.msra.mxu0 %v1303
        %1384 = vmatpush.msra.mxu0 %v1302
        %1385 = vmatpush.msra.mxu0 %v1301
        %1386 = vmatpush.msra.mxu0 %v1300
        %1387 = vmatpush.msra.mxu0 %v1299
        %1388 = vmatpush.msra.mxu0 %v1298
        %1389 = vmatpush.msra.mxu0 %v1297
        %1390 = vmatpush.msra.mxu0 %v1296
        %1391 = vmatpush.msra.mxu0 %v1295
        %1392 = vmatpush.msra.mxu0 %v1294
        %1393 = vmatpush.msra.mxu0 %v1293
        %1394 = vmatmul.f32.gmra.mxu0 %v914
        %v1395 = vpop.f32.mrf.mxu0
        %v1396 = vadd.f32 %v1331, %v1395
        %1397 = vmatmul.f32.gmra.mxu0 %v916
        %v1398 = vpop.f32.mrf.mxu0
        %v1399 = vadd.f32 %v1334, %v1398
        %1400 = vmatmul.f32.gmra.mxu0 %v918
        %v1401 = vpop.f32.mrf.mxu0
        %v1402 = vadd.f32 %v1337, %v1401
        %1403 = vmatmul.f32.gmra.mxu0 %v920
        %v1404 = vpop.f32.mrf.mxu0
        %v1405 = vadd.f32 %v1340, %v1404
        %1406 = vmatmul.f32.gmra.mxu0 %v922
        %v1407 = vpop.f32.mrf.mxu0
        %v1408 = vadd.f32 %v1343, %v1407
        %1409 = vmatmul.f32.gmra.mxu0 %v924
        %v1410 = vpop.f32.mrf.mxu0
        %v1411 = vadd.f32 %v1346, %v1410
        %1412 = vmatmul.f32.gmra.mxu0 %v926
        %v1413 = vpop.f32.mrf.mxu0
        %v1414 = vadd.f32 %v1349, %v1413
        %1415 = vmatmul.f32.gmra.mxu0 %v928
        %v1416 = vpop.f32.mrf.mxu0
        %v1417 = vadd.f32 %v1352, %v1416
        %1418 = vmatmul.f32.gmra.mxu0 %v930
        %v1419 = vpop.f32.mrf.mxu0
        %v1420 = vadd.f32 %v1355, %v1419
        %1421 = vmatmul.f32.gmra.mxu0 %v932
        %v1422 = vpop.f32.mrf.mxu0
        %v1423 = vadd.f32 %v1358, %v1422
        %1424 = vmatmul.f32.gmra.mxu0 %v934
        %v1425 = vpop.f32.mrf.mxu0
        %v1426 = vadd.f32 %v1361, %v1425
        %1427 = vmatmul.f32.gmra.mxu0 %v936
        %v1428 = vpop.f32.mrf.mxu0
        %v1429 = vadd.f32 %v1364, %v1428
        %1430 = vmatmul.f32.gmra.mxu0 %v938
        %v1431 = vpop.f32.mrf.mxu0
        %v1432 = vadd.f32 %v1367, %v1431
        %1433 = vmatmul.f32.gmra.mxu0 %v940
        %v1434 = vpop.f32.mrf.mxu0
        %v1435 = vadd.f32 %v1370, %v1434
        %1436 = vmatmul.f32.gmra.mxu0 %v942
        %v1437 = vpop.f32.mrf.mxu0
        %v1438 = vadd.f32 %v1373, %v1437
        %1439 = vmatmul.f32.gmra.mxu0 %v944
        %v1440 = vpop.f32.mrf.mxu0
        %v1441 = vadd.f32 %v1376, %v1440
        %1442 = vdwg.mxu0
        %1443 = vmatpush.xpose.msra.mxu0 %v1275
        %1444 = vmatpush.xpose.msra.mxu0 %v1272
        %1445 = vmatpush.xpose.msra.mxu0 %v1269
        %1446 = vmatpush.xpose.msra.mxu0 %v1266
        %1447 = vmatpush.xpose.msra.mxu0 %v1263
        %1448 = vmatpush.xpose.msra.mxu0 %v1260
        %1449 = vmatpush.xpose.msra.mxu0 %v1257
        %1450 = vmatpush.xpose.msra.mxu0 %v1254
        %1451 = vmatpush.xpose.msra.mxu0 %v1251
        %1452 = vmatpush.xpose.msra.mxu0 %v1248
        %1453 = vmatpush.xpose.msra.mxu0 %v1245
        %1454 = vmatpush.xpose.msra.mxu0 %v1242
        %1455 = vmatpush.xpose.msra.mxu0 %v1239
        %1456 = vmatpush.xpose.msra.mxu0 %v1236
        %1457 = vmatpush.xpose.msra.mxu0 %v1233
        %1458 = vmatpush.xpose.msra.mxu0 %v1230
        %1459 = vmatmul.f32.gmra.mxu0 %v1064
        %v1460 = vpop.f32.mrf.mxu0
        %v1461 = vadd.f32 0.0, %v1460
        %1462 = vmatmul.f32.gmra.mxu0 %v1067
        %v1463 = vpop.f32.mrf.mxu0
        %v1464 = vadd.f32 0.0, %v1463
        %1465 = vmatmul.f32.gmra.mxu0 %v1070
        %v1466 = vpop.f32.mrf.mxu0
        %v1467 = vadd.f32 0.0, %v1466
        %1468 = vmatmul.f32.gmra.mxu0 %v1073
        %v1469 = vpop.f32.mrf.mxu0
        %v1470 = vadd.f32 0.0, %v1469
        %1471 = vmatmul.f32.gmra.mxu0 %v1076
        %v1472 = vpop.f32.mrf.mxu0
        %v1473 = vadd.f32 0.0, %v1472
        %1474 = vmatmul.f32.gmra.mxu0 %v1079
        %v1475 = vpop.f32.mrf.mxu0
        %v1476 = vadd.f32 0.0, %v1475
        %1477 = vmatmul.f32.gmra.mxu0 %v1082
        %v1478 = vpop.f32.mrf.mxu0
        %v1479 = vadd.f32 0.0, %v1478
        %1480 = vmatmul.f32.gmra.mxu0 %v1085
        %v1481 = vpop.f32.mrf.mxu0
        %v1482 = vadd.f32 0.0, %v1481
        %1483 = vmatmul.f32.gmra.mxu0 %v1088
        %v1484 = vpop.f32.mrf.mxu0
        %v1485 = vadd.f32 0.0, %v1484
        %1486 = vmatmul.f32.gmra.mxu0 %v1091
        %v1487 = vpop.f32.mrf.mxu0
        %v1488 = vadd.f32 0.0, %v1487
        %1489 = vmatmul.f32.gmra.mxu0 %v1094
        %v1490 = vpop.f32.mrf.mxu0
        %v1491 = vadd.f32 0.0, %v1490
        %1492 = vmatmul.f32.gmra.mxu0 %v1097
        %v1493 = vpop.f32.mrf.mxu0
        %v1494 = vadd.f32 0.0, %v1493
        %1495 = vmatmul.f32.gmra.mxu0 %v1100
        %v1496 = vpop.f32.mrf.mxu0
        %v1497 = vadd.f32 0.0, %v1496
        %1498 = vmatmul.f32.gmra.mxu0 %v1103
        %v1499 = vpop.f32.mrf.mxu0
        %v1500 = vadd.f32 0.0, %v1499
        %1501 = vmatmul.f32.gmra.mxu0 %v1106
        %v1502 = vpop.f32.mrf.mxu0
        %v1503 = vadd.f32 0.0, %v1502
        %1504 = vmatmul.f32.gmra.mxu0 %v1109
        %v1505 = vpop.f32.mrf.mxu0
        %v1506 = vadd.f32 0.0, %v1505
        %1507 = vdwg.mxu0
        %1508 = vmax.xlane.f32.xlu0 %v1461
        %v1509 = vpop.xlane.xlu0 %1508
        %1510 = vmax.xlane.f32.xlu0 %v1464
        %v1511 = vpop.xlane.xlu0 %1510
        %1512 = vmax.xlane.f32.xlu0 %v1467
        %v1513 = vpop.xlane.xlu0 %1512
        %1514 = vmax.xlane.f32.xlu0 %v1470
        %v1515 = vpop.xlane.xlu0 %1514
        %1516 = vmax.xlane.f32.xlu0 %v1473
        %v1517 = vpop.xlane.xlu0 %1516
        %1518 = vmax.xlane.f32.xlu0 %v1476
        %v1519 = vpop.xlane.xlu0 %1518
        %1520 = vmax.xlane.f32.xlu0 %v1479
        %v1521 = vpop.xlane.xlu0 %1520
        %1522 = vmax.xlane.f32.xlu0 %v1482
        %v1523 = vpop.xlane.xlu0 %1522
        %1524 = vmax.xlane.f32.xlu0 %v1485
        %v1525 = vpop.xlane.xlu0 %1524
        %1526 = vmax.xlane.f32.xlu0 %v1488
        %v1527 = vpop.xlane.xlu0 %1526
        %1528 = vmax.xlane.f32.xlu0 %v1491
        %v1529 = vpop.xlane.xlu0 %1528
        %1530 = vmax.xlane.f32.xlu0 %v1494
        %v1531 = vpop.xlane.xlu0 %1530
        %1532 = vmax.xlane.f32.xlu0 %v1497
        %v1533 = vpop.xlane.xlu0 %1532
        %1534 = vmax.xlane.f32.xlu0 %v1500
        %v1535 = vpop.xlane.xlu0 %1534
        %1536 = vmax.xlane.f32.xlu0 %v1503
        %v1537 = vpop.xlane.xlu0 %1536
        %1538 = vmax.xlane.f32.xlu0 %v1506
        %v1539 = vpop.xlane.xlu0 %1538
        %v1540 = vsub.f32 %v1461, %v1509
        %v1541 = vsub.f32 %v1464, %v1511
        %v1542 = vsub.f32 %v1467, %v1513
        %v1543 = vsub.f32 %v1470, %v1515
        %v1544 = vsub.f32 %v1473, %v1517
        %v1545 = vsub.f32 %v1476, %v1519
        %v1546 = vsub.f32 %v1479, %v1521
        %v1547 = vsub.f32 %v1482, %v1523
        %v1548 = vsub.f32 %v1485, %v1525
        %v1549 = vsub.f32 %v1488, %v1527
        %v1550 = vsub.f32 %v1491, %v1529
        %v1551 = vsub.f32 %v1494, %v1531
        %v1552 = vsub.f32 %v1497, %v1533
        %v1553 = vsub.f32 %v1500, %v1535
        %v1554 = vsub.f32 %v1503, %v1537
        %v1555 = vsub.f32 %v1506, %v1539
        %v1556 = vmul.f32 %v1540, 1.442695
        %v1557 = vpow.pop %v1556
        %v1558 = vmul.f32 %v1541, 1.442695
        %v1559 = vpow.pop %v1558
        %v1560 = vmul.f32 %v1542, 1.442695
        %v1561 = vpow.pop %v1560
        %v1562 = vmul.f32 %v1543, 1.442695
        %v1563 = vpow.pop %v1562
        %v1564 = vmul.f32 %v1544, 1.442695
        %v1565 = vpow.pop %v1564
        %v1566 = vmul.f32 %v1545, 1.442695
        %v1567 = vpow.pop %v1566
        %v1568 = vmul.f32 %v1546, 1.442695
        %v1569 = vpow.pop %v1568
        %v1570 = vmul.f32 %v1547, 1.442695
        %v1571 = vpow.pop %v1570
        %v1572 = vmul.f32 %v1548, 1.442695
        %v1573 = vpow.pop %v1572
        %v1574 = vmul.f32 %v1549, 1.442695
        %v1575 = vpow.pop %v1574
        %v1576 = vmul.f32 %v1550, 1.442695
        %v1577 = vpow.pop %v1576
        %v1578 = vmul.f32 %v1551, 1.442695
        %v1579 = vpow.pop %v1578
        %v1580 = vmul.f32 %v1552, 1.442695
        %v1581 = vpow.pop %v1580
        %v1582 = vmul.f32 %v1553, 1.442695
        %v1583 = vpow.pop %v1582
        %v1584 = vmul.f32 %v1554, 1.442695
        %v1585 = vpow.pop %v1584
        %v1586 = vmul.f32 %v1555, 1.442695
        %v1587 = vpow.pop %v1586
        %1588 = vadd.xlane.f32.xlu0 %v1557
        %v1589 = vpop.xlane.xlu0 %1588
        %1590 = vadd.xlane.f32.xlu0 %v1559
        %v1591 = vpop.xlane.xlu0 %1590
        %1592 = vadd.xlane.f32.xlu0 %v1561
        %v1593 = vpop.xlane.xlu0 %1592
        %1594 = vadd.xlane.f32.xlu0 %v1563
        %v1595 = vpop.xlane.xlu0 %1594
        %1596 = vadd.xlane.f32.xlu0 %v1565
        %v1597 = vpop.xlane.xlu0 %1596
        %1598 = vadd.xlane.f32.xlu0 %v1567
        %v1599 = vpop.xlane.xlu0 %1598
        %1600 = vadd.xlane.f32.xlu0 %v1569
        %v1601 = vpop.xlane.xlu0 %1600
        %1602 = vadd.xlane.f32.xlu0 %v1571
        %v1603 = vpop.xlane.xlu0 %1602
        %1604 = vadd.xlane.f32.xlu0 %v1573
        %v1605 = vpop.xlane.xlu0 %1604
        %1606 = vadd.xlane.f32.xlu0 %v1575
        %v1607 = vpop.xlane.xlu0 %1606
        %1608 = vadd.xlane.f32.xlu0 %v1577
        %v1609 = vpop.xlane.xlu0 %1608
        %1610 = vadd.xlane.f32.xlu0 %v1579
        %v1611 = vpop.xlane.xlu0 %1610
        %1612 = vadd.xlane.f32.xlu0 %v1581
        %v1613 = vpop.xlane.xlu0 %1612
        %1614 = vadd.xlane.f32.xlu0 %v1583
        %v1615 = vpop.xlane.xlu0 %1614
        %1616 = vadd.xlane.f32.xlu0 %v1585
        %v1617 = vpop.xlane.xlu0 %1616
        %1618 = vadd.xlane.f32.xlu0 %v1587
        %v1619 = vpop.xlane.xlu0 %1618
        %v1620 = vrcp.pop %v1589
        %v1621 = vmul.f32 %v1589, %v1620
        %v1622 = vsub.f32 1.0, %v1621
        %v1623 = vmul.f32 %v1620, %v1622
        %v1624 = vadd.f32 %v1620, %v1623
        %vm1625 = vweird.f32 %v1589
        %vm1626 = vweird.f32 %v1620
        %vm1627 = vmor %vm1625, %vm1626
        %v1628 = vsel %vm1627, %v1620, %v1624
        %v1629 = vand.u32 2147483647, %v1589
        %vm1630 = vcmp.eq.f32.partialorder %v1629, 8.507059e+37
        %v1631 = vand.u32 %v1589, 2147483648
        %v1632 = vor.u32 1.1754944e-38, %v1631
        %v1633 = vsel %vm1630, %v1632, %v1628
        %v1634 = vmul.f32 %v1557, %v1633
        %v1635 = vrcp.pop %v1591
        %v1636 = vmul.f32 %v1591, %v1635
        %v1637 = vsub.f32 1.0, %v1636
        %v1638 = vmul.f32 %v1635, %v1637
        %v1639 = vadd.f32 %v1635, %v1638
        %vm1640 = vweird.f32 %v1591
        %vm1641 = vweird.f32 %v1635
        %vm1642 = vmor %vm1640, %vm1641
        %v1643 = vsel %vm1642, %v1635, %v1639
        %v1644 = vand.u32 2147483647, %v1591
        %vm1645 = vcmp.eq.f32.partialorder %v1644, 8.507059e+37
        %v1646 = vand.u32 %v1591, 2147483648
        %v1647 = vor.u32 1.1754944e-38, %v1646
        %v1648 = vsel %vm1645, %v1647, %v1643
        %v1649 = vmul.f32 %v1559, %v1648
        %v1650 = vrcp.pop %v1593
        %v1651 = vmul.f32 %v1593, %v1650
        %v1652 = vsub.f32 1.0, %v1651
        %v1653 = vmul.f32 %v1650, %v1652
        %v1654 = vadd.f32 %v1650, %v1653
        %vm1655 = vweird.f32 %v1593
        %vm1656 = vweird.f32 %v1650
        %vm1657 = vmor %vm1655, %vm1656
        %v1658 = vsel %vm1657, %v1650, %v1654
        %v1659 = vand.u32 2147483647, %v1593
        %vm1660 = vcmp.eq.f32.partialorder %v1659, 8.507059e+37
        %v1661 = vand.u32 %v1593, 2147483648
        %v1662 = vor.u32 1.1754944e-38, %v1661
        %v1663 = vsel %vm1660, %v1662, %v1658
        %v1664 = vmul.f32 %v1561, %v1663
        %v1665 = vrcp.pop %v1595
        %v1666 = vmul.f32 %v1595, %v1665
        %v1667 = vsub.f32 1.0, %v1666
        %v1668 = vmul.f32 %v1665, %v1667
        %v1669 = vadd.f32 %v1665, %v1668
        %vm1670 = vweird.f32 %v1595
        %vm1671 = vweird.f32 %v1665
        %vm1672 = vmor %vm1670, %vm1671
        %v1673 = vsel %vm1672, %v1665, %v1669
        %v1674 = vand.u32 2147483647, %v1595
        %vm1675 = vcmp.eq.f32.partialorder %v1674, 8.507059e+37
        %v1676 = vand.u32 %v1595, 2147483648
        %v1677 = vor.u32 1.1754944e-38, %v1676
        %v1678 = vsel %vm1675, %v1677, %v1673
        %v1679 = vmul.f32 %v1563, %v1678
        %v1680 = vrcp.pop %v1597
        %v1681 = vmul.f32 %v1597, %v1680
        %v1682 = vsub.f32 1.0, %v1681
        %v1683 = vmul.f32 %v1680, %v1682
        %v1684 = vadd.f32 %v1680, %v1683
        %vm1685 = vweird.f32 %v1597
        %vm1686 = vweird.f32 %v1680
        %vm1687 = vmor %vm1685, %vm1686
        %v1688 = vsel %vm1687, %v1680, %v1684
        %v1689 = vand.u32 2147483647, %v1597
        %vm1690 = vcmp.eq.f32.partialorder %v1689, 8.507059e+37
        %v1691 = vand.u32 %v1597, 2147483648
        %v1692 = vor.u32 1.1754944e-38, %v1691
        %v1693 = vsel %vm1690, %v1692, %v1688
        %v1694 = vmul.f32 %v1565, %v1693
        %v1695 = vrcp.pop %v1599
        %v1696 = vmul.f32 %v1599, %v1695
        %v1697 = vsub.f32 1.0, %v1696
        %v1698 = vmul.f32 %v1695, %v1697
        %v1699 = vadd.f32 %v1695, %v1698
        %vm1700 = vweird.f32 %v1599
        %vm1701 = vweird.f32 %v1695
        %vm1702 = vmor %vm1700, %vm1701
        %v1703 = vsel %vm1702, %v1695, %v1699
        %v1704 = vand.u32 2147483647, %v1599
        %vm1705 = vcmp.eq.f32.partialorder %v1704, 8.507059e+37
        %v1706 = vand.u32 %v1599, 2147483648
        %v1707 = vor.u32 1.1754944e-38, %v1706
        %v1708 = vsel %vm1705, %v1707, %v1703
        %v1709 = vmul.f32 %v1567, %v1708
        %v1710 = vrcp.pop %v1601
        %v1711 = vmul.f32 %v1601, %v1710
        %v1712 = vsub.f32 1.0, %v1711
        %v1713 = vmul.f32 %v1710, %v1712
        %v1714 = vadd.f32 %v1710, %v1713
        %vm1715 = vweird.f32 %v1601
        %vm1716 = vweird.f32 %v1710
        %vm1717 = vmor %vm1715, %vm1716
        %v1718 = vsel %vm1717, %v1710, %v1714
        %v1719 = vand.u32 2147483647, %v1601
        %vm1720 = vcmp.eq.f32.partialorder %v1719, 8.507059e+37
        %v1721 = vand.u32 %v1601, 2147483648
        %v1722 = vor.u32 1.1754944e-38, %v1721
        %v1723 = vsel %vm1720, %v1722, %v1718
        %v1724 = vmul.f32 %v1569, %v1723
        %v1725 = vrcp.pop %v1603
        %v1726 = vmul.f32 %v1603, %v1725
        %v1727 = vsub.f32 1.0, %v1726
        %v1728 = vmul.f32 %v1725, %v1727
        %v1729 = vadd.f32 %v1725, %v1728
        %vm1730 = vweird.f32 %v1603
        %vm1731 = vweird.f32 %v1725
        %vm1732 = vmor %vm1730, %vm1731
        %v1733 = vsel %vm1732, %v1725, %v1729
        %v1734 = vand.u32 2147483647, %v1603
        %vm1735 = vcmp.eq.f32.partialorder %v1734, 8.507059e+37
        %v1736 = vand.u32 %v1603, 2147483648
        %v1737 = vor.u32 1.1754944e-38, %v1736
        %v1738 = vsel %vm1735, %v1737, %v1733
        %v1739 = vmul.f32 %v1571, %v1738
        %v1740 = vrcp.pop %v1605
        %v1741 = vmul.f32 %v1605, %v1740
        %v1742 = vsub.f32 1.0, %v1741
        %v1743 = vmul.f32 %v1740, %v1742
        %v1744 = vadd.f32 %v1740, %v1743
        %vm1745 = vweird.f32 %v1605
        %vm1746 = vweird.f32 %v1740
        %vm1747 = vmor %vm1745, %vm1746
        %v1748 = vsel %vm1747, %v1740, %v1744
        %v1749 = vand.u32 2147483647, %v1605
        %vm1750 = vcmp.eq.f32.partialorder %v1749, 8.507059e+37
        %v1751 = vand.u32 %v1605, 2147483648
        %v1752 = vor.u32 1.1754944e-38, %v1751
        %v1753 = vsel %vm1750, %v1752, %v1748
        %v1754 = vmul.f32 %v1573, %v1753
        %v1755 = vrcp.pop %v1607
        %v1756 = vmul.f32 %v1607, %v1755
        %v1757 = vsub.f32 1.0, %v1756
        %v1758 = vmul.f32 %v1755, %v1757
        %v1759 = vadd.f32 %v1755, %v1758
        %vm1760 = vweird.f32 %v1607
        %vm1761 = vweird.f32 %v1755
        %vm1762 = vmor %vm1760, %vm1761
        %v1763 = vsel %vm1762, %v1755, %v1759
        %v1764 = vand.u32 2147483647, %v1607
        %vm1765 = vcmp.eq.f32.partialorder %v1764, 8.507059e+37
        %v1766 = vand.u32 %v1607, 2147483648
        %v1767 = vor.u32 1.1754944e-38, %v1766
        %v1768 = vsel %vm1765, %v1767, %v1763
        %v1769 = vmul.f32 %v1575, %v1768
        %v1770 = vrcp.pop %v1609
        %v1771 = vmul.f32 %v1609, %v1770
        %v1772 = vsub.f32 1.0, %v1771
        %v1773 = vmul.f32 %v1770, %v1772
        %v1774 = vadd.f32 %v1770, %v1773
        %vm1775 = vweird.f32 %v1609
        %vm1776 = vweird.f32 %v1770
        %vm1777 = vmor %vm1775, %vm1776
        %v1778 = vsel %vm1777, %v1770, %v1774
        %v1779 = vand.u32 2147483647, %v1609
        %vm1780 = vcmp.eq.f32.partialorder %v1779, 8.507059e+37
        %v1781 = vand.u32 %v1609, 2147483648
        %v1782 = vor.u32 1.1754944e-38, %v1781
        %v1783 = vsel %vm1780, %v1782, %v1778
        %v1784 = vmul.f32 %v1577, %v1783
        %v1785 = vrcp.pop %v1611
        %v1786 = vmul.f32 %v1611, %v1785
        %v1787 = vsub.f32 1.0, %v1786
        %v1788 = vmul.f32 %v1785, %v1787
        %v1789 = vadd.f32 %v1785, %v1788
        %vm1790 = vweird.f32 %v1611
        %vm1791 = vweird.f32 %v1785
        %vm1792 = vmor %vm1790, %vm1791
        %v1793 = vsel %vm1792, %v1785, %v1789
        %v1794 = vand.u32 2147483647, %v1611
        %vm1795 = vcmp.eq.f32.partialorder %v1794, 8.507059e+37
        %v1796 = vand.u32 %v1611, 2147483648
        %v1797 = vor.u32 1.1754944e-38, %v1796
        %v1798 = vsel %vm1795, %v1797, %v1793
        %v1799 = vmul.f32 %v1579, %v1798
        %v1800 = vrcp.pop %v1613
        %v1801 = vmul.f32 %v1613, %v1800
        %v1802 = vsub.f32 1.0, %v1801
        %v1803 = vmul.f32 %v1800, %v1802
        %v1804 = vadd.f32 %v1800, %v1803
        %vm1805 = vweird.f32 %v1613
        %vm1806 = vweird.f32 %v1800
        %vm1807 = vmor %vm1805, %vm1806
        %v1808 = vsel %vm1807, %v1800, %v1804
        %v1809 = vand.u32 2147483647, %v1613
        %vm1810 = vcmp.eq.f32.partialorder %v1809, 8.507059e+37
        %v1811 = vand.u32 %v1613, 2147483648
        %v1812 = vor.u32 1.1754944e-38, %v1811
        %v1813 = vsel %vm1810, %v1812, %v1808
        %v1814 = vmul.f32 %v1581, %v1813
        %v1815 = vrcp.pop %v1615
        %v1816 = vmul.f32 %v1615, %v1815
        %v1817 = vsub.f32 1.0, %v1816
        %v1818 = vmul.f32 %v1815, %v1817
        %v1819 = vadd.f32 %v1815, %v1818
        %vm1820 = vweird.f32 %v1615
        %vm1821 = vweird.f32 %v1815
        %vm1822 = vmor %vm1820, %vm1821
        %v1823 = vsel %vm1822, %v1815, %v1819
        %v1824 = vand.u32 2147483647, %v1615
        %vm1825 = vcmp.eq.f32.partialorder %v1824, 8.507059e+37
        %v1826 = vand.u32 %v1615, 2147483648
        %v1827 = vor.u32 1.1754944e-38, %v1826
        %v1828 = vsel %vm1825, %v1827, %v1823
        %v1829 = vmul.f32 %v1583, %v1828
        %v1830 = vrcp.pop %v1617
        %v1831 = vmul.f32 %v1617, %v1830
        %v1832 = vsub.f32 1.0, %v1831
        %v1833 = vmul.f32 %v1830, %v1832
        %v1834 = vadd.f32 %v1830, %v1833
        %vm1835 = vweird.f32 %v1617
        %vm1836 = vweird.f32 %v1830
        %vm1837 = vmor %vm1835, %vm1836
        %v1838 = vsel %vm1837, %v1830, %v1834
        %v1839 = vand.u32 2147483647, %v1617
        %vm1840 = vcmp.eq.f32.partialorder %v1839, 8.507059e+37
        %v1841 = vand.u32 %v1617, 2147483648
        %v1842 = vor.u32 1.1754944e-38, %v1841
        %v1843 = vsel %vm1840, %v1842, %v1838
        %v1844 = vmul.f32 %v1585, %v1843
        %v1845 = vrcp.pop %v1619
        %v1846 = vmul.f32 %v1619, %v1845
        %v1847 = vsub.f32 1.0, %v1846
        %v1848 = vmul.f32 %v1845, %v1847
        %v1849 = vadd.f32 %v1845, %v1848
        %vm1850 = vweird.f32 %v1619
        %vm1851 = vweird.f32 %v1845
        %vm1852 = vmor %vm1850, %vm1851
        %v1853 = vsel %vm1852, %v1845, %v1849
        %v1854 = vand.u32 2147483647, %v1619
        %vm1855 = vcmp.eq.f32.partialorder %v1854, 8.507059e+37
        %v1856 = vand.u32 %v1619, 2147483648
        %v1857 = vor.u32 1.1754944e-38, %v1856
        %v1858 = vsel %vm1855, %v1857, %v1853
        %v1859 = vmul.f32 %v1587, %v1858
        %1860 = vst [vmem:[%s803] sm:$0xff] %v1634
        %1861 = vst [vmem:[%s803 + $0x8] sm:$0xff] %v1649
        %1862 = vst [vmem:[%s803 + $0x10] sm:$0xff] %v1664
        %1863 = vst [vmem:[%s803 + $0x18] sm:$0xff] %v1679
        %1864 = vst [vmem:[%s803 + $0x20] sm:$0xff] %v1694
        %1865 = vst [vmem:[%s803 + $0x28] sm:$0xff] %v1709
        %1866 = vst [vmem:[%s803 + $0x30] sm:$0xff] %v1724
        %1867 = vst [vmem:[%s803 + $0x38] sm:$0xff] %v1739
        %1868 = vst [vmem:[%s803 + $0x40] sm:$0xff] %v1754
        %1869 = vst [vmem:[%s803 + $0x48] sm:$0xff] %v1769
        %1870 = vst [vmem:[%s803 + $0x50] sm:$0xff] %v1784
        %1871 = vst [vmem:[%s803 + $0x58] sm:$0xff] %v1799
        %1872 = vst [vmem:[%s803 + $0x60] sm:$0xff] %v1814
        %1873 = vst [vmem:[%s803 + $0x68] sm:$0xff] %v1829
        %1874 = vst [vmem:[%s803 + $0x70] sm:$0xff] %v1844
        %1875 = vst [vmem:[%s803 + $0x78] sm:$0xff] %v1859
        %1876 = vmatpush.msra.mxu0 %v1441
        %1877 = vmatpush.msra.mxu0 %v1438
        %1878 = vmatpush.msra.mxu0 %v1435
        %1879 = vmatpush.msra.mxu0 %v1432
        %1880 = vmatpush.msra.mxu0 %v1429
        %1881 = vmatpush.msra.mxu0 %v1426
        %1882 = vmatpush.msra.mxu0 %v1423
        %1883 = vmatpush.msra.mxu0 %v1420
        %1884 = vmatpush.msra.mxu0 %v1417
        %1885 = vmatpush.msra.mxu0 %v1414
        %1886 = vmatpush.msra.mxu0 %v1411
        %1887 = vmatpush.msra.mxu0 %v1408
        %1888 = vmatpush.msra.mxu0 %v1405
        %1889 = vmatpush.msra.mxu0 %v1402
        %1890 = vmatpush.msra.mxu0 %v1399
        %1891 = vmatpush.msra.mxu0 %v1396
        %1892 = vmatmul.f32.gmra.mxu0 %v1634
        %v1893 = vpop.f32.mrf.mxu0
        %v1894 = vadd.f32 0.0, %v1893
        %1895 = vmatmul.f32.gmra.mxu0 %v1649
        %v1896 = vpop.f32.mrf.mxu0
        %v1897 = vadd.f32 0.0, %v1896
        %1898 = vmatmul.f32.gmra.mxu0 %v1664
        %v1899 = vpop.f32.mrf.mxu0
        %v1900 = vadd.f32 0.0, %v1899
        %1901 = vmatmul.f32.gmra.mxu0 %v1679
        %v1902 = vpop.f32.mrf.mxu0
        %v1903 = vadd.f32 0.0, %v1902
        %1904 = vmatmul.f32.gmra.mxu0 %v1694
        %v1905 = vpop.f32.mrf.mxu0
        %v1906 = vadd.f32 0.0, %v1905
        %1907 = vmatmul.f32.gmra.mxu0 %v1709
        %v1908 = vpop.f32.mrf.mxu0
        %v1909 = vadd.f32 0.0, %v1908
        %1910 = vmatmul.f32.gmra.mxu0 %v1724
        %v1911 = vpop.f32.mrf.mxu0
        %v1912 = vadd.f32 0.0, %v1911
        %1913 = vmatmul.f32.gmra.mxu0 %v1739
        %v1914 = vpop.f32.mrf.mxu0
        %v1915 = vadd.f32 0.0, %v1914
        %1916 = vmatmul.f32.gmra.mxu0 %v1754
        %v1917 = vpop.f32.mrf.mxu0
        %v1918 = vadd.f32 0.0, %v1917
        %1919 = vmatmul.f32.gmra.mxu0 %v1769
        %v1920 = vpop.f32.mrf.mxu0
        %v1921 = vadd.f32 0.0, %v1920
        %1922 = vmatmul.f32.gmra.mxu0 %v1784
        %v1923 = vpop.f32.mrf.mxu0
        %v1924 = vadd.f32 0.0, %v1923
        %1925 = vmatmul.f32.gmra.mxu0 %v1799
        %v1926 = vpop.f32.mrf.mxu0
        %v1927 = vadd.f32 0.0, %v1926
        %1928 = vmatmul.f32.gmra.mxu0 %v1814
        %v1929 = vpop.f32.mrf.mxu0
        %v1930 = vadd.f32 0.0, %v1929
        %1931 = vmatmul.f32.gmra.mxu0 %v1829
        %v1932 = vpop.f32.mrf.mxu0
        %v1933 = vadd.f32 0.0, %v1932
        %1934 = vmatmul.f32.gmra.mxu0 %v1844
        %v1935 = vpop.f32.mrf.mxu0
        %v1936 = vadd.f32 0.0, %v1935
        %1937 = vmatmul.f32.gmra.mxu0 %v1859
        %v1938 = vpop.f32.mrf.mxu0
        %v1939 = vadd.f32 0.0, %v1938
        %1940 = vdwg.mxu0
        %v1941 = vld [vmem:[#allocation2] sm:$0xff]
        %v1942 = vld [vmem:[#allocation2 + $0x8] sm:$0xff]
        %v1943 = vld [vmem:[#allocation2 + $0x10] sm:$0xff]
        %v1944 = vld [vmem:[#allocation2 + $0x18] sm:$0xff]
        %v1945 = vld [vmem:[#allocation2 + $0x20] sm:$0xff]
        %v1946 = vld [vmem:[#allocation2 + $0x28] sm:$0xff]
        %v1947 = vld [vmem:[#allocation2 + $0x30] sm:$0xff]
        %v1948 = vld [vmem:[#allocation2 + $0x38] sm:$0xff]
        %v1949 = vld [vmem:[#allocation2 + $0x40] sm:$0xff]
        %v1950 = vld [vmem:[#allocation2 + $0x48] sm:$0xff]
        %v1951 = vld [vmem:[#allocation2 + $0x50] sm:$0xff]
        %v1952 = vld [vmem:[#allocation2 + $0x58] sm:$0xff]
        %v1953 = vld [vmem:[#allocation2 + $0x60] sm:$0xff]
        %v1954 = vld [vmem:[#allocation2 + $0x68] sm:$0xff]
        %v1955 = vld [vmem:[#allocation2 + $0x70] sm:$0xff]
        %v1956 = vld [vmem:[#allocation2 + $0x78] sm:$0xff]
        %v1957 = vld [vmem:[#allocation2 + $0x80] sm:$0xff]
        %v1958 = vld [vmem:[#allocation2 + $0x88] sm:$0xff]
        %v1959 = vld [vmem:[#allocation2 + $0x90] sm:$0xff]
        %v1960 = vld [vmem:[#allocation2 + $0x98] sm:$0xff]
        %v1961 = vld [vmem:[#allocation2 + $0xa0] sm:$0xff]
        %v1962 = vld [vmem:[#allocation2 + $0xa8] sm:$0xff]
        %v1963 = vld [vmem:[#allocation2 + $0xb0] sm:$0xff]
        %v1964 = vld [vmem:[#allocation2 + $0xb8] sm:$0xff]
        %v1965 = vld [vmem:[#allocation2 + $0xc0] sm:$0xff]
        %v1966 = vld [vmem:[#allocation2 + $0xc8] sm:$0xff]
        %v1967 = vld [vmem:[#allocation2 + $0xd0] sm:$0xff]
        %v1968 = vld [vmem:[#allocation2 + $0xd8] sm:$0xff]
        %v1969 = vld [vmem:[#allocation2 + $0xe0] sm:$0xff]
        %v1970 = vld [vmem:[#allocation2 + $0xe8] sm:$0xff]
        %v1971 = vld [vmem:[#allocation2 + $0xf0] sm:$0xff]
        %v1972 = vld [vmem:[#allocation2 + $0xf8] sm:$0xff]
        %v1973 = vld [vmem:[%s709] sm:$0xff]
        %v1974 = vld [vmem:[%s709 + $0x8] sm:$0xff]
        %v1975 = vld [vmem:[%s709 + $0x10] sm:$0xff]
        %v1976 = vld [vmem:[%s709 + $0x18] sm:$0xff]
        %v1977 = vld [vmem:[%s709 + $0x20] sm:$0xff]
        %v1978 = vld [vmem:[%s709 + $0x28] sm:$0xff]
        %v1979 = vld [vmem:[%s709 + $0x30] sm:$0xff]
        %v1980 = vld [vmem:[%s709 + $0x38] sm:$0xff]
        %v1981 = vld [vmem:[%s709 + $0x40] sm:$0xff]
        %v1982 = vld [vmem:[%s709 + $0x48] sm:$0xff]
        %v1983 = vld [vmem:[%s709 + $0x50] sm:$0xff]
        %v1984 = vld [vmem:[%s709 + $0x58] sm:$0xff]
        %v1985 = vld [vmem:[%s709 + $0x60] sm:$0xff]
        %v1986 = vld [vmem:[%s709 + $0x68] sm:$0xff]
        %v1987 = vld [vmem:[%s709 + $0x70] sm:$0xff]
        %v1988 = vld [vmem:[%s709 + $0x78] sm:$0xff]
        %v1989 = vld [vmem:[%s709 + $0x80] sm:$0xff]
        %v1990 = vld [vmem:[%s709 + $0x88] sm:$0xff]
        %v1991 = vld [vmem:[%s709 + $0x90] sm:$0xff]
        %v1992 = vld [vmem:[%s709 + $0x98] sm:$0xff]
        %v1993 = vld [vmem:[%s709 + $0xa0] sm:$0xff]
        %v1994 = vld [vmem:[%s709 + $0xa8] sm:$0xff]
        %v1995 = vld [vmem:[%s709 + $0xb0] sm:$0xff]
        %v1996 = vld [vmem:[%s709 + $0xb8] sm:$0xff]
        %v1997 = vld [vmem:[%s709 + $0xc0] sm:$0xff]
        %v1998 = vld [vmem:[%s709 + $0xc8] sm:$0xff]
        %v1999 = vld [vmem:[%s709 + $0xd0] sm:$0xff]
        %v2000 = vld [vmem:[%s709 + $0xd8] sm:$0xff]
        %v2001 = vld [vmem:[%s709 + $0xe0] sm:$0xff]
        %v2002 = vld [vmem:[%s709 + $0xe8] sm:$0xff]
        %v2003 = vld [vmem:[%s709 + $0xf0] sm:$0xff]
        %v2004 = vld [vmem:[%s709 + $0xf8] sm:$0xff]
        %2005 = vmatpush.msra.mxu0 %v2003
        %2006 = vmatpush.msra.mxu0 %v2001
        %2007 = vmatpush.msra.mxu0 %v1999
        %2008 = vmatpush.msra.mxu0 %v1997
        %2009 = vmatpush.msra.mxu0 %v1995
        %2010 = vmatpush.msra.mxu0 %v1993
        %2011 = vmatpush.msra.mxu0 %v1991
        %2012 = vmatpush.msra.mxu0 %v1989
        %2013 = vmatpush.msra.mxu0 %v1987
        %2014 = vmatpush.msra.mxu0 %v1985
        %2015 = vmatpush.msra.mxu0 %v1983
        %2016 = vmatpush.msra.mxu0 %v1981
        %2017 = vmatpush.msra.mxu0 %v1979
        %2018 = vmatpush.msra.mxu0 %v1977
        %2019 = vmatpush.msra.mxu0 %v1975
        %2020 = vmatpush.msra.mxu0 %v1973
        %2021 = vmatmul.f32.gmra.mxu0 %v1894
        %v2022 = vpop.f32.mrf.mxu0
        %v2023 = vadd.f32 0.0, %v2022
        %2024 = vmatmul.f32.gmra.mxu0 %v1897
        %v2025 = vpop.f32.mrf.mxu0
        %v2026 = vadd.f32 0.0, %v2025
        %2027 = vmatmul.f32.gmra.mxu0 %v1900
        %v2028 = vpop.f32.mrf.mxu0
        %v2029 = vadd.f32 0.0, %v2028
        %2030 = vmatmul.f32.gmra.mxu0 %v1903
        %v2031 = vpop.f32.mrf.mxu0
        %v2032 = vadd.f32 0.0, %v2031
        %2033 = vmatmul.f32.gmra.mxu0 %v1906
        %v2034 = vpop.f32.mrf.mxu0
        %v2035 = vadd.f32 0.0, %v2034
        %2036 = vmatmul.f32.gmra.mxu0 %v1909
        %v2037 = vpop.f32.mrf.mxu0
        %v2038 = vadd.f32 0.0, %v2037
        %2039 = vmatmul.f32.gmra.mxu0 %v1912
        %v2040 = vpop.f32.mrf.mxu0
        %v2041 = vadd.f32 0.0, %v2040
        %2042 = vmatmul.f32.gmra.mxu0 %v1915
        %v2043 = vpop.f32.mrf.mxu0
        %v2044 = vadd.f32 0.0, %v2043
        %2045 = vmatmul.f32.gmra.mxu0 %v1918
        %v2046 = vpop.f32.mrf.mxu0
        %v2047 = vadd.f32 0.0, %v2046
        %2048 = vmatmul.f32.gmra.mxu0 %v1921
        %v2049 = vpop.f32.mrf.mxu0
        %v2050 = vadd.f32 0.0, %v2049
        %2051 = vmatmul.f32.gmra.mxu0 %v1924
        %v2052 = vpop.f32.mrf.mxu0
        %v2053 = vadd.f32 0.0, %v2052
        %2054 = vmatmul.f32.gmra.mxu0 %v1927
        %v2055 = vpop.f32.mrf.mxu0
        %v2056 = vadd.f32 0.0, %v2055
        %2057 = vmatmul.f32.gmra.mxu0 %v1930
        %v2058 = vpop.f32.mrf.mxu0
        %v2059 = vadd.f32 0.0, %v2058
        %2060 = vmatmul.f32.gmra.mxu0 %v1933
        %v2061 = vpop.f32.mrf.mxu0
        %v2062 = vadd.f32 0.0, %v2061
        %2063 = vmatmul.f32.gmra.mxu0 %v1936
        %v2064 = vpop.f32.mrf.mxu0
        %v2065 = vadd.f32 0.0, %v2064
        %2066 = vmatmul.f32.gmra.mxu0 %v1939
        %v2067 = vpop.f32.mrf.mxu0
        %v2068 = vadd.f32 0.0, %v2067
        %2069 = vdwg.mxu0
        %2070 = vmatpush.msra.mxu0 %v2004
        %2071 = vmatpush.msra.mxu0 %v2002
        %2072 = vmatpush.msra.mxu0 %v2000
        %2073 = vmatpush.msra.mxu0 %v1998
        %2074 = vmatpush.msra.mxu0 %v1996
        %2075 = vmatpush.msra.mxu0 %v1994
        %2076 = vmatpush.msra.mxu0 %v1992
        %2077 = vmatpush.msra.mxu0 %v1990
        %2078 = vmatpush.msra.mxu0 %v1988
        %2079 = vmatpush.msra.mxu0 %v1986
        %2080 = vmatpush.msra.mxu0 %v1984
        %2081 = vmatpush.msra.mxu0 %v1982
        %2082 = vmatpush.msra.mxu0 %v1980
        %2083 = vmatpush.msra.mxu0 %v1978
        %2084 = vmatpush.msra.mxu0 %v1976
        %2085 = vmatpush.msra.mxu0 %v1974
        %2086 = vmatmul.f32.gmra.mxu0 %v1894
        %v2087 = vpop.f32.mrf.mxu0
        %v2088 = vadd.f32 0.0, %v2087
        %2089 = vmatmul.f32.gmra.mxu0 %v1897
        %v2090 = vpop.f32.mrf.mxu0
        %v2091 = vadd.f32 0.0, %v2090
        %2092 = vmatmul.f32.gmra.mxu0 %v1900
        %v2093 = vpop.f32.mrf.mxu0
        %v2094 = vadd.f32 0.0, %v2093
        %2095 = vmatmul.f32.gmra.mxu0 %v1903
        %v2096 = vpop.f32.mrf.mxu0
        %v2097 = vadd.f32 0.0, %v2096
        %2098 = vmatmul.f32.gmra.mxu0 %v1906
        %v2099 = vpop.f32.mrf.mxu0
        %v2100 = vadd.f32 0.0, %v2099
        %2101 = vmatmul.f32.gmra.mxu0 %v1909
        %v2102 = vpop.f32.mrf.mxu0
        %v2103 = vadd.f32 0.0, %v2102
        %2104 = vmatmul.f32.gmra.mxu0 %v1912
        %v2105 = vpop.f32.mrf.mxu0
        %v2106 = vadd.f32 0.0, %v2105
        %2107 = vmatmul.f32.gmra.mxu0 %v1915
        %v2108 = vpop.f32.mrf.mxu0
        %v2109 = vadd.f32 0.0, %v2108
        %2110 = vmatmul.f32.gmra.mxu0 %v1918
        %v2111 = vpop.f32.mrf.mxu0
        %v2112 = vadd.f32 0.0, %v2111
        %2113 = vmatmul.f32.gmra.mxu0 %v1921
        %v2114 = vpop.f32.mrf.mxu0
        %v2115 = vadd.f32 0.0, %v2114
        %2116 = vmatmul.f32.gmra.mxu0 %v1924
        %v2117 = vpop.f32.mrf.mxu0
        %v2118 = vadd.f32 0.0, %v2117
        %2119 = vmatmul.f32.gmra.mxu0 %v1927
        %v2120 = vpop.f32.mrf.mxu0
        %v2121 = vadd.f32 0.0, %v2120
        %2122 = vmatmul.f32.gmra.mxu0 %v1930
        %v2123 = vpop.f32.mrf.mxu0
        %v2124 = vadd.f32 0.0, %v2123
        %2125 = vmatmul.f32.gmra.mxu0 %v1933
        %v2126 = vpop.f32.mrf.mxu0
        %v2127 = vadd.f32 0.0, %v2126
        %2128 = vmatmul.f32.gmra.mxu0 %v1936
        %v2129 = vpop.f32.mrf.mxu0
        %v2130 = vadd.f32 0.0, %v2129
        %2131 = vmatmul.f32.gmra.mxu0 %v1939
        %v2132 = vpop.f32.mrf.mxu0
        %v2133 = vadd.f32 0.0, %v2132
        %2134 = vdwg.mxu0
        %v2135 = vadd.f32 %v1941, %v2023
        %v2136 = vadd.f32 %v1942, %v2088
        %v2137 = vadd.f32 %v1943, %v2026
        %v2138 = vadd.f32 %v1944, %v2091
        %v2139 = vadd.f32 %v1945, %v2029
        %v2140 = vadd.f32 %v1946, %v2094
        %v2141 = vadd.f32 %v1947, %v2032
        %v2142 = vadd.f32 %v1948, %v2097
        %v2143 = vadd.f32 %v1949, %v2035
        %v2144 = vadd.f32 %v1950, %v2100
        %v2145 = vadd.f32 %v1951, %v2038
        %v2146 = vadd.f32 %v1952, %v2103
        %v2147 = vadd.f32 %v1953, %v2041
        %v2148 = vadd.f32 %v1954, %v2106
        %v2149 = vadd.f32 %v1955, %v2044
        %v2150 = vadd.f32 %v1956, %v2109
        %v2151 = vadd.f32 %v1957, %v2047
        %v2152 = vadd.f32 %v1958, %v2112
        %v2153 = vadd.f32 %v1959, %v2050
        %v2154 = vadd.f32 %v1960, %v2115
        %v2155 = vadd.f32 %v1961, %v2053
        %v2156 = vadd.f32 %v1962, %v2118
        %v2157 = vadd.f32 %v1963, %v2056
        %v2158 = vadd.f32 %v1964, %v2121
        %v2159 = vadd.f32 %v1965, %v2059
        %v2160 = vadd.f32 %v1966, %v2124
        %v2161 = vadd.f32 %v1967, %v2062
        %v2162 = vadd.f32 %v1968, %v2127
        %v2163 = vadd.f32 %v1969, %v2065
        %v2164 = vadd.f32 %v1970, %v2130
        %v2165 = vadd.f32 %v1971, %v2068
        %v2166 = vadd.f32 %v1972, %v2133
        %2167 = vst [vmem:[#allocation2] sm:$0xff] %v2135
        %2168 = vst [vmem:[#allocation2 + $0x8] sm:$0xff] %v2136
        %2169 = vst [vmem:[#allocation2 + $0x10] sm:$0xff] %v2137
        %2170 = vst [vmem:[#allocation2 + $0x18] sm:$0xff] %v2138
        %2171 = vst [vmem:[#allocation2 + $0x20] sm:$0xff] %v2139
        %2172 = vst [vmem:[#allocation2 + $0x28] sm:$0xff] %v2140
        %2173 = vst [vmem:[#allocation2 + $0x30] sm:$0xff] %v2141
        %2174 = vst [vmem:[#allocation2 + $0x38] sm:$0xff] %v2142
        %2175 = vst [vmem:[#allocation2 + $0x40] sm:$0xff] %v2143
        %2176 = vst [vmem:[#allocation2 + $0x48] sm:$0xff] %v2144
        %2177 = vst [vmem:[#allocation2 + $0x50] sm:$0xff] %v2145
        %2178 = vst [vmem:[#allocation2 + $0x58] sm:$0xff] %v2146
        %2179 = vst [vmem:[#allocation2 + $0x60] sm:$0xff] %v2147
        %2180 = vst [vmem:[#allocation2 + $0x68] sm:$0xff] %v2148
        %2181 = vst [vmem:[#allocation2 + $0x70] sm:$0xff] %v2149
        %2182 = vst [vmem:[#allocation2 + $0x78] sm:$0xff] %v2150
        %2183 = vst [vmem:[#allocation2 + $0x80] sm:$0xff] %v2151
        %2184 = vst [vmem:[#allocation2 + $0x88] sm:$0xff] %v2152
        %2185 = vst [vmem:[#allocation2 + $0x90] sm:$0xff] %v2153
        %2186 = vst [vmem:[#allocation2 + $0x98] sm:$0xff] %v2154
        %2187 = vst [vmem:[#allocation2 + $0xa0] sm:$0xff] %v2155
        %2188 = vst [vmem:[#allocation2 + $0xa8] sm:$0xff] %v2156
        %2189 = vst [vmem:[#allocation2 + $0xb0] sm:$0xff] %v2157
        %2190 = vst [vmem:[#allocation2 + $0xb8] sm:$0xff] %v2158
        %2191 = vst [vmem:[#allocation2 + $0xc0] sm:$0xff] %v2159
        %2192 = vst [vmem:[#allocation2 + $0xc8] sm:$0xff] %v2160
        %2193 = vst [vmem:[#allocation2 + $0xd0] sm:$0xff] %v2161
        %2194 = vst [vmem:[#allocation2 + $0xd8] sm:$0xff] %v2162
        %2195 = vst [vmem:[#allocation2 + $0xe0] sm:$0xff] %v2163
        %2196 = vst [vmem:[#allocation2 + $0xe8] sm:$0xff] %v2164
        %2197 = vst [vmem:[#allocation2 + $0xf0] sm:$0xff] %v2165
        %2198 = vst [vmem:[#allocation2 + $0xf8] sm:$0xff] %v2166
        %p2199 = scmp.eq.s32.totalorder %s50, 1
        // Predicated region
        $region109: #{tpu_custom_call.1} parent=71 // pred_check
          %p2200 = pneg %p2199
        $region110: #{tpu_custom_call.1} parent=71 // pred_check_branch
          %2202 = sbr.rel (%p2200) target = $region112
        $region111: #{tpu_custom_call.1} parent=71 // pred_region
          %v2203 = vld [vmem:[%s649] sm:$0xff]
          %v2204 = vld [vmem:[%s649 + $0x8] sm:$0xff]
          %v2205 = vld [vmem:[%s649 + $0x10] sm:$0xff]
          %v2206 = vld [vmem:[%s649 + $0x18] sm:$0xff]
          %v2207 = vld [vmem:[%s649 + $0x20] sm:$0xff]
          %v2208 = vld [vmem:[%s649 + $0x28] sm:$0xff]
          %v2209 = vld [vmem:[%s649 + $0x30] sm:$0xff]
          %v2210 = vld [vmem:[%s649 + $0x38] sm:$0xff]
          %v2211 = vld [vmem:[%s649 + $0x40] sm:$0xff]
          %v2212 = vld [vmem:[%s649 + $0x48] sm:$0xff]
          %v2213 = vld [vmem:[%s649 + $0x50] sm:$0xff]
          %v2214 = vld [vmem:[%s649 + $0x58] sm:$0xff]
          %v2215 = vld [vmem:[%s649 + $0x60] sm:$0xff]
          %v2216 = vld [vmem:[%s649 + $0x68] sm:$0xff]
          %v2217 = vld [vmem:[%s649 + $0x70] sm:$0xff]
          %v2218 = vld [vmem:[%s649 + $0x78] sm:$0xff]
          %v2219 = vld [vmem:[%s649 + $0x80] sm:$0xff]
          %v2220 = vld [vmem:[%s649 + $0x88] sm:$0xff]
          %v2221 = vld [vmem:[%s649 + $0x90] sm:$0xff]
          %v2222 = vld [vmem:[%s649 + $0x98] sm:$0xff]
          %v2223 = vld [vmem:[%s649 + $0xa0] sm:$0xff]
          %v2224 = vld [vmem:[%s649 + $0xa8] sm:$0xff]
          %v2225 = vld [vmem:[%s649 + $0xb0] sm:$0xff]
          %v2226 = vld [vmem:[%s649 + $0xb8] sm:$0xff]
          %v2227 = vld [vmem:[%s649 + $0xc0] sm:$0xff]
          %v2228 = vld [vmem:[%s649 + $0xc8] sm:$0xff]
          %v2229 = vld [vmem:[%s649 + $0xd0] sm:$0xff]
          %v2230 = vld [vmem:[%s649 + $0xd8] sm:$0xff]
          %v2231 = vld [vmem:[%s649 + $0xe0] sm:$0xff]
          %v2232 = vld [vmem:[%s649 + $0xe8] sm:$0xff]
          %v2233 = vld [vmem:[%s649 + $0xf0] sm:$0xff]
          %v2234 = vld [vmem:[%s649 + $0xf8] sm:$0xff]
          %v2235 = vld [vmem:[#allocation2] sm:$0xff]
          %v2236 = vld [vmem:[#allocation2 + $0x8] sm:$0xff]
          %v2237 = vld [vmem:[#allocation2 + $0x10] sm:$0xff]
          %v2238 = vld [vmem:[#allocation2 + $0x18] sm:$0xff]
          %v2239 = vld [vmem:[#allocation2 + $0x20] sm:$0xff]
          %v2240 = vld [vmem:[#allocation2 + $0x28] sm:$0xff]
          %v2241 = vld [vmem:[#allocation2 + $0x30] sm:$0xff]
          %v2242 = vld [vmem:[#allocation2 + $0x38] sm:$0xff]
          %v2243 = vld [vmem:[#allocation2 + $0x40] sm:$0xff]
          %v2244 = vld [vmem:[#allocation2 + $0x48] sm:$0xff]
          %v2245 = vld [vmem:[#allocation2 + $0x50] sm:$0xff]
          %v2246 = vld [vmem:[#allocation2 + $0x58] sm:$0xff]
          %v2247 = vld [vmem:[#allocation2 + $0x60] sm:$0xff]
          %v2248 = vld [vmem:[#allocation2 + $0x68] sm:$0xff]
          %v2249 = vld [vmem:[#allocation2 + $0x70] sm:$0xff]
          %v2250 = vld [vmem:[#allocation2 + $0x78] sm:$0xff]
          %v2251 = vld [vmem:[#allocation2 + $0x80] sm:$0xff]
          %v2252 = vld [vmem:[#allocation2 + $0x88] sm:$0xff]
          %v2253 = vld [vmem:[#allocation2 + $0x90] sm:$0xff]
          %v2254 = vld [vmem:[#allocation2 + $0x98] sm:$0xff]
          %v2255 = vld [vmem:[#allocation2 + $0xa0] sm:$0xff]
          %v2256 = vld [vmem:[#allocation2 + $0xa8] sm:$0xff]
          %v2257 = vld [vmem:[#allocation2 + $0xb0] sm:$0xff]
          %v2258 = vld [vmem:[#allocation2 + $0xb8] sm:$0xff]
          %v2259 = vld [vmem:[#allocation2 + $0xc0] sm:$0xff]
          %v2260 = vld [vmem:[#allocation2 + $0xc8] sm:$0xff]
          %v2261 = vld [vmem:[#allocation2 + $0xd0] sm:$0xff]
          %v2262 = vld [vmem:[#allocation2 + $0xd8] sm:$0xff]
          %v2263 = vld [vmem:[#allocation2 + $0xe0] sm:$0xff]
          %v2264 = vld [vmem:[#allocation2 + $0xe8] sm:$0xff]
          %v2265 = vld [vmem:[#allocation2 + $0xf0] sm:$0xff]
          %v2266 = vld [vmem:[#allocation2 + $0xf8] sm:$0xff]
          %v2267 = vadd.f32 %v2203, %v2235
          %v2268 = vadd.f32 %v2204, %v2236
          %v2269 = vadd.f32 %v2205, %v2237
          %v2270 = vadd.f32 %v2206, %v2238
          %v2271 = vadd.f32 %v2207, %v2239
          %v2272 = vadd.f32 %v2208, %v2240
          %v2273 = vadd.f32 %v2209, %v2241
          %v2274 = vadd.f32 %v2210, %v2242
          %v2275 = vadd.f32 %v2211, %v2243
          %v2276 = vadd.f32 %v2212, %v2244
          %v2277 = vadd.f32 %v2213, %v2245
          %v2278 = vadd.f32 %v2214, %v2246
          %v2279 = vadd.f32 %v2215, %v2247
          %v2280 = vadd.f32 %v2216, %v2248
          %v2281 = vadd.f32 %v2217, %v2249
          %v2282 = vadd.f32 %v2218, %v2250
          %v2283 = vadd.f32 %v2219, %v2251
          %v2284 = vadd.f32 %v2220, %v2252
          %v2285 = vadd.f32 %v2221, %v2253
          %v2286 = vadd.f32 %v2222, %v2254
          %v2287 = vadd.f32 %v2223, %v2255
          %v2288 = vadd.f32 %v2224, %v2256
          %v2289 = vadd.f32 %v2225, %v2257
          %v2290 = vadd.f32 %v2226, %v2258
          %v2291 = vadd.f32 %v2227, %v2259
          %v2292 = vadd.f32 %v2228, %v2260
          %v2293 = vadd.f32 %v2229, %v2261
          %v2294 = vadd.f32 %v2230, %v2262
          %v2295 = vadd.f32 %v2231, %v2263
          %v2296 = vadd.f32 %v2232, %v2264
          %v2297 = vadd.f32 %v2233, %v2265
          %v2298 = vadd.f32 %v2234, %v2266
          %v2299 = vld [vmem:[%s10] sm:$0x3]
          %v2301 = vperm.slane %v2299, 0
          %v2302 = vperm.slane %v2299, 1
          %v2305 = vadd.f32 %v2267, %v2301
          %v2306 = vadd.f32 %v2268, %v2302
          %v2307 = vadd.f32 %v2269, %v2301
          %v2308 = vadd.f32 %v2270, %v2302
          %v2309 = vadd.f32 %v2271, %v2301
          %v2310 = vadd.f32 %v2272, %v2302
          %v2311 = vadd.f32 %v2273, %v2301
          %v2312 = vadd.f32 %v2274, %v2302
          %v2313 = vadd.f32 %v2275, %v2301
          %v2314 = vadd.f32 %v2276, %v2302
          %v2315 = vadd.f32 %v2277, %v2301
          %v2316 = vadd.f32 %v2278, %v2302
          %v2317 = vadd.f32 %v2279, %v2301
          %v2318 = vadd.f32 %v2280, %v2302
          %v2319 = vadd.f32 %v2281, %v2301
          %v2320 = vadd.f32 %v2282, %v2302
          %v2321 = vadd.f32 %v2283, %v2301
          %v2322 = vadd.f32 %v2284, %v2302
          %v2323 = vadd.f32 %v2285, %v2301
          %v2324 = vadd.f32 %v2286, %v2302
          %v2325 = vadd.f32 %v2287, %v2301
          %v2326 = vadd.f32 %v2288, %v2302
          %v2327 = vadd.f32 %v2289, %v2301
          %v2328 = vadd.f32 %v2290, %v2302
          %v2329 = vadd.f32 %v2291, %v2301
          %v2330 = vadd.f32 %v2292, %v2302
          %v2331 = vadd.f32 %v2293, %v2301
          %v2332 = vadd.f32 %v2294, %v2302
          %v2333 = vadd.f32 %v2295, %v2301
          %v2334 = vadd.f32 %v2296, %v2302
          %v2335 = vadd.f32 %v2297, %v2301
          %v2336 = vadd.f32 %v2298, %v2302
          %v2337 = vadd.f32 %v2305, %v2306
          %2338 = vadd.xlane.f32.xlu0 %v2337
          %v2339 = vpop.xlane.xlu0 %2338
          %v2340 = vadd.f32 %v2307, %v2308
          %2341 = vadd.xlane.f32.xlu0 %v2340
          %v2342 = vpop.xlane.xlu0 %2341
          %v2343 = vadd.f32 %v2309, %v2310
          %2344 = vadd.xlane.f32.xlu0 %v2343
          %v2345 = vpop.xlane.xlu0 %2344
          %v2346 = vadd.f32 %v2311, %v2312
          %2347 = vadd.xlane.f32.xlu0 %v2346
          %v2348 = vpop.xlane.xlu0 %2347
          %v2349 = vadd.f32 %v2313, %v2314
          %2350 = vadd.xlane.f32.xlu0 %v2349
          %v2351 = vpop.xlane.xlu0 %2350
          %v2352 = vadd.f32 %v2315, %v2316
          %2353 = vadd.xlane.f32.xlu0 %v2352
          %v2354 = vpop.xlane.xlu0 %2353
          %v2355 = vadd.f32 %v2317, %v2318
          %2356 = vadd.xlane.f32.xlu0 %v2355
          %v2357 = vpop.xlane.xlu0 %2356
          %v2358 = vadd.f32 %v2319, %v2320
          %2359 = vadd.xlane.f32.xlu0 %v2358
          %v2360 = vpop.xlane.xlu0 %2359
          %v2361 = vadd.f32 %v2321, %v2322
          %2362 = vadd.xlane.f32.xlu0 %v2361
          %v2363 = vpop.xlane.xlu0 %2362
          %v2364 = vadd.f32 %v2323, %v2324
          %2365 = vadd.xlane.f32.xlu0 %v2364
          %v2366 = vpop.xlane.xlu0 %2365
          %v2367 = vadd.f32 %v2325, %v2326
          %2368 = vadd.xlane.f32.xlu0 %v2367
          %v2369 = vpop.xlane.xlu0 %2368
          %v2370 = vadd.f32 %v2327, %v2328
          %2371 = vadd.xlane.f32.xlu0 %v2370
          %v2372 = vpop.xlane.xlu0 %2371
          %v2373 = vadd.f32 %v2329, %v2330
          %2374 = vadd.xlane.f32.xlu0 %v2373
          %v2375 = vpop.xlane.xlu0 %2374
          %v2376 = vadd.f32 %v2331, %v2332
          %2377 = vadd.xlane.f32.xlu0 %v2376
          %v2378 = vpop.xlane.xlu0 %2377
          %v2379 = vadd.f32 %v2333, %v2334
          %2380 = vadd.xlane.f32.xlu0 %v2379
          %v2381 = vpop.xlane.xlu0 %2380
          %v2382 = vadd.f32 %v2335, %v2336
          %2383 = vadd.xlane.f32.xlu0 %v2382
          %v2384 = vpop.xlane.xlu0 %2383
          %v2385 = vrcp.pop 256.0
          %v2386 = vmul.f32 256.0, %v2385
          %v2387 = vsub.f32 1.0, %v2386
          %v2388 = vmul.f32 %v2385, %v2387
          %v2389 = vadd.f32 %v2385, %v2388
          %vm2390 = vweird.f32 %v2385
          %v2391 = vsel %vm2390, %v2385, %v2389
          %v2392 = vmul.f32 %v2339, %v2391
          %v2393 = vmul.f32 %v2342, %v2391
          %v2394 = vmul.f32 %v2345, %v2391
          %v2395 = vmul.f32 %v2348, %v2391
          %v2396 = vmul.f32 %v2351, %v2391
          %v2397 = vmul.f32 %v2354, %v2391
          %v2398 = vmul.f32 %v2357, %v2391
          %v2399 = vmul.f32 %v2360, %v2391
          %v2400 = vmul.f32 %v2363, %v2391
          %v2401 = vmul.f32 %v2366, %v2391
          %v2402 = vmul.f32 %v2369, %v2391
          %v2403 = vmul.f32 %v2372, %v2391
          %v2404 = vmul.f32 %v2375, %v2391
          %v2405 = vmul.f32 %v2378, %v2391
          %v2406 = vmul.f32 %v2381, %v2391
          %v2407 = vmul.f32 %v2384, %v2391
          %v2408 = vsub.f32 %v2305, %v2392
          %v2409 = vsub.f32 %v2306, %v2392
          %v2410 = vsub.f32 %v2307, %v2393
          %v2411 = vsub.f32 %v2308, %v2393
          %v2412 = vsub.f32 %v2309, %v2394
          %v2413 = vsub.f32 %v2310, %v2394
          %v2414 = vsub.f32 %v2311, %v2395
          %v2415 = vsub.f32 %v2312, %v2395
          %v2416 = vsub.f32 %v2313, %v2396
          %v2417 = vsub.f32 %v2314, %v2396
          %v2418 = vsub.f32 %v2315, %v2397
          %v2419 = vsub.f32 %v2316, %v2397
          %v2420 = vsub.f32 %v2317, %v2398
          %v2421 = vsub.f32 %v2318, %v2398
          %v2422 = vsub.f32 %v2319, %v2399
          %v2423 = vsub.f32 %v2320, %v2399
          %v2424 = vsub.f32 %v2321, %v2400
          %v2425 = vsub.f32 %v2322, %v2400
          %v2426 = vsub.f32 %v2323, %v2401
          %v2427 = vsub.f32 %v2324, %v2401
          %v2428 = vsub.f32 %v2325, %v2402
          %v2429 = vsub.f32 %v2326, %v2402
          %v2430 = vsub.f32 %v2327, %v2403
          %v2431 = vsub.f32 %v2328, %v2403
          %v2432 = vsub.f32 %v2329, %v2404
          %v2433 = vsub.f32 %v2330, %v2404
          %v2434 = vsub.f32 %v2331, %v2405
          %v2435 = vsub.f32 %v2332, %v2405
          %v2436 = vsub.f32 %v2333, %v2406
          %v2437 = vsub.f32 %v2334, %v2406
          %v2438 = vsub.f32 %v2335, %v2407
          %v2439 = vsub.f32 %v2336, %v2407
          %v2440 = vmul.f32 %v2408, %v2408
          %v2441 = vmul.f32 %v2409, %v2409
          %v2442 = vmul.f32 %v2410, %v2410
          %v2443 = vmul.f32 %v2411, %v2411
          %v2444 = vmul.f32 %v2412, %v2412
          %v2445 = vmul.f32 %v2413, %v2413
          %v2446 = vmul.f32 %v2414, %v2414
          %v2447 = vmul.f32 %v2415, %v2415
          %v2448 = vmul.f32 %v2416, %v2416
          %v2449 = vmul.f32 %v2417, %v2417
          %v2450 = vmul.f32 %v2418, %v2418
          %v2451 = vmul.f32 %v2419, %v2419
          %v2452 = vmul.f32 %v2420, %v2420
          %v2453 = vmul.f32 %v2421, %v2421
          %v2454 = vmul.f32 %v2422, %v2422
          %v2455 = vmul.f32 %v2423, %v2423
          %v2456 = vmul.f32 %v2424, %v2424
          %v2457 = vmul.f32 %v2425, %v2425
          %v2458 = vmul.f32 %v2426, %v2426
          %v2459 = vmul.f32 %v2427, %v2427
          %v2460 = vmul.f32 %v2428, %v2428
          %v2461 = vmul.f32 %v2429, %v2429
          %v2462 = vmul.f32 %v2430, %v2430
          %v2463 = vmul.f32 %v2431, %v2431
          %v2464 = vmul.f32 %v2432, %v2432
          %v2465 = vmul.f32 %v2433, %v2433
          %v2466 = vmul.f32 %v2434, %v2434
          %v2467 = vmul.f32 %v2435, %v2435
          %v2468 = vmul.f32 %v2436, %v2436
          %v2469 = vmul.f32 %v2437, %v2437
          %v2470 = vmul.f32 %v2438, %v2438
          %v2471 = vmul.f32 %v2439, %v2439
          %v2472 = vadd.f32 %v2440, %v2441
          %2473 = vadd.xlane.f32.xlu0 %v2472
          %v2474 = vpop.xlane.xlu0 %2473
          %v2475 = vadd.f32 %v2442, %v2443
          %2476 = vadd.xlane.f32.xlu0 %v2475
          %v2477 = vpop.xlane.xlu0 %2476
          %v2478 = vadd.f32 %v2444, %v2445
          %2479 = vadd.xlane.f32.xlu0 %v2478
          %v2480 = vpop.xlane.xlu0 %2479
          %v2481 = vadd.f32 %v2446, %v2447
          %2482 = vadd.xlane.f32.xlu0 %v2481
          %v2483 = vpop.xlane.xlu0 %2482
          %v2484 = vadd.f32 %v2448, %v2449
          %2485 = vadd.xlane.f32.xlu0 %v2484
          %v2486 = vpop.xlane.xlu0 %2485
          %v2487 = vadd.f32 %v2450, %v2451
          %2488 = vadd.xlane.f32.xlu0 %v2487
          %v2489 = vpop.xlane.xlu0 %2488
          %v2490 = vadd.f32 %v2452, %v2453
          %2491 = vadd.xlane.f32.xlu0 %v2490
          %v2492 = vpop.xlane.xlu0 %2491
          %v2493 = vadd.f32 %v2454, %v2455
          %2494 = vadd.xlane.f32.xlu0 %v2493
          %v2495 = vpop.xlane.xlu0 %2494
          %v2496 = vadd.f32 %v2456, %v2457
          %2497 = vadd.xlane.f32.xlu0 %v2496
          %v2498 = vpop.xlane.xlu0 %2497
          %v2499 = vadd.f32 %v2458, %v2459
          %2500 = vadd.xlane.f32.xlu0 %v2499
          %v2501 = vpop.xlane.xlu0 %2500
          %v2502 = vadd.f32 %v2460, %v2461
          %2503 = vadd.xlane.f32.xlu0 %v2502
          %v2504 = vpop.xlane.xlu0 %2503
          %v2505 = vadd.f32 %v2462, %v2463
          %2506 = vadd.xlane.f32.xlu0 %v2505
          %v2507 = vpop.xlane.xlu0 %2506
          %v2508 = vadd.f32 %v2464, %v2465
          %2509 = vadd.xlane.f32.xlu0 %v2508
          %v2510 = vpop.xlane.xlu0 %2509
          %v2511 = vadd.f32 %v2466, %v2467
          %2512 = vadd.xlane.f32.xlu0 %v2511
          %v2513 = vpop.xlane.xlu0 %2512
          %v2514 = vadd.f32 %v2468, %v2469
          %2515 = vadd.xlane.f32.xlu0 %v2514
          %v2516 = vpop.xlane.xlu0 %2515
          %v2517 = vadd.f32 %v2470, %v2471
          %2518 = vadd.xlane.f32.xlu0 %v2517
          %v2519 = vpop.xlane.xlu0 %2518
          %v2520 = vmul.f32 %v2474, %v2391
          %v2521 = vmul.f32 %v2477, %v2391
          %v2522 = vmul.f32 %v2480, %v2391
          %v2523 = vmul.f32 %v2483, %v2391
          %v2524 = vmul.f32 %v2486, %v2391
          %v2525 = vmul.f32 %v2489, %v2391
          %v2526 = vmul.f32 %v2492, %v2391
          %v2527 = vmul.f32 %v2495, %v2391
          %v2528 = vmul.f32 %v2498, %v2391
          %v2529 = vmul.f32 %v2501, %v2391
          %v2530 = vmul.f32 %v2504, %v2391
          %v2531 = vmul.f32 %v2507, %v2391
          %v2532 = vmul.f32 %v2510, %v2391
          %v2533 = vmul.f32 %v2513, %v2391
          %v2534 = vmul.f32 %v2516, %v2391
          %v2535 = vmul.f32 %v2519, %v2391
          %v2536 = vadd.f32 %v2520, 1e-05
          %v2537 = vadd.f32 %v2521, 1e-05
          %v2538 = vadd.f32 %v2522, 1e-05
          %v2539 = vadd.f32 %v2523, 1e-05
          %v2540 = vadd.f32 %v2524, 1e-05
          %v2541 = vadd.f32 %v2525, 1e-05
          %v2542 = vadd.f32 %v2526, 1e-05
          %v2543 = vadd.f32 %v2527, 1e-05
          %v2544 = vadd.f32 %v2528, 1e-05
          %v2545 = vadd.f32 %v2529, 1e-05
          %v2546 = vadd.f32 %v2530, 1e-05
          %v2547 = vadd.f32 %v2531, 1e-05
          %v2548 = vadd.f32 %v2532, 1e-05
          %v2549 = vadd.f32 %v2533, 1e-05
          %v2550 = vadd.f32 %v2534, 1e-05
          %v2551 = vadd.f32 %v2535, 1e-05
          %v2552 = vrsqrt.pop %v2536
          %v2553 = vmul.f32 %v2552, %v2536
          %v2554 = vmul.f32 %v2553, %v2552
          %v2555 = vmul.f32 0.5, %v2554
          %v2556 = vsub.f32 1.5, %v2555
          %v2557 = vmul.f32 %v2552, %v2556
          %vm2558 = vweird.f32 %v2536
          %vm2559 = vweird.f32 %v2552
          %vm2560 = vmor %vm2558, %vm2559
          %v2561 = vsel %vm2560, %v2552, %v2557
          %v2562 = vrsqrt.pop %v2537
          %v2563 = vmul.f32 %v2562, %v2537
          %v2564 = vmul.f32 %v2563, %v2562
          %v2565 = vmul.f32 0.5, %v2564
          %v2566 = vsub.f32 1.5, %v2565
          %v2567 = vmul.f32 %v2562, %v2566
          %vm2568 = vweird.f32 %v2537
          %vm2569 = vweird.f32 %v2562
          %vm2570 = vmor %vm2568, %vm2569
          %v2571 = vsel %vm2570, %v2562, %v2567
          %v2572 = vrsqrt.pop %v2538
          %v2573 = vmul.f32 %v2572, %v2538
          %v2574 = vmul.f32 %v2573, %v2572
          %v2575 = vmul.f32 0.5, %v2574
          %v2576 = vsub.f32 1.5, %v2575
          %v2577 = vmul.f32 %v2572, %v2576
          %vm2578 = vweird.f32 %v2538
          %vm2579 = vweird.f32 %v2572
          %vm2580 = vmor %vm2578, %vm2579
          %v2581 = vsel %vm2580, %v2572, %v2577
          %v2582 = vrsqrt.pop %v2539
          %v2583 = vmul.f32 %v2582, %v2539
          %v2584 = vmul.f32 %v2583, %v2582
          %v2585 = vmul.f32 0.5, %v2584
          %v2586 = vsub.f32 1.5, %v2585
          %v2587 = vmul.f32 %v2582, %v2586
          %vm2588 = vweird.f32 %v2539
          %vm2589 = vweird.f32 %v2582
          %vm2590 = vmor %vm2588, %vm2589
          %v2591 = vsel %vm2590, %v2582, %v2587
          %v2592 = vrsqrt.pop %v2540
          %v2593 = vmul.f32 %v2592, %v2540
          %v2594 = vmul.f32 %v2593, %v2592
          %v2595 = vmul.f32 0.5, %v2594
          %v2596 = vsub.f32 1.5, %v2595
          %v2597 = vmul.f32 %v2592, %v2596
          %vm2598 = vweird.f32 %v2540
          %vm2599 = vweird.f32 %v2592
          %vm2600 = vmor %vm2598, %vm2599
          %v2601 = vsel %vm2600, %v2592, %v2597
          %v2602 = vrsqrt.pop %v2541
          %v2603 = vmul.f32 %v2602, %v2541
          %v2604 = vmul.f32 %v2603, %v2602
          %v2605 = vmul.f32 0.5, %v2604
          %v2606 = vsub.f32 1.5, %v2605
          %v2607 = vmul.f32 %v2602, %v2606
          %vm2608 = vweird.f32 %v2541
          %vm2609 = vweird.f32 %v2602
          %vm2610 = vmor %vm2608, %vm2609
          %v2611 = vsel %vm2610, %v2602, %v2607
          %v2612 = vrsqrt.pop %v2542
          %v2613 = vmul.f32 %v2612, %v2542
          %v2614 = vmul.f32 %v2613, %v2612
          %v2615 = vmul.f32 0.5, %v2614
          %v2616 = vsub.f32 1.5, %v2615
          %v2617 = vmul.f32 %v2612, %v2616
          %vm2618 = vweird.f32 %v2542
          %vm2619 = vweird.f32 %v2612
          %vm2620 = vmor %vm2618, %vm2619
          %v2621 = vsel %vm2620, %v2612, %v2617
          %v2622 = vrsqrt.pop %v2543
          %v2623 = vmul.f32 %v2622, %v2543
          %v2624 = vmul.f32 %v2623, %v2622
          %v2625 = vmul.f32 0.5, %v2624
          %v2626 = vsub.f32 1.5, %v2625
          %v2627 = vmul.f32 %v2622, %v2626
          %vm2628 = vweird.f32 %v2543
          %vm2629 = vweird.f32 %v2622
          %vm2630 = vmor %vm2628, %vm2629
          %v2631 = vsel %vm2630, %v2622, %v2627
          %v2632 = vrsqrt.pop %v2544
          %v2633 = vmul.f32 %v2632, %v2544
          %v2634 = vmul.f32 %v2633, %v2632
          %v2635 = vmul.f32 0.5, %v2634
          %v2636 = vsub.f32 1.5, %v2635
          %v2637 = vmul.f32 %v2632, %v2636
          %vm2638 = vweird.f32 %v2544
          %vm2639 = vweird.f32 %v2632
          %vm2640 = vmor %vm2638, %vm2639
          %v2641 = vsel %vm2640, %v2632, %v2637
          %v2642 = vrsqrt.pop %v2545
          %v2643 = vmul.f32 %v2642, %v2545
          %v2644 = vmul.f32 %v2643, %v2642
          %v2645 = vmul.f32 0.5, %v2644
          %v2646 = vsub.f32 1.5, %v2645
          %v2647 = vmul.f32 %v2642, %v2646
          %vm2648 = vweird.f32 %v2545
          %vm2649 = vweird.f32 %v2642
          %vm2650 = vmor %vm2648, %vm2649
          %v2651 = vsel %vm2650, %v2642, %v2647
          %v2652 = vrsqrt.pop %v2546
          %v2653 = vmul.f32 %v2652, %v2546
          %v2654 = vmul.f32 %v2653, %v2652
          %v2655 = vmul.f32 0.5, %v2654
          %v2656 = vsub.f32 1.5, %v2655
          %v2657 = vmul.f32 %v2652, %v2656
          %vm2658 = vweird.f32 %v2546
          %vm2659 = vweird.f32 %v2652
          %vm2660 = vmor %vm2658, %vm2659
          %v2661 = vsel %vm2660, %v2652, %v2657
          %v2662 = vrsqrt.pop %v2547
          %v2663 = vmul.f32 %v2662, %v2547
          %v2664 = vmul.f32 %v2663, %v2662
          %v2665 = vmul.f32 0.5, %v2664
          %v2666 = vsub.f32 1.5, %v2665
          %v2667 = vmul.f32 %v2662, %v2666
          %vm2668 = vweird.f32 %v2547
          %vm2669 = vweird.f32 %v2662
          %vm2670 = vmor %vm2668, %vm2669
          %v2671 = vsel %vm2670, %v2662, %v2667
          %v2672 = vrsqrt.pop %v2548
          %v2673 = vmul.f32 %v2672, %v2548
          %v2674 = vmul.f32 %v2673, %v2672
          %v2675 = vmul.f32 0.5, %v2674
          %v2676 = vsub.f32 1.5, %v2675
          %v2677 = vmul.f32 %v2672, %v2676
          %vm2678 = vweird.f32 %v2548
          %vm2679 = vweird.f32 %v2672
          %vm2680 = vmor %vm2678, %vm2679
          %v2681 = vsel %vm2680, %v2672, %v2677
          %v2682 = vrsqrt.pop %v2549
          %v2683 = vmul.f32 %v2682, %v2549
          %v2684 = vmul.f32 %v2683, %v2682
          %v2685 = vmul.f32 0.5, %v2684
          %v2686 = vsub.f32 1.5, %v2685
          %v2687 = vmul.f32 %v2682, %v2686
          %vm2688 = vweird.f32 %v2549
          %vm2689 = vweird.f32 %v2682
          %vm2690 = vmor %vm2688, %vm2689
          %v2691 = vsel %vm2690, %v2682, %v2687
          %v2692 = vrsqrt.pop %v2550
          %v2693 = vmul.f32 %v2692, %v2550
          %v2694 = vmul.f32 %v2693, %v2692
          %v2695 = vmul.f32 0.5, %v2694
          %v2696 = vsub.f32 1.5, %v2695
          %v2697 = vmul.f32 %v2692, %v2696
          %vm2698 = vweird.f32 %v2550
          %vm2699 = vweird.f32 %v2692
          %vm2700 = vmor %vm2698, %vm2699
          %v2701 = vsel %vm2700, %v2692, %v2697
          %v2702 = vrsqrt.pop %v2551
          %v2703 = vmul.f32 %v2702, %v2551
          %v2704 = vmul.f32 %v2703, %v2702
          %v2705 = vmul.f32 0.5, %v2704
          %v2706 = vsub.f32 1.5, %v2705
          %v2707 = vmul.f32 %v2702, %v2706
          %vm2708 = vweird.f32 %v2551
          %vm2709 = vweird.f32 %v2702
          %vm2710 = vmor %vm2708, %vm2709
          %v2711 = vsel %vm2710, %v2702, %v2707
          %v2712 = vmul.f32 %v2408, %v2561
          %v2713 = vmul.f32 %v2409, %v2561
          %v2714 = vmul.f32 %v2410, %v2571
          %v2715 = vmul.f32 %v2411, %v2571
          %v2716 = vmul.f32 %v2412, %v2581
          %v2717 = vmul.f32 %v2413, %v2581
          %v2718 = vmul.f32 %v2414, %v2591
          %v2719 = vmul.f32 %v2415, %v2591
          %v2720 = vmul.f32 %v2416, %v2601
          %v2721 = vmul.f32 %v2417, %v2601
          %v2722 = vmul.f32 %v2418, %v2611
          %v2723 = vmul.f32 %v2419, %v2611
          %v2724 = vmul.f32 %v2420, %v2621
          %v2725 = vmul.f32 %v2421, %v2621
          %v2726 = vmul.f32 %v2422, %v2631
          %v2727 = vmul.f32 %v2423, %v2631
          %v2728 = vmul.f32 %v2424, %v2641
          %v2729 = vmul.f32 %v2425, %v2641
          %v2730 = vmul.f32 %v2426, %v2651
          %v2731 = vmul.f32 %v2427, %v2651
          %v2732 = vmul.f32 %v2428, %v2661
          %v2733 = vmul.f32 %v2429, %v2661
          %v2734 = vmul.f32 %v2430, %v2671
          %v2735 = vmul.f32 %v2431, %v2671
          %v2736 = vmul.f32 %v2432, %v2681
          %v2737 = vmul.f32 %v2433, %v2681
          %v2738 = vmul.f32 %v2434, %v2691
          %v2739 = vmul.f32 %v2435, %v2691
          %v2740 = vmul.f32 %v2436, %v2701
          %v2741 = vmul.f32 %v2437, %v2701
          %v2742 = vmul.f32 %v2438, %v2711
          %v2743 = vmul.f32 %v2439, %v2711
          %v2744 = vld [vmem:[%s11] sm:$0x3]
          %v2746 = vperm.slane %v2744, 0
          %v2747 = vperm.slane %v2744, 1
          %v2750 = vmul.f32 %v2712, %v2746
          %v2751 = vmul.f32 %v2713, %v2747
          %v2752 = vmul.f32 %v2714, %v2746
          %v2753 = vmul.f32 %v2715, %v2747
          %v2754 = vmul.f32 %v2716, %v2746
          %v2755 = vmul.f32 %v2717, %v2747
          %v2756 = vmul.f32 %v2718, %v2746
          %v2757 = vmul.f32 %v2719, %v2747
          %v2758 = vmul.f32 %v2720, %v2746
          %v2759 = vmul.f32 %v2721, %v2747
          %v2760 = vmul.f32 %v2722, %v2746
          %v2761 = vmul.f32 %v2723, %v2747
          %v2762 = vmul.f32 %v2724, %v2746
          %v2763 = vmul.f32 %v2725, %v2747
          %v2764 = vmul.f32 %v2726, %v2746
          %v2765 = vmul.f32 %v2727, %v2747
          %v2766 = vmul.f32 %v2728, %v2746
          %v2767 = vmul.f32 %v2729, %v2747
          %v2768 = vmul.f32 %v2730, %v2746
          %v2769 = vmul.f32 %v2731, %v2747
          %v2770 = vmul.f32 %v2732, %v2746
          %v2771 = vmul.f32 %v2733, %v2747
          %v2772 = vmul.f32 %v2734, %v2746
          %v2773 = vmul.f32 %v2735, %v2747
          %v2774 = vmul.f32 %v2736, %v2746
          %v2775 = vmul.f32 %v2737, %v2747
          %v2776 = vmul.f32 %v2738, %v2746
          %v2777 = vmul.f32 %v2739, %v2747
          %v2778 = vmul.f32 %v2740, %v2746
          %v2779 = vmul.f32 %v2741, %v2747
          %v2780 = vmul.f32 %v2742, %v2746
          %v2781 = vmul.f32 %v2743, %v2747
          %v2782 = vld [vmem:[#allocation15] sm:$0x3]
          %v2784 = vperm.slane %v2782, 0
          %v2785 = vperm.slane %v2782, 1
          %v2788 = vadd.f32 %v2750, %v2784
          %v2789 = vadd.f32 %v2751, %v2785
          %v2790 = vadd.f32 %v2752, %v2784
          %v2791 = vadd.f32 %v2753, %v2785
          %v2792 = vadd.f32 %v2754, %v2784
          %v2793 = vadd.f32 %v2755, %v2785
          %v2794 = vadd.f32 %v2756, %v2784
          %v2795 = vadd.f32 %v2757, %v2785
          %v2796 = vadd.f32 %v2758, %v2784
          %v2797 = vadd.f32 %v2759, %v2785
          %v2798 = vadd.f32 %v2760, %v2784
          %v2799 = vadd.f32 %v2761, %v2785
          %v2800 = vadd.f32 %v2762, %v2784
          %v2801 = vadd.f32 %v2763, %v2785
          %v2802 = vadd.f32 %v2764, %v2784
          %v2803 = vadd.f32 %v2765, %v2785
          %v2804 = vadd.f32 %v2766, %v2784
          %v2805 = vadd.f32 %v2767, %v2785
          %v2806 = vadd.f32 %v2768, %v2784
          %v2807 = vadd.f32 %v2769, %v2785
          %v2808 = vadd.f32 %v2770, %v2784
          %v2809 = vadd.f32 %v2771, %v2785
          %v2810 = vadd.f32 %v2772, %v2784
          %v2811 = vadd.f32 %v2773, %v2785
          %v2812 = vadd.f32 %v2774, %v2784
          %v2813 = vadd.f32 %v2775, %v2785
          %v2814 = vadd.f32 %v2776, %v2784
          %v2815 = vadd.f32 %v2777, %v2785
          %v2816 = vadd.f32 %v2778, %v2784
          %v2817 = vadd.f32 %v2779, %v2785
          %v2818 = vadd.f32 %v2780, %v2784
          %v2819 = vadd.f32 %v2781, %v2785
          %2820 = vst [vmem:[%s796] sm:$0xff] %v2788
          %2821 = vst [vmem:[%s796 + $0x8] sm:$0xff] %v2789
          %2822 = vst [vmem:[%s796 + $0x10] sm:$0xff] %v2790
          %2823 = vst [vmem:[%s796 + $0x18] sm:$0xff] %v2791
          %2824 = vst [vmem:[%s796 + $0x20] sm:$0xff] %v2792
          %2825 = vst [vmem:[%s796 + $0x28] sm:$0xff] %v2793
          %2826 = vst [vmem:[%s796 + $0x30] sm:$0xff] %v2794
          %2827 = vst [vmem:[%s796 + $0x38] sm:$0xff] %v2795
          %2828 = vst [vmem:[%s796 + $0x40] sm:$0xff] %v2796
          %2829 = vst [vmem:[%s796 + $0x48] sm:$0xff] %v2797
          %2830 = vst [vmem:[%s796 + $0x50] sm:$0xff] %v2798
          %2831 = vst [vmem:[%s796 + $0x58] sm:$0xff] %v2799
          %2832 = vst [vmem:[%s796 + $0x60] sm:$0xff] %v2800
          %2833 = vst [vmem:[%s796 + $0x68] sm:$0xff] %v2801
          %2834 = vst [vmem:[%s796 + $0x70] sm:$0xff] %v2802
          %2835 = vst [vmem:[%s796 + $0x78] sm:$0xff] %v2803
          %2836 = vst [vmem:[%s796 + $0x80] sm:$0xff] %v2804
          %2837 = vst [vmem:[%s796 + $0x88] sm:$0xff] %v2805
          %2838 = vst [vmem:[%s796 + $0x90] sm:$0xff] %v2806
          %2839 = vst [vmem:[%s796 + $0x98] sm:$0xff] %v2807
          %2840 = vst [vmem:[%s796 + $0xa0] sm:$0xff] %v2808
          %2841 = vst [vmem:[%s796 + $0xa8] sm:$0xff] %v2809
          %2842 = vst [vmem:[%s796 + $0xb0] sm:$0xff] %v2810
          %2843 = vst [vmem:[%s796 + $0xb8] sm:$0xff] %v2811
          %2844 = vst [vmem:[%s796 + $0xc0] sm:$0xff] %v2812
          %2845 = vst [vmem:[%s796 + $0xc8] sm:$0xff] %v2813
          %2846 = vst [vmem:[%s796 + $0xd0] sm:$0xff] %v2814
          %2847 = vst [vmem:[%s796 + $0xd8] sm:$0xff] %v2815
          %2848 = vst [vmem:[%s796 + $0xe0] sm:$0xff] %v2816
          %2849 = vst [vmem:[%s796 + $0xe8] sm:$0xff] %v2817
          %2850 = vst [vmem:[%s796 + $0xf0] sm:$0xff] %v2818
          %2851 = vst [vmem:[%s796 + $0xf8] sm:$0xff] %v2819
        $region112: #{tpu_custom_call.1} parent=71 // pred_fallthru
          _
        %s2852 = sand.u32 %s388, 1
        %s2853 = scalar_lea.sflag [#allocation5], %s2852
        %s2854 = sand.u32 %s388, 1
        %s2855 = smul.addr %s2854, 256
        %s2856 = scalar_lea.vmem [#allocation17], %s2855
        %s2857 = sand.u32 %s416, 1
        %s2858 = scalar_lea.sflag [#allocation19], %s2857
        %s2859 = sand.u32 %s416, 1
        %s2860 = smul.addr %s2859, 128
        %s2861 = scalar_lea.vmem [#allocation18], %s2860
        // Predicated region
        $region113: #{tpu_custom_call.1} parent=71 // pred_check
          %p2862 = pneg %p398
        $region114: #{tpu_custom_call.1} parent=71 // pred_check_branch
          %2864 = sbr.rel (%p2862) target = $region116
        $region115: #{tpu_custom_call.1} parent=71 // pred_region
          %2866 = vsyncadd %s2853, 0
          %s2867 = smul.addr %s49, 32
          %s2868 = smul.addr %s2867, 8
          %s2869 = scalar_lea.hbm %s13, %s2868
          %s2870 = sshll.u32 %s2856, 4
          %s2871 = int_to_ptr.vmem [resolvable:$true] %s2870
          %s2872 = sshll.u32 %s2869, 4
          %s2873 = int_to_ptr.hbm [resolvable:$true] %s2872
          %2878 = dma.vmem_to_hbm [thread:$0]  %s2871, 4096, %s2873, %s2853, 256, 256, 16
        $region116: #{tpu_custom_call.1} parent=71 // pred_fallthru
          _
        // Predicated region
        $region117: #{tpu_custom_call.1} parent=71 // pred_check
          %p2879 = pneg %p426
        $region118: #{tpu_custom_call.1} parent=71 // pred_check_branch
          %2881 = sbr.rel (%p2879) target = $region120
        $region119: #{tpu_custom_call.1} parent=71 // pred_region
          %2883 = vsyncadd %s2858, 0
          %s2884 = smul.addr %s50, 16
          %s2885 = smul.addr %s49, 32
          %s2886 = sadd.s32 %s2884, %s2885
          %s2887 = smul.addr %s2886, 8
          %s2888 = scalar_lea.hbm %s14, %s2887
          %s2889 = sshll.u32 %s2861, 4
          %s2890 = int_to_ptr.vmem [resolvable:$true] %s2889
          %s2891 = sshll.u32 %s2888, 4
          %s2892 = int_to_ptr.hbm [resolvable:$true] %s2891
          %2897 = dma.vmem_to_hbm [thread:$0]  %s2890, 2048, %s2892, %s2858, 128, 128, 8
        $region120: #{tpu_custom_call.1} parent=71 // pred_fallthru
          _
      $region72: #{tpu_custom_call.1} parent=5 // pred_fallthru
        _
      %p2898 = scmp.le.s32.totalorder 2, %s40
      // Predicated region
      $region121: #{tpu_custom_call.1} parent=5 // pred_check
        %p2899 = pneg %p2898
      $region122: #{tpu_custom_call.1} parent=5 // pred_check_branch
        %2901 = sbr.rel (%p2899) target = $region124
      $region123: #{tpu_custom_call.1} parent=5 // pred_region
        %s2902 = ssub.s32 %s40, 2
        // Predicated region
        $region125: #{tpu_custom_call.1} parent=123 // pred_check
          %p2903 = pneg %p404
        $region126: #{tpu_custom_call.1} parent=123 // pred_check_branch
          %2905 = sbr.rel (%p2903) target = $region128
        $region127: #{tpu_custom_call.1} parent=123 // pred_region
          %s2906 = sand.u32 %s389, 1
          %s2907 = scalar_lea.sflag [#allocation5], %s2906
          %s2908 = sand.u32 %s389, 1
          %s2909 = smul.addr %s2908, 256
          %s2910 = scalar_lea.vmem [#allocation17], %s2909
          %2912 = dma.done %s2907, 4096
        $region128: #{tpu_custom_call.1} parent=123 // pred_fallthru
          _
        // Predicated region
        $region129: #{tpu_custom_call.1} parent=123 // pred_check
          %p2913 = pneg %p432
        $region130: #{tpu_custom_call.1} parent=123 // pred_check_branch
          %2915 = sbr.rel (%p2913) target = $region132
        $region131: #{tpu_custom_call.1} parent=123 // pred_region
          %s2916 = sand.u32 %s417, 1
          %s2917 = scalar_lea.sflag [#allocation19], %s2916
          %s2918 = sand.u32 %s417, 1
          %s2919 = smul.addr %s2918, 128
          %s2920 = scalar_lea.vmem [#allocation18], %s2919
          %2922 = dma.done %s2917, 2048
        $region132: #{tpu_custom_call.1} parent=123 // pred_fallthru
          _
      $region124: #{tpu_custom_call.1} parent=5 // pred_fallthru
        _
    $region6: #{tpu_custom_call.1} parent=1 // loop_footer
      %s44 = sadd.s32 1, %s40
    $region7: #{tpu_custom_call.1} parent=1 // loop_footer_branch
      %39 = sbr.rel target = $region3
    $region8: #{tpu_custom_call.1} parent=1 // loop_exit
      _
    %2923 = vsyncpa [#allocation4], 1
    %s2924 = scalar_lea.sflag [#allocation4], 1
    %2925 = vsyncpa %s2924, 1
    %2926 = vsyncpa [#allocation7], 1
    %s2927 = scalar_lea.sflag [#allocation7], 1
    %2928 = vsyncpa %s2927, 1
    %2929 = vsyncpa [#allocation10], 1
    %s2930 = scalar_lea.sflag [#allocation10], 1
    %2931 = vsyncpa %s2930, 1
    %2932 = vsyncpa [#allocation13], 1
    %s2933 = scalar_lea.sflag [#allocation13], 1
    %2934 = vsyncpa %s2933, 1
    %2935 = vsyncpa [#allocation16], 1
    %2936 = vsyncpa [#allocation5], 1
    %s2937 = scalar_lea.sflag [#allocation5], 1
    %2938 = vsyncpa %s2937, 1
    %2939 = vsyncpa [#allocation19], 1
    %s2940 = scalar_lea.sflag [#allocation19], 1
    %2941 = vsyncpa %s2940, 1

</llo_original>
